<compile_context>
chip_gen: v7x
topology: tpu7x:2x2x1
jax: 0.10.0
libtpu: 0.0.40
codegen_flags: <defaults>
</compile_context>

<pallas_src>
import functools

import jax
import jax.numpy as jnp
from jax.experimental import pallas as pl
from jax.experimental.pallas import tpu as pltpu

EXPANSION = 4
BN_EPS = 1e-5
LANE = 128


def _round_up(n, m):
    return ((n + m - 1) // m) * m


# --------------------------------------------------------------------------------------
# Pallas kernel: one (batch, H-row-tile) block of the bottleneck per grid step.
# --------------------------------------------------------------------------------------
def _bottleneck_kernel(x_hbm, w1_ref, b1_ref, w2_ref, b2_ref, w3_ref, b3_ref,
                       *rest, dilation, w_valid, has_proj):
    if has_proj:
        ws_ref, bs_ref, o_ref, xwin_ref, pad_ref, dma_sem = rest
    else:
        o_ref, xwin_ref, pad_ref, dma_sem = rest
        ws_ref = bs_ref = None

    d = dilation
    pad_l = _round_up(d, 8)                   # aligned left padding of the conv2 scratch
    _, h_tile, W, C4 = o_ref.shape            # width / channels already padded
    L, _, Cin = xwin_ref.shape                # L = h_tile + 2*d (halo window rows)
    _, Wc, P = pad_ref.shape

    n = pl.program_id(0)
    i = pl.program_id(1)
    r0 = pl.multiple_of(i * h_tile, h_tile)   # start row in the H-padded input

    # ---- fetch this tile's halo row window of x: HBM -> VMEM (single-buffered) ----
    cp = pltpu.make_async_copy(x_hbm.at[n, pl.ds(r0, L)], xwin_ref, dma_sem)
    cp.start()
    cp.wait()

    # ---- stage 1: 1x1 conv + folded BN + ReLU on the halo-extended row window -----
    x2 = xwin_ref[...].reshape(L * W, Cin)                        # bf16
    h1 = jnp.dot(x2, w1_ref[...], preferred_element_type=jnp.float32)
    h1 = jnp.maximum(h1 + b1_ref[...], 0.0).astype(jnp.bfloat16)  # (L*W, P)

    # ---- stage 2: 3x3 dilated conv (padding=dilation, stride=1) -------------------
    # h1 lives at columns [pad_l, pad_l+W); left pad, the invalid (W-padding) columns
    # and the right halo are zeroed EVERY step (persistent scratch: rewrite it all).
    pad_ref[:, pad_l:pad_l + W, :] = h1.reshape(L, W, P)
    pad_ref[:, :pad_l, :] = jnp.zeros((L, pad_l, P), pad_ref.dtype)
    pad_ref[:, pad_l + w_valid:, :] = jnp.zeros((L, Wc - pad_l - w_valid, P),
                                                pad_ref.dtype)

    @pl.when(i == 0)
    def _():
        pad_ref[:d, :, :] = jnp.zeros((d, Wc, P), pad_ref.dtype)       # above image

    @pl.when(i == pl.num_programs(1) - 1)
    def _():
        pad_ref[L - d:, :, :] = jnp.zeros((d, Wc, P), pad_ref.dtype)   # below image

    # 3 matmuls (one per kernel row), the kw taps folded into K = 3*P; accumulate as
    # an f32 value instead of a VMEM read-modify-write.
    acc = None
    for kh in range(3):
        win = jnp.concatenate(
            [pad_ref[kh * d:kh * d + h_tile,
                     pad_l + (kw - 1) * d:pad_l + (kw - 1) * d + W, :]
             for kw in range(3)],
            axis=-1).reshape(h_tile * W, 3 * P)
        part = jnp.dot(win, w2_ref[kh], preferred_element_type=jnp.float32)
        acc = part if acc is None else acc + part
    h2 = jnp.maximum(acc + b2_ref[...], 0.0).astype(jnp.bfloat16)

    # ---- stage 3: 1x1 conv + folded BN (no ReLU yet) -------------------------------
    h3 = jnp.dot(h2, w3_ref[...], preferred_element_type=jnp.float32) + b3_ref[...]

    # ---- shortcut -------------------------------------------------------------------
    x_mid = xwin_ref[pl.ds(d, h_tile)].reshape(h_tile * W, Cin)   # tile's own rows
    if has_proj:
        sc = jnp.dot(x_mid, ws_ref[...],
                     preferred_element_type=jnp.float32) + bs_ref[...]
    else:
        # Identity shortcut from the bf16-cast input (accepted: output is bf16 anyway).
        sc = x_mid.astype(jnp.float32)

    # ---- residual add + ReLU --------------------------------------------------------
    out = jnp.maximum(h3 + sc, 0.0)
    o_ref[...] = out.reshape(1, h_tile, W, C4).astype(o_ref.dtype)


# --------------------------------------------------------------------------------------
# NHWC wrapper (the actual pallas_call); NCHW adapter below for the PyTorch convention.
# --------------------------------------------------------------------------------------
def _physical_vmem_bytes():
    try:
        return int(pltpu.get_tpu_info().vmem_capacity_bytes)
    except Exception:
        return 64 << 20                      # conservative (v7x-sized) fallback


def bottleneck_coarse_nhwc(x_nhwc, folded, *, dilation=1, stride=1, h_tile=None,
                           out_dtype=jnp.bfloat16):
    """Returns a (N, H, W_pad8, C4_pad) `out_dtype` array (padding kept for chaining)."""
    if stride != 1:
        raise NotImplementedError("stride > 1 not implemented in Pallas kernel")

    d = dilation
    N, H, W, Cin = x_nhwc.shape
    w1, b1, w2, b2, w3, b3, ws, bs = (folded[k] for k in
                                      ("w1", "b1", "w2", "b2", "w3", "b3", "ws", "bs"))
    Cin_pad, P_pad = w1.shape
    C4_pad = w3.shape[1]
    has_proj = ws is not None
    if not has_proj:
        assert Cin == folded["c4"] and Cin_pad == C4_pad, \
            "identity shortcut needs Cin == 4*planes"

    if h_tile is None:
        h_tile = next(t for t in (32, 16, 8, 4, 2, 1) if H % t == 0)
    assert H % h_tile == 0, (H, h_tile)
    n_h = H // h_tile
    L = h_tile + 2 * d
    Wp = _round_up(W, 8)                       # sublane-friendly width
    pad_l = _round_up(d, 8)
    Wc = _round_up(pad_l + Wp + d, 8)          # conv2 scratch width

    # Pad H by the halo, W up to a multiple of 8, channels up to a lane multiple;
    # cast to bf16 for the MXU.  x stays in HBM; the kernel DMAs per-tile row windows.
    xp = jnp.pad(x_nhwc.astype(jnp.float32),
                 ((0, 0), (d, d), (0, Wp - W), (0, Cin_pad - Cin))
                 ).astype(jnp.bfloat16)

    kernel = functools.partial(_bottleneck_kernel, dilation=d, w_valid=W,
                               has_proj=has_proj)

    in_specs = [
        pl.BlockSpec(memory_space=pl.ANY),                    # x: raw HBM ref
        pl.BlockSpec(w1.shape, lambda n, i: (0, 0)),
        pl.BlockSpec(b1.shape, lambda n, i: (0, 0)),
        pl.BlockSpec(w2.shape, lambda n, i: (0, 0, 0)),
        pl.BlockSpec(b2.shape, lambda n, i: (0, 0)),
        pl.BlockSpec(w3.shape, lambda n, i: (0, 0)),
        pl.BlockSpec(b3.shape, lambda n, i: (0, 0)),
    ]
    inputs = [xp, w1, b1, w2, b2, w3, b3]
    if has_proj:
        in_specs += [pl.BlockSpec(ws.shape, lambda n, i: (0, 0)),
                     pl.BlockSpec(bs.shape, lambda n, i: (0, 0))]
        inputs += [ws, bs]

    out_spec = pl.BlockSpec((1, h_tile, Wp, C4_pad), lambda n, i: (n, i, 0, 0))

    scratch_shapes = [
        pltpu.VMEM((L, Wp, Cin_pad), jnp.bfloat16),   # x halo row window
        pltpu.VMEM((L, Wc, P_pad), jnp.bfloat16),     # zero-padded conv2 input (bf16)
        pltpu.SemaphoreType.DMA,                      # x window DMA completion
    ]

    # ---- VMEM budget / compiler hints (generation-aware cap) -----------------------
    out_itemsize = jnp.dtype(out_dtype).itemsize
    weight_bytes = sum(int(a.size) * a.dtype.itemsize for a in inputs[1:])
    out_block = h_tile * Wp * C4_pad * out_itemsize
    scratch_bytes = L * Wp * Cin_pad * 2 + L * Wc * P_pad * 2
    vmem_est = 2 * (weight_bytes + out_block) + scratch_bytes + (2 << 20)
    vmem_limit = int(min(max(vmem_est, 32 << 20),
                         int(0.85 * _physical_vmem_bytes())))

    flops = 2 * N * H * Wp * (Cin_pad * P_pad + 9 * P_pad * P_pad + P_pad * C4_pad
                              + (Cin_pad * C4_pad if has_proj else 0))
    bytes_accessed = (int(xp.size) * 2 + N * H * Wp * C4_pad * out_itemsize
                      + weight_bytes)

    out = pl.pallas_call(
        kernel,
        out_shape=jax.ShapeDtypeStruct((N, H, Wp, C4_pad), out_dtype),
        grid=(N, n_h),
        in_specs=in_specs,
        out_specs=out_spec,
        scratch_shapes=scratch_shapes,
        compiler_params=pltpu.CompilerParams(
            dimension_semantics=("parallel", "parallel"),
            vmem_limit_bytes=vmem_limit),
        cost_estimate=pl.CostEstimate(flops=int(flops), transcendentals=0,
                                      bytes_accessed=int(bytes_accessed)),
    )(*inputs)
    return out


def bottleneck_coarse(x_nchw, folded, *, dilation=1, stride=1, h_tile=None):
    # PyTorch-convention adapter (demo / validation only).
    # TODO(synk): in a full network keep activations NHWC, channel-padded, bf16
    #             end-to-end and drop these transposes / slices.
    N, _, H, W = x_nchw.shape
    x = jnp.transpose(x_nchw, (0, 2, 3, 1))
    out = bottleneck_coarse_nhwc(x, folded, dilation=dilation, stride=stride,
                                 h_tile=h_tile)
    out = out[:, :, :W, :folded["c4"]].astype(jnp.float32)
    return jnp.transpose(out, (0, 3, 1, 2))


# --------------------------------------------------------------------------------------
# Parameter folding: PyTorch OIHW conv weights + eval-mode BN -> padded bf16 matmuls.
# --------------------------------------------------------------------------------------
def _bn_scale_bias(bn):
    gamma, beta, mean, var = bn
    scale = gamma / jnp.sqrt(var + BN_EPS)
    bias = beta - mean * scale
    return scale, bias


def _pad_mat(a, rows, cols):
    return jnp.pad(a, ((0, rows - a.shape[0]), (0, cols - a.shape[1])))


def _pad_vec(v, n):
    return jnp.pad(v, (0, n - v.shape[0]))


def fold_params(conv1_w, bn1, conv2_w, bn2, conv3_w, bn3, convs_w, bns,
                in_planes, planes):
    """Fold eval-mode BN into the convs; 1x1 convs become (Cin, Cout) matrices and the
    3x3 conv becomes one (3*P, P) matrix per kernel row (kw taps stacked along K)."""
    c4 = EXPANSION * planes
    cin_p = _round_up(in_planes, LANE)
    p_p = _round_up(planes, LANE)
    c4_p = _round_up(c4, LANE)

    s1, b1 = _bn_scale_bias(bn1)
    w1 = _pad_mat(conv1_w[:, :, 0, 0].T * s1[None, :], cin_p, p_p)

    s2, b2 = _bn_scale_bias(bn2)
    rows = []
    for kh in range(3):
        taps = [_pad_mat(conv2_w[:, :, kh, kw].T * s2[None, :], p_p, p_p)
                for kw in range(3)]
        rows.append(jnp.concatenate(taps, axis=0))        # (3*p_p, p_p)
    w2 = jnp.stack(rows, axis=0)                           # (3, 3*p_p, p_p)

    s3, b3 = _bn_scale_bias(bn3)
    w3 = _pad_mat(conv3_w[:, :, 0, 0].T * s3[None, :], p_p, c4_p)

    if convs_w is None:
        ws, bs = None, None
    else:
        ss, bsv = _bn_scale_bias(bns)
        ws = _pad_mat(convs_w[:, :, 0, 0].T * ss[None, :], cin_p, c4_p)
        ws = ws.astype(jnp.bfloat16)
        bs = _pad_vec(bsv, c4_p).reshape(1, -1).astype(jnp.float32)

    return {
        "w1": w1.astype(jnp.bfloat16),
        "b1": _pad_vec(b1, p_p).reshape(1, -1).astype(jnp.float32),
        "w2": w2.astype(jnp.bfloat16),
        "b2": _pad_vec(b2, p_p).reshape(1, -1).astype(jnp.float32),
        "w3": w3.astype(jnp.bfloat16),
        "b3": _pad_vec(b3, c4_p).reshape(1, -1).astype(jnp.float32),
        "ws": ws, "bs": bs,
        "c4": c4,
    }


# --------------------------------------------------------------------------------------
# Pure-JAX reference (eval-mode BN) for validation
# --------------------------------------------------------------------------------------
def reference(x, conv1_w, bn1, conv2_w, bn2, conv3_w, bn3, convs_w, bns,
              stride, dilation):
    def bn(y, p):
        g, b, m, v = (t[None, :, None, None] for t in p)
        return (y - m) / jnp.sqrt(v + BN_EPS) * g + b

    def conv(y, w, st=1, dil=1, pad=0):
        return jax.lax.conv_general_dilated(
            y, w, (st, st), [(pad, pad), (pad, pad)],
            rhs_dilation=(dil, dil),
            dimension_numbers=("NCHW", "OIHW", "NCHW"))

    out = jax.nn.relu(bn(conv(x, conv1_w), bn1))
    out = jax.nn.relu(bn(conv(out, conv2_w, stride, dilation, dilation), bn2))
    out = bn(conv(out, conv3_w), bn3)
    sc = x if convs_w is None else bn(conv(x, convs_w, stride), bns)
    return jax.nn.relu(out + sc)


# --------------------------------------------------------------------------------------
if __name__ == "__main__":
    def conv_w(k, o, i, kh, kw):
        return 0.1 * jax.random.normal(k, (o, i, kh, kw), jnp.float32)

    def bn_p(k, c):
        k1, k2, k3, k4 = jax.random.split(k, 4)
        gamma = 1.0 + 0.1 * jax.random.normal(k1, (c,), jnp.float32)
        beta = 0.1 * jax.random.normal(k2, (c,), jnp.float32)
        mean = 0.1 * jax.random.normal(k3, (c,), jnp.float32)
        var = jax.random.uniform(k4, (c,), jnp.float32, minval=0.5, maxval=1.5)
        return gamma, beta, mean, var

    def run_case(key, in_planes, planes, dilation, N=2, H=16, W=16, h_tile=None):
        keys = jax.random.split(key, 10)
        x = jax.random.normal(keys[0], (N, in_planes, H, W), jnp.float32)
        conv1_w = conv_w(keys[1], planes, in_planes, 1, 1)
        conv2_w = conv_w(keys[2], planes, planes, 3, 3)
        conv3_w = conv_w(keys[3], EXPANSION * planes, planes, 1, 1)
        bn1 = bn_p(keys[4], planes)
        bn2 = bn_p(keys[5], planes)
        bn3 = bn_p(keys[6], EXPANSION * planes)
        if in_planes != EXPANSION * planes:            # stride fixed at 1 here
            convs_w = conv_w(keys[7], EXPANSION * planes, in_planes, 1, 1)
            bns = bn_p(keys[8], EXPANSION * planes)
        else:
            convs_w, bns = None, None

        folded = fold_params(conv1_w, bn1, conv2_w, bn2, conv3_w, bn3,
                             convs_w, bns, in_planes, planes)

        out = bottleneck_coarse(x, folded, dilation=dilation, stride=1,
                                h_tile=h_tile)
        out = jax.block_until_ready(out)

        ref = reference(x, conv1_w, bn1, conv2_w, bn2, conv3_w, bn3,
                        convs_w, bns, 1, dilation)
        ref = jax.block_until_ready(ref)

        assert out.shape == (N, EXPANSION * planes, H, W), out.shape
        err = float(jnp.max(jnp.abs(out - ref)))
        # bf16 matmul operands + bf16 output (f32 accumulation) -> relaxed tolerance.
        assert jnp.allclose(out, ref, atol=5e-2, rtol=5e-2), f"max abs err = {err}"

    key = jax.random.PRNGKey(0)
    k1, k2, k3 = jax.random.split(key, 3)
    # projection shortcut, dilated 3x3, multi-tile halo exchange along H
    run_case(k1, in_planes=8, planes=4, dilation=2, h_tile=8)
    # identity shortcut, dilation=1, single row tile (auto h_tile)
    run_case(k2, in_planes=16, planes=4, dilation=1)
    # non-multiple-of-8 width (exercises in-kernel W padding / edge zeroing)
    run_case(k3, in_planes=8, planes=4, dilation=2, W=12, h_tile=8)
    print("KERNEL_OK")
</pallas_src>

<mosaic_0001>
module attributes {stable_mosaic.version = 11 : i64} {
  func.func @_bottleneck_kernel(%arg0: i32, %arg1: i32, %arg2: memref<2x20x16x128xbf16, #tpu.memory_space<any>>, %arg3: memref<128x128xbf16, #tpu.memory_space<vmem>>, %arg4: memref<1x128xf32, #tpu.memory_space<vmem>>, %arg5: memref<3x384x128xbf16, #tpu.memory_space<vmem>>, %arg6: memref<1x128xf32, #tpu.memory_space<vmem>>, %arg7: memref<128x128xbf16, #tpu.memory_space<vmem>>, %arg8: memref<1x128xf32, #tpu.memory_space<vmem>>, %arg9: memref<128x128xbf16, #tpu.memory_space<vmem>>, %arg10: memref<1x128xf32, #tpu.memory_space<vmem>>, %arg11: memref<1x8x16x128xbf16, #tpu.memory_space<vmem>>, %arg12: memref<12x16x128xbf16, #tpu.memory_space<vmem>>, %arg13: memref<12x32x128xbf16, #tpu.memory_space<vmem>>, %arg14: memref<!tpu.dma_semaphore, #tpu.memory_space<semaphore_mem>>) attributes {dimension_semantics = [#tpu.dimension_semantics<parallel>, #tpu.dimension_semantics<parallel>], iteration_bounds = array<i64: 2, 2>, scalar_prefetch = 0 : i64, scratch_operands = 3 : i64, tpu.core_type = #tpu.core_type<tc>, window_params = [{}, {pipeline_mode = #tpu.pipeline_mode<synchronous>, transform_indices = @transform_1, window_bounds = array<i64: 128, 128>}, {pipeline_mode = #tpu.pipeline_mode<synchronous>, transform_indices = @transform_2, window_bounds = array<i64: 1, 128>}, {pipeline_mode = #tpu.pipeline_mode<synchronous>, transform_indices = @transform_3, window_bounds = array<i64: 3, 384, 128>}, {pipeline_mode = #tpu.pipeline_mode<synchronous>, transform_indices = @transform_4, window_bounds = array<i64: 1, 128>}, {pipeline_mode = #tpu.pipeline_mode<synchronous>, transform_indices = @transform_5, window_bounds = array<i64: 128, 128>}, {pipeline_mode = #tpu.pipeline_mode<synchronous>, transform_indices = @transform_6, window_bounds = array<i64: 1, 128>}, {pipeline_mode = #tpu.pipeline_mode<synchronous>, transform_indices = @transform_7, window_bounds = array<i64: 128, 128>}, {pipeline_mode = #tpu.pipeline_mode<synchronous>, transform_indices = @transform_8, window_bounds = array<i64: 1, 128>}, {transform_indices = @transform_9, window_bounds = array<i64: 1, 8, 16, 128>}]} {
    %c8_i32 = arith.constant 8 : i32
    %0 = arith.muli %arg1, %c8_i32 : i32
    %1 = tpu.assume_multiple %0, 8 : i32
    %c0_i32 = arith.constant 0 : i32
    %c0_i32_0 = arith.constant 0 : i32
    %2 = tpu.memref_slice %arg2[%arg0, %1, %c0_i32, %c0_i32_0] : memref<2x20x16x128xbf16, #tpu.memory_space<any>> -> memref<1x12x16x128xbf16, #tpu.memory_space<any>>
    %3 = tpu.memref_squeeze %2 : memref<1x12x16x128xbf16, #tpu.memory_space<any>> -> memref<12x16x128xbf16, #tpu.memory_space<any>>
    tpu.enqueue_dma source(%3 : memref<12x16x128xbf16, #tpu.memory_space<any>>) target(%arg12 : memref<12x16x128xbf16, #tpu.memory_space<vmem>>) target_semaphore(%arg14 : memref<!tpu.dma_semaphore, #tpu.memory_space<semaphore_mem>>)
    %c0_i32_1 = arith.constant 0 : i32
    %c0_i32_2 = arith.constant 0 : i32
    %4 = tpu.memref_slice %arg2[%arg0, %1, %c0_i32_1, %c0_i32_2] : memref<2x20x16x128xbf16, #tpu.memory_space<any>> -> memref<1x12x16x128xbf16, #tpu.memory_space<any>>
    %5 = tpu.memref_squeeze %4 : memref<1x12x16x128xbf16, #tpu.memory_space<any>> -> memref<12x16x128xbf16, #tpu.memory_space<any>>
    tpu.wait_dma2 semaphore(%arg14 : memref<!tpu.dma_semaphore, #tpu.memory_space<semaphore_mem>>) src(%5 : memref<12x16x128xbf16, #tpu.memory_space<any>>) dst(%arg12 : memref<12x16x128xbf16, #tpu.memory_space<vmem>>)
    %c0 = arith.constant 0 : index
    %c0_3 = arith.constant 0 : index
    %c0_4 = arith.constant 0 : index
    %6 = vector.load %arg12[%c0, %c0_3, %c0_4] : memref<12x16x128xbf16, #tpu.memory_space<vmem>>, vector<12x16x128xbf16>
    %7 = vector.shape_cast %6 : vector<12x16x128xbf16> to vector<192x128xbf16>
    %c0_5 = arith.constant 0 : index
    %c0_6 = arith.constant 0 : index
    %8 = vector.load %arg3[%c0_5, %c0_6] : memref<128x128xbf16, #tpu.memory_space<vmem>>, vector<128x128xbf16>
    %cst = arith.constant dense<0.000000e+00> : vector<192x128xf32>
    %9 = tpu.matmul %7, %8, %cst {dimension_numbers = #tpu.dot_dimension_numbers<[1], [0], [0], [1], [0, 0, 1, 1], [], []>} : vector<192x128xbf16>, vector<128x128xbf16>, vector<192x128xf32> -> vector<192x128xf32>
    %c0_7 = arith.constant 0 : index
    %c0_8 = arith.constant 0 : index
    %10 = vector.load %arg4[%c0_7, %c0_8] : memref<1x128xf32, #tpu.memory_space<vmem>>, vector<1x128xf32>
    %11 = vector.broadcast %10 : vector<1x128xf32> to vector<192x128xf32>
    %12 = arith.addf %9, %11 : vector<192x128xf32>
    %cst_9 = arith.constant 0.000000e+00 : f32
    %13 = vector.broadcast %cst_9 : f32 to vector<192x128xf32>
    %14 = arith.maximumf %12, %13 : vector<192x128xf32>
    %15 = arith.truncf %14 : vector<192x128xf32> to vector<192x128xbf16>
    %16 = vector.shape_cast %15 : vector<192x128xbf16> to vector<12x16x128xbf16>
    %c0_10 = arith.constant 0 : index
    %c8 = arith.constant 8 : index
    %c0_11 = arith.constant 0 : index
    %17 = vector.load %arg13[%c0_10, %c8, %c0_11] : memref<12x32x128xbf16, #tpu.memory_space<vmem>>, vector<12x16x128xbf16>
    tpu.vector_store %arg13[%c0_10, %c8, %c0_11], %16 {strides = array<i32>} : memref<12x32x128xbf16, #tpu.memory_space<vmem>>, vector<12x16x128xbf16>,
    %cst_12 = arith.constant 0.000000e+00 : bf16
    %18 = vector.broadcast %cst_12 : bf16 to vector<12x8x128xbf16>
    %c0_13 = arith.constant 0 : index
    %c0_14 = arith.constant 0 : index
    %c0_15 = arith.constant 0 : index
    %19 = vector.load %arg13[%c0_13, %c0_14, %c0_15] : memref<12x32x128xbf16, #tpu.memory_space<vmem>>, vector<12x8x128xbf16>
    tpu.vector_store %arg13[%c0_13, %c0_14, %c0_15], %18 {strides = array<i32>} : memref<12x32x128xbf16, #tpu.memory_space<vmem>>, vector<12x8x128xbf16>,
    %cst_16 = arith.constant 0.000000e+00 : bf16
    %20 = vector.broadcast %cst_16 : bf16 to vector<12x8x128xbf16>
    %c0_17 = arith.constant 0 : index
    %c24 = arith.constant 24 : index
    %c0_18 = arith.constant 0 : index
    %21 = vector.load %arg13[%c0_17, %c24, %c0_18] : memref<12x32x128xbf16, #tpu.memory_space<vmem>>, vector<12x8x128xbf16>
    tpu.vector_store %arg13[%c0_17, %c24, %c0_18], %20 {strides = array<i32>} : memref<12x32x128xbf16, #tpu.memory_space<vmem>>, vector<12x8x128xbf16>,
    %c0_i32_19 = arith.constant 0 : i32
    %22 = arith.cmpi eq, %arg1, %c0_i32_19 : i32
    %23 = arith.extui %22 : i1 to i32
    %c0_i32_20 = arith.constant 0 : i32
    %24 = arith.cmpi ne, %23, %c0_i32_20 : i32
    scf.if %24 {
      %cst_77 = arith.constant 0.000000e+00 : bf16
      %78 = vector.broadcast %cst_77 : bf16 to vector<2x32x128xbf16>
      %c0_78 = arith.constant 0 : index
      %c0_79 = arith.constant 0 : index
      %c0_80 = arith.constant 0 : index
      %79 = vector.load %arg13[%c0_78, %c0_79, %c0_80] : memref<12x32x128xbf16, #tpu.memory_space<vmem>>, vector<2x32x128xbf16>
      tpu.vector_store %arg13[%c0_78, %c0_79, %c0_80], %78 {strides = array<i32>} : memref<12x32x128xbf16, #tpu.memory_space<vmem>>, vector<2x32x128xbf16>,
    } else {
    }
    %c1_i32 = arith.constant 1 : i32
    %25 = arith.cmpi eq, %arg1, %c1_i32 : i32
    %26 = arith.extui %25 : i1 to i32
    %c0_i32_21 = arith.constant 0 : i32
    %27 = arith.cmpi ne, %26, %c0_i32_21 : i32
    scf.if %27 {
      %cst_77 = arith.constant 0.000000e+00 : bf16
      %78 = vector.broadcast %cst_77 : bf16 to vector<2x32x128xbf16>
      %c10_78 = arith.constant 10 : index
      %c0_79 = arith.constant 0 : index
      %c0_80 = arith.constant 0 : index
      %79 = vector.load %arg13[%c10_78, %c0_79, %c0_80] : memref<12x32x128xbf16, #tpu.memory_space<vmem>>, vector<2x32x128xbf16>
      tpu.vector_store %arg13[%c10_78, %c0_79, %c0_80], %78 {strides = array<i32>} : memref<12x32x128xbf16, #tpu.memory_space<vmem>>, vector<2x32x128xbf16>,
    } else {
    }
    %c0_22 = arith.constant 0 : index
    %c6 = arith.constant 6 : index
    %c0_23 = arith.constant 0 : index
    %28 = vector.load %arg13[%c0_22, %c6, %c0_23] : memref<12x32x128xbf16, #tpu.memory_space<vmem>>, vector<8x16x128xbf16>
    %c0_24 = arith.constant 0 : index
    %c8_25 = arith.constant 8 : index
    %c0_26 = arith.constant 0 : index
    %29 = vector.load %arg13[%c0_24, %c8_25, %c0_26] : memref<12x32x128xbf16, #tpu.memory_space<vmem>>, vector<8x16x128xbf16>
    %c0_27 = arith.constant 0 : index
    %c10 = arith.constant 10 : index
    %c0_28 = arith.constant 0 : index
    %30 = vector.load %arg13[%c0_27, %c10, %c0_28] : memref<12x32x128xbf16, #tpu.memory_space<vmem>>, vector<8x16x128xbf16>
    %31 = tpu.concatenate %28, %29, %30 in 2 : vector<8x16x128xbf16>, vector<8x16x128xbf16>, vector<8x16x128xbf16> -> vector<8x16x384xbf16>
    %32 = vector.shape_cast %31 : vector<8x16x384xbf16> to vector<128x384xbf16>
    %c0_29 = arith.constant 0 : index
    %c0_30 = arith.constant 0 : index
    %c0_31 = arith.constant 0 : index
    %33 = vector.load %arg5[%c0_29, %c0_30, %c0_31] : memref<3x384x128xbf16, #tpu.memory_space<vmem>>, vector<1x384x128xbf16>
    %34 = vector.shape_cast %33 : vector<1x384x128xbf16> to vector<384x128xbf16>
    %cst_32 = arith.constant dense<0.000000e+00> : vector<128x128xf32>
    %35 = tpu.matmul %32, %34, %cst_32 {dimension_numbers = #tpu.dot_dimension_numbers<[1], [0], [0], [1], [0, 0, 1, 1], [], []>} : vector<128x384xbf16>, vector<384x128xbf16>, vector<128x128xf32> -> vector<128x128xf32>
    %c2 = arith.constant 2 : index
    %c6_33 = arith.constant 6 : index
    %c0_34 = arith.constant 0 : index
    %36 = vector.load %arg13[%c2, %c6_33, %c0_34] : memref<12x32x128xbf16, #tpu.memory_space<vmem>>, vector<8x16x128xbf16>
    %c2_35 = arith.constant 2 : index
    %c8_36 = arith.constant 8 : index
    %c0_37 = arith.constant 0 : index
    %37 = vector.load %arg13[%c2_35, %c8_36, %c0_37] : memref<12x32x128xbf16, #tpu.memory_space<vmem>>, vector<8x16x128xbf16>
    %c2_38 = arith.constant 2 : index
    %c10_39 = arith.constant 10 : index
    %c0_40 = arith.constant 0 : index
    %38 = vector.load %arg13[%c2_38, %c10_39, %c0_40] : memref<12x32x128xbf16, #tpu.memory_space<vmem>>, vector<8x16x128xbf16>
    %39 = tpu.concatenate %36, %37, %38 in 2 : vector<8x16x128xbf16>, vector<8x16x128xbf16>, vector<8x16x128xbf16> -> vector<8x16x384xbf16>
    %40 = vector.shape_cast %39 : vector<8x16x384xbf16> to vector<128x384xbf16>
    %c1 = arith.constant 1 : index
    %c0_41 = arith.constant 0 : index
    %c0_42 = arith.constant 0 : index
    %41 = vector.load %arg5[%c1, %c0_41, %c0_42] : memref<3x384x128xbf16, #tpu.memory_space<vmem>>, vector<1x384x128xbf16>
    %42 = vector.shape_cast %41 : vector<1x384x128xbf16> to vector<384x128xbf16>
    %cst_43 = arith.constant dense<0.000000e+00> : vector<128x128xf32>
    %43 = tpu.matmul %40, %42, %cst_43 {dimension_numbers = #tpu.dot_dimension_numbers<[1], [0], [0], [1], [0, 0, 1, 1], [], []>} : vector<128x384xbf16>, vector<384x128xbf16>, vector<128x128xf32> -> vector<128x128xf32>
    %44 = arith.addf %35, %43 : vector<128x128xf32>
    %c4 = arith.constant 4 : index
    %c6_44 = arith.constant 6 : index
    %c0_45 = arith.constant 0 : index
    %45 = vector.load %arg13[%c4, %c6_44, %c0_45] : memref<12x32x128xbf16, #tpu.memory_space<vmem>>, vector<8x16x128xbf16>
    %c4_46 = arith.constant 4 : index
    %c8_47 = arith.constant 8 : index
    %c0_48 = arith.constant 0 : index
    %46 = vector.load %arg13[%c4_46, %c8_47, %c0_48] : memref<12x32x128xbf16, #tpu.memory_space<vmem>>, vector<8x16x128xbf16>
    %c4_49 = arith.constant 4 : index
    %c10_50 = arith.constant 10 : index
    %c0_51 = arith.constant 0 : index
    %47 = vector.load %arg13[%c4_49, %c10_50, %c0_51] : memref<12x32x128xbf16, #tpu.memory_space<vmem>>, vector<8x16x128xbf16>
    %48 = tpu.concatenate %45, %46, %47 in 2 : vector<8x16x128xbf16>, vector<8x16x128xbf16>, vector<8x16x128xbf16> -> vector<8x16x384xbf16>
    %49 = vector.shape_cast %48 : vector<8x16x384xbf16> to vector<128x384xbf16>
    %c2_52 = arith.constant 2 : index
    %c0_53 = arith.constant 0 : index
    %c0_54 = arith.constant 0 : index
    %50 = vector.load %arg5[%c2_52, %c0_53, %c0_54] : memref<3x384x128xbf16, #tpu.memory_space<vmem>>, vector<1x384x128xbf16>
    %51 = vector.shape_cast %50 : vector<1x384x128xbf16> to vector<384x128xbf16>
    %cst_55 = arith.constant dense<0.000000e+00> : vector<128x128xf32>
    %52 = tpu.matmul %49, %51, %cst_55 {dimension_numbers = #tpu.dot_dimension_numbers<[1], [0], [0], [1], [0, 0, 1, 1], [], []>} : vector<128x384xbf16>, vector<384x128xbf16>, vector<128x128xf32> -> vector<128x128xf32>
    %53 = arith.addf %44, %52 : vector<128x128xf32>
    %c0_56 = arith.constant 0 : index
    %c0_57 = arith.constant 0 : index
    %54 = vector.load %arg6[%c0_56, %c0_57] : memref<1x128xf32, #tpu.memory_space<vmem>>, vector<1x128xf32>
    %55 = vector.broadcast %54 : vector<1x128xf32> to vector<128x128xf32>
    %56 = arith.addf %53, %55 : vector<128x128xf32>
    %cst_58 = arith.constant 0.000000e+00 : f32
    %57 = vector.broadcast %cst_58 : f32 to vector<128x128xf32>
    %58 = arith.maximumf %56, %57 : vector<128x128xf32>
    %59 = arith.truncf %58 : vector<128x128xf32> to vector<128x128xbf16>
    %c0_59 = arith.constant 0 : index
    %c0_60 = arith.constant 0 : index
    %60 = vector.load %arg7[%c0_59, %c0_60] : memref<128x128xbf16, #tpu.memory_space<vmem>>, vector<128x128xbf16>
    %cst_61 = arith.constant dense<0.000000e+00> : vector<128x128xf32>
    %61 = tpu.matmul %59, %60, %cst_61 {dimension_numbers = #tpu.dot_dimension_numbers<[1], [0], [0], [1], [0, 0, 1, 1], [], []>} : vector<128x128xbf16>, vector<128x128xbf16>, vector<128x128xf32> -> vector<128x128xf32>
    %c0_62 = arith.constant 0 : index
    %c0_63 = arith.constant 0 : index
    %62 = vector.load %arg8[%c0_62, %c0_63] : memref<1x128xf32, #tpu.memory_space<vmem>>, vector<1x128xf32>
    %63 = vector.broadcast %62 : vector<1x128xf32> to vector<128x128xf32>
    %64 = arith.addf %61, %63 : vector<128x128xf32>
    %c2_64 = arith.constant 2 : index
    %c0_65 = arith.constant 0 : index
    %c0_66 = arith.constant 0 : index
    %65 = vector.load %arg12[%c2_64, %c0_65, %c0_66] : memref<12x16x128xbf16, #tpu.memory_space<vmem>>, vector<8x16x128xbf16>
    %66 = vector.shape_cast %65 : vector<8x16x128xbf16> to vector<128x128xbf16>
    %c0_67 = arith.constant 0 : index
    %c0_68 = arith.constant 0 : index
    %67 = vector.load %arg9[%c0_67, %c0_68] : memref<128x128xbf16, #tpu.memory_space<vmem>>, vector<128x128xbf16>
    %cst_69 = arith.constant dense<0.000000e+00> : vector<128x128xf32>
    %68 = tpu.matmul %66, %67, %cst_69 {dimension_numbers = #tpu.dot_dimension_numbers<[1], [0], [0], [1], [0, 0, 1, 1], [], []>} : vector<128x128xbf16>, vector<128x128xbf16>, vector<128x128xf32> -> vector<128x128xf32>
    %c0_70 = arith.constant 0 : index
    %c0_71 = arith.constant 0 : index
    %69 = vector.load %arg10[%c0_70, %c0_71] : memref<1x128xf32, #tpu.memory_space<vmem>>, vector<1x128xf32>
    %70 = vector.broadcast %69 : vector<1x128xf32> to vector<128x128xf32>
    %71 = arith.addf %68, %70 : vector<128x128xf32>
    %72 = arith.addf %64, %71 : vector<128x128xf32>
    %cst_72 = arith.constant 0.000000e+00 : f32
    %73 = vector.broadcast %cst_72 : f32 to vector<128x128xf32>
    %74 = arith.maximumf %72, %73 : vector<128x128xf32>
    %75 = vector.shape_cast %74 : vector<128x128xf32> to vector<1x8x16x128xf32>
    %76 = arith.truncf %75 : vector<1x8x16x128xf32> to vector<1x8x16x128xbf16>
    %c0_73 = arith.constant 0 : index
    %c0_74 = arith.constant 0 : index
    %c0_75 = arith.constant 0 : index
    %c0_76 = arith.constant 0 : index
    %77 = vector.load %arg11[%c0_73, %c0_74, %c0_75, %c0_76] : memref<1x8x16x128xbf16, #tpu.memory_space<vmem>>, vector<1x8x16x128xbf16>
    tpu.vector_store %arg11[%c0_73, %c0_74, %c0_75, %c0_76], %76 {strides = array<i32>} : memref<1x8x16x128xbf16, #tpu.memory_space<vmem>>, vector<1x8x16x128xbf16>,
    return
  }
  func.func @transform_1(%arg0: i32, %arg1: i32) -> (i32, i32) {
    %c0_i32 = arith.constant 0 : i32
    %c0_i32_0 = arith.constant 0 : i32
    %c0_i32_1 = arith.constant 0 : i32
    return %c0_i32, %c0_i32_0 : i32, i32
  }
  func.func @transform_2(%arg0: i32, %arg1: i32) -> (i32, i32) {
    %c0_i32 = arith.constant 0 : i32
    %c0_i32_0 = arith.constant 0 : i32
    %c0_i32_1 = arith.constant 0 : i32
    return %c0_i32, %c0_i32_0 : i32, i32
  }
  func.func @transform_3(%arg0: i32, %arg1: i32) -> (i32, i32, i32) {
    %c0_i32 = arith.constant 0 : i32
    %c0_i32_0 = arith.constant 0 : i32
    %c0_i32_1 = arith.constant 0 : i32
    %c0_i32_2 = arith.constant 0 : i32
    return %c0_i32, %c0_i32_0, %c0_i32_1 : i32, i32, i32
  }
  func.func @transform_4(%arg0: i32, %arg1: i32) -> (i32, i32) {
    %c0_i32 = arith.constant 0 : i32
    %c0_i32_0 = arith.constant 0 : i32
    %c0_i32_1 = arith.constant 0 : i32
    return %c0_i32, %c0_i32_0 : i32, i32
  }
  func.func @transform_5(%arg0: i32, %arg1: i32) -> (i32, i32) {
    %c0_i32 = arith.constant 0 : i32
    %c0_i32_0 = arith.constant 0 : i32
    %c0_i32_1 = arith.constant 0 : i32
    return %c0_i32, %c0_i32_0 : i32, i32
  }
  func.func @transform_6(%arg0: i32, %arg1: i32) -> (i32, i32) {
    %c0_i32 = arith.constant 0 : i32
    %c0_i32_0 = arith.constant 0 : i32
    %c0_i32_1 = arith.constant 0 : i32
    return %c0_i32, %c0_i32_0 : i32, i32
  }
  func.func @transform_7(%arg0: i32, %arg1: i32) -> (i32, i32) {
    %c0_i32 = arith.constant 0 : i32
    %c0_i32_0 = arith.constant 0 : i32
    %c0_i32_1 = arith.constant 0 : i32
    return %c0_i32, %c0_i32_0 : i32, i32
  }
  func.func @transform_8(%arg0: i32, %arg1: i32) -> (i32, i32) {
    %c0_i32 = arith.constant 0 : i32
    %c0_i32_0 = arith.constant 0 : i32
    %c0_i32_1 = arith.constant 0 : i32
    return %c0_i32, %c0_i32_0 : i32, i32
  }
  func.func @transform_9(%arg0: i32, %arg1: i32) -> (i32, i32, i32, i32) {
    %c0_i32 = arith.constant 0 : i32
    %c0_i32_0 = arith.constant 0 : i32
    %c0_i32_1 = arith.constant 0 : i32
    return %arg0, %arg1, %c0_i32, %c0_i32_0 : i32, i32, i32, i32
  }
}

</mosaic_0001>

<llo_original>
// kernel: tpu_custom_call.1
$region0: #{tpu_custom_call.1}
  #allocation0 [shape = 'u32[]', space=smem, size = 0x4, offset = 0x4, fixed_abs, tag = 'smem constant byte address 0x4 - core index']
  #allocation1 [shape = 'u32[144,128]{1,0:T(1,128)}', space=vmem, size = 0x12000, scoped, tag = 'internal scratch']
  #allocation2 [shape = 'bf16[12,16,128]{2,1,0:T(16,128)(2,1)}', space=vmem, size = 0xc000, scoped, tag = 'scratch operand']
  #allocation3 [shape = 'bf16[12,32,128]{2,1,0:T(16,128)(2,1)}', space=vmem, size = 0x18000, scoped, tag = 'scratch operand']
  #allocation4 [shape = 's32[1]{0}', space=sflag, size = 0x4, scoped, tag = 'scratch operand']
  #allocation14 [shape = 's32[]', space=sflag, size = 0x4, offset = 0, fixed_abs, tag = 'sflag constant byte address 0x0 - dummy sync flag']
  #allocation15 [shape = 's32[]', space=sflag, size = 0x4, offset = 0, fixed_abs, tag = 'sflag constant byte address 0x0 - dummy sync flag']
  #allocation16 [shape = 'u32[]', space=smem, size = 0x4, offset = 0x44, fixed_abs, tag = 'smem constant byte address 0x44 - assertion arg 0']
  #allocation17 [shape = 'u32[]', space=smem, size = 0x4, offset = 0x48, fixed_abs, tag = 'smem constant byte address 0x48 - assertion arg 1']
  %s0 = inlined_call_operand.hbm [shape: bf16[2,20,16,128], index: 0, kind: input, shape index: {}]
  %s1 = inlined_call_operand.hbm [shape: bf16[128,128], index: 1, kind: input, shape index: {}]
  %s2 = inlined_call_operand.vmem [shape: f32[1,128], index: 2, kind: input, shape index: {}]
  %s3 = inlined_call_operand.hbm [shape: bf16[3,384,128], index: 3, kind: input, shape index: {}]
  %s4 = inlined_call_operand.vmem [shape: f32[1,128], index: 4, kind: input, shape index: {}]
  %s5 = inlined_call_operand.hbm [shape: bf16[128,128], index: 5, kind: input, shape index: {}]
  %s6 = inlined_call_operand.vmem [shape: f32[1,128], index: 6, kind: input, shape index: {}]
  %s7 = inlined_call_operand.hbm [shape: bf16[128,128], index: 7, kind: input, shape index: {}]
  %s8 = inlined_call_operand.vmem [shape: f32[1,128], index: 8, kind: input, shape index: {}]
  %s9 = inlined_call_operand.hbm [shape: bf16[2,16,16,128], index: 9, kind: output, shape index: {}]
  %s10 = sld [smem:[#allocation0]]
  $region93: #{tpu_custom_call.1} parent=0
    _
  %s12 = ssub.s32 1, %s10
  %s13 = scalar_select 0, %s12, %s10
  $region1: #{tpu_custom_call.1} parent=0
    #allocation5 [shape = 'u8[32768]{0}', space=vmem, size = 0x8000, scoped, tag = 'input window, operand 1, single buffered']
    #allocation6 [shape = 's32[2]{0}', space=sflag, size = 0x8, scoped, tag = 'scoped memory for tpu_custom_call.1']
    #allocation7 [shape = 's32[2]{0}', space=sflag, size = 0x8, scoped, tag = 'scoped memory for tpu_custom_call.1']
    #allocation8 [shape = 'u8[294912]{0}', space=vmem, size = 0x48000, scoped, tag = 'input window, operand 3, single buffered']
    #allocation9 [shape = 's32[1]{0}', space=sflag, size = 0x4, scoped, tag = 'scoped memory for tpu_custom_call.1']
    #allocation10 [shape = 'u8[32768]{0}', space=vmem, size = 0x8000, scoped, tag = 'input window, operand 5, single buffered']
    #allocation11 [shape = 'u8[32768]{0}', space=vmem, size = 0x8000, scoped, tag = 'input window, operand 7, single buffered']
    #allocation12 [shape = 's32[1]{0}', space=sflag, size = 0x4, scoped, tag = 'scoped memory for tpu_custom_call.1']
    #allocation13 [shape = 'u8[65536]{0}', space=vmem, size = 0x10000, scoped, tag = 'output window, operand 0']
    %14 = vsyncpa [#allocation6], 0
    %15 = vsyncpa [#allocation9], 0
    %16 = vsyncpa [#allocation12], 0
    %17 = vsyncpa [#allocation7], 0
    %s18 = scalar_lea.sflag [#allocation7], 1
    %19 = vsyncpa %s18, 0
    loop: start=0, step=1, limit=6
    $region2: #{tpu_custom_call.1} parent=1 // loop_pre_header
      _
    $region3: #{tpu_custom_call.1} parent=1 // loop_header
      %s21 = sphi 0, %s25
      %p22 = scmp.ge.s32.totalorder %s21, 6
      %s28 = sphi 0, %s40
      %s29 = sphi 0, %s36
      %s30 = sphi 0, %s28
      %s31 = sphi 0, %s29
      %s32 = sphi 0, %s30
      %s33 = sphi 0, %s31
      %s41 = sphi 0, %s41
      %s43 = sphi 0, %s41
      %s44 = sphi 0, %s43
      %s58 = sphi 0, %s44
      %s62 = sphi 0, %s62
      %s64 = sphi 0, %s62
      %s65 = sphi 0, %s64
      %s79 = sphi 0, %s65
      %s83 = sphi 0, %s83
      %s85 = sphi 0, %s83
      %s86 = sphi 0, %s85
      %s100 = sphi 0, %s86
      %s104 = sphi 0, %s104
      %s106 = sphi 0, %s104
      %s107 = sphi 0, %s106
      %s121 = sphi 0, %s107
      %s125 = sphi 0, %s125
      %s127 = sphi 0, %s125
      %s128 = sphi 0, %s127
      %s142 = sphi 0, %s128
      %s146 = sphi 0, %s146
      %s148 = sphi 0, %s146
      %s149 = sphi 0, %s148
      %s163 = sphi 0, %s149
      %s167 = sphi 0, %s167
      %s169 = sphi 0, %s167
      %s170 = sphi 0, %s169
      %s184 = sphi 0, %s170
      %s188 = sphi 0, %s188
      %s190 = sphi 0, %s188
      %s191 = sphi 0, %s190
      %s205 = sphi 0, %s191
      %s213 = sphi 0, %s215
      %s216 = sphi 0, %s213
      %s217 = sphi 0, %s216
      %s233 = sphi 0, %s217
    $region4: #{tpu_custom_call.1} parent=1 // loop_header_branch
      %24 = sbr.rel (%p22) target = $region8
    $region5: #{tpu_custom_call.1} parent=1 // loop_body
      %s26 = ssub.s32 %s21, 1
      %s27 = ssub.s32 %s21, 2
      %s34 = sadd.s32 1, %s29
      %p35 = scmp.ge.s32.totalorder %s34, 2
      %s36 = scalar_select %p35, 0, %s34
      %s37 = sadd.s32 1, %s28
      %s38 = scalar_select %p35, %s37, %s28
      %p39 = scmp.ge.s32.totalorder %s38, 2
      %s40 = scalar_select %p39, 0, %s38
      %s42 = sadd.s32 %s41, 1
      %p45 = scmp.eq.s32.totalorder %s21, 3
      %p46 = scmp.ne.s32.totalorder %s41, %s43
      %p47 = scmp.eq.s32.totalorder %s21, 0
      %p48 = por %p46, %p47
      %p49 = scmp.ne.s32.totalorder %s41, %s43
      %p50 = scmp.eq.s32.totalorder %s26, 3
      %p51 = por %p49, %p50
      %p52 = scmp.ne.s32.totalorder %s43, %s44
      %p53 = scmp.eq.s32.totalorder %s26, 0
      %p54 = por %p52, %p53
      %p55 = scmp.ne.s32.totalorder %s43, %s44
      %p56 = scmp.eq.s32.totalorder %s27, 3
      %p57 = por %p55, %p56
      %p59 = scmp.ne.s32.totalorder %s44, %s58
      %p60 = scmp.eq.s32.totalorder %s27, 0
      %p61 = por %p59, %p60
      %s63 = sadd.s32 %s62, 1
      %p66 = scmp.eq.s32.totalorder %s21, 3
      %p67 = scmp.ne.s32.totalorder %s62, %s64
      %p68 = scmp.eq.s32.totalorder %s21, 0
      %p69 = por %p67, %p68
      %p70 = scmp.ne.s32.totalorder %s62, %s64
      %p71 = scmp.eq.s32.totalorder %s26, 3
      %p72 = por %p70, %p71
      %p73 = scmp.ne.s32.totalorder %s64, %s65
      %p74 = scmp.eq.s32.totalorder %s26, 0
      %p75 = por %p73, %p74
      %p76 = scmp.ne.s32.totalorder %s64, %s65
      %p77 = scmp.eq.s32.totalorder %s27, 3
      %p78 = por %p76, %p77
      %p80 = scmp.ne.s32.totalorder %s65, %s79
      %p81 = scmp.eq.s32.totalorder %s27, 0
      %p82 = por %p80, %p81
      %s84 = sadd.s32 %s83, 1
      %p87 = scmp.eq.s32.totalorder %s21, 3
      %p88 = scmp.ne.s32.totalorder %s83, %s85
      %p89 = scmp.eq.s32.totalorder %s21, 0
      %p90 = por %p88, %p89
      %p91 = scmp.ne.s32.totalorder %s83, %s85
      %p92 = scmp.eq.s32.totalorder %s26, 3
      %p93 = por %p91, %p92
      %p94 = scmp.ne.s32.totalorder %s85, %s86
      %p95 = scmp.eq.s32.totalorder %s26, 0
      %p96 = por %p94, %p95
      %p97 = scmp.ne.s32.totalorder %s85, %s86
      %p98 = scmp.eq.s32.totalorder %s27, 3
      %p99 = por %p97, %p98
      %p101 = scmp.ne.s32.totalorder %s86, %s100
      %p102 = scmp.eq.s32.totalorder %s27, 0
      %p103 = por %p101, %p102
      %s105 = sadd.s32 %s104, 1
      %p108 = scmp.eq.s32.totalorder %s21, 3
      %p109 = scmp.ne.s32.totalorder %s104, %s106
      %p110 = scmp.eq.s32.totalorder %s21, 0
      %p111 = por %p109, %p110
      %p112 = scmp.ne.s32.totalorder %s104, %s106
      %p113 = scmp.eq.s32.totalorder %s26, 3
      %p114 = por %p112, %p113
      %p115 = scmp.ne.s32.totalorder %s106, %s107
      %p116 = scmp.eq.s32.totalorder %s26, 0
      %p117 = por %p115, %p116
      %p118 = scmp.ne.s32.totalorder %s106, %s107
      %p119 = scmp.eq.s32.totalorder %s27, 3
      %p120 = por %p118, %p119
      %p122 = scmp.ne.s32.totalorder %s107, %s121
      %p123 = scmp.eq.s32.totalorder %s27, 0
      %p124 = por %p122, %p123
      %s126 = sadd.s32 %s125, 1
      %p129 = scmp.eq.s32.totalorder %s21, 3
      %p130 = scmp.ne.s32.totalorder %s125, %s127
      %p131 = scmp.eq.s32.totalorder %s21, 0
      %p132 = por %p130, %p131
      %p133 = scmp.ne.s32.totalorder %s125, %s127
      %p134 = scmp.eq.s32.totalorder %s26, 3
      %p135 = por %p133, %p134
      %p136 = scmp.ne.s32.totalorder %s127, %s128
      %p137 = scmp.eq.s32.totalorder %s26, 0
      %p138 = por %p136, %p137
      %p139 = scmp.ne.s32.totalorder %s127, %s128
      %p140 = scmp.eq.s32.totalorder %s27, 3
      %p141 = por %p139, %p140
      %p143 = scmp.ne.s32.totalorder %s128, %s142
      %p144 = scmp.eq.s32.totalorder %s27, 0
      %p145 = por %p143, %p144
      %s147 = sadd.s32 %s146, 1
      %p150 = scmp.eq.s32.totalorder %s21, 3
      %p151 = scmp.ne.s32.totalorder %s146, %s148
      %p152 = scmp.eq.s32.totalorder %s21, 0
      %p153 = por %p151, %p152
      %p154 = scmp.ne.s32.totalorder %s146, %s148
      %p155 = scmp.eq.s32.totalorder %s26, 3
      %p156 = por %p154, %p155
      %p157 = scmp.ne.s32.totalorder %s148, %s149
      %p158 = scmp.eq.s32.totalorder %s26, 0
      %p159 = por %p157, %p158
      %p160 = scmp.ne.s32.totalorder %s148, %s149
      %p161 = scmp.eq.s32.totalorder %s27, 3
      %p162 = por %p160, %p161
      %p164 = scmp.ne.s32.totalorder %s149, %s163
      %p165 = scmp.eq.s32.totalorder %s27, 0
      %p166 = por %p164, %p165
      %s168 = sadd.s32 %s167, 1
      %p171 = scmp.eq.s32.totalorder %s21, 3
      %p172 = scmp.ne.s32.totalorder %s167, %s169
      %p173 = scmp.eq.s32.totalorder %s21, 0
      %p174 = por %p172, %p173
      %p175 = scmp.ne.s32.totalorder %s167, %s169
      %p176 = scmp.eq.s32.totalorder %s26, 3
      %p177 = por %p175, %p176
      %p178 = scmp.ne.s32.totalorder %s169, %s170
      %p179 = scmp.eq.s32.totalorder %s26, 0
      %p180 = por %p178, %p179
      %p181 = scmp.ne.s32.totalorder %s169, %s170
      %p182 = scmp.eq.s32.totalorder %s27, 3
      %p183 = por %p181, %p182
      %p185 = scmp.ne.s32.totalorder %s170, %s184
      %p186 = scmp.eq.s32.totalorder %s27, 0
      %p187 = por %p185, %p186
      %s189 = sadd.s32 %s188, 1
      %p192 = scmp.eq.s32.totalorder %s21, 3
      %p193 = scmp.ne.s32.totalorder %s188, %s190
      %p194 = scmp.eq.s32.totalorder %s21, 0
      %p195 = por %p193, %p194
      %p196 = scmp.ne.s32.totalorder %s188, %s190
      %p197 = scmp.eq.s32.totalorder %s26, 3
      %p198 = por %p196, %p197
      %p199 = scmp.ne.s32.totalorder %s190, %s191
      %p200 = scmp.eq.s32.totalorder %s26, 0
      %p201 = por %p199, %p200
      %p202 = scmp.ne.s32.totalorder %s190, %s191
      %p203 = scmp.eq.s32.totalorder %s27, 3
      %p204 = por %p202, %p203
      %p206 = scmp.ne.s32.totalorder %s191, %s205
      %p207 = scmp.eq.s32.totalorder %s27, 0
      %p208 = por %p206, %p207
      %s209 = ssub.s32 %s28, %s40
      %s210 = ssub.s32 %s29, %s36
      %s211 = sor.u32 %s209, %s210
      %p212 = scmp.eq.s32.totalorder %s211, 0
      %s214 = sadd.s32 %s213, 1
      %s215 = scalar_select %p212, %s213, %s214
      %p218 = pneg %p212
      %p219 = scmp.eq.s32.totalorder %s21, 3
      %p220 = por %p218, %p219
      %p221 = scmp.ne.s32.totalorder %s213, %s216
      %p222 = scmp.eq.s32.totalorder %s21, 0
      %p223 = por %p221, %p222
      %p224 = scmp.ne.s32.totalorder %s213, %s216
      %p225 = scmp.eq.s32.totalorder %s26, 3
      %p226 = por %p224, %p225
      %p227 = scmp.ne.s32.totalorder %s216, %s217
      %p228 = scmp.eq.s32.totalorder %s26, 0
      %p229 = por %p227, %p228
      %p230 = scmp.ne.s32.totalorder %s216, %s217
      %p231 = scmp.eq.s32.totalorder %s27, 3
      %p232 = por %p230, %p231
      %p234 = scmp.ne.s32.totalorder %s217, %s233
      %p235 = scmp.eq.s32.totalorder %s27, 0
      %p236 = por %p234, %p235
      %p237 = scmp.le.s32.totalorder 1, %s21
      %p238 = scmp.lt.s32.totalorder %s21, 5
      %p239 = pnand %p237, %p238
      %p240 = pneg %p239
      // Predicated region
      $region9: #{tpu_custom_call.1} parent=5 // pred_check
        _
      $region10: #{tpu_custom_call.1} parent=5 // pred_check_branch
        %242 = sbr.rel (%p239) target = $region12
      $region11: #{tpu_custom_call.1} parent=5 // pred_region
        %s243 = ssub.s32 %s21, 1
        // Predicated region
        $region13: #{tpu_custom_call.1} parent=11 // pred_check
          %p244 = pneg %p54
        $region14: #{tpu_custom_call.1} parent=11 // pred_check_branch
          %246 = sbr.rel (%p244) target = $region16
        $region15: #{tpu_custom_call.1} parent=11 // pred_region
          %s248 = ssub.s32 1024, 1024
          %249 = vsyncadd [#allocation6], %s248
          %s250 = sshll.u32 [#allocation5], 4
          %s251 = int_to_ptr.vmem [resolvable:$true] %s250
          %256 = dma.hbm_to_vmem [thread:$0]  %s1, 1024, %s251, [#allocation6], 64, 64, 4
        $region16: #{tpu_custom_call.1} parent=11 // pred_fallthru
          _
        // Predicated region
        $region17: #{tpu_custom_call.1} parent=11 // pred_check
          %p257 = pneg %p75
        $region18: #{tpu_custom_call.1} parent=11 // pred_check_branch
          %259 = sbr.rel (%p257) target = $region20
        $region19: #{tpu_custom_call.1} parent=11 // pred_region
          _
        $region20: #{tpu_custom_call.1} parent=11 // pred_fallthru
          _
        // Predicated region
        $region21: #{tpu_custom_call.1} parent=11 // pred_check
          %p260 = pneg %p96
        $region22: #{tpu_custom_call.1} parent=11 // pred_check_branch
          %262 = sbr.rel (%p260) target = $region24
        $region23: #{tpu_custom_call.1} parent=11 // pred_region
          %s264 = ssub.s32 9216, 9216
          %265 = vsyncadd [#allocation9], %s264
          %s266 = sshll.u32 [#allocation8], 4
          %s267 = int_to_ptr.vmem [resolvable:$true] %s266
          %272 = dma.hbm_to_vmem [thread:$0]  %s3, 9216, %s267, [#allocation9], 64, 64, 4
        $region24: #{tpu_custom_call.1} parent=11 // pred_fallthru
          _
        // Predicated region
        $region25: #{tpu_custom_call.1} parent=11 // pred_check
          %p273 = pneg %p117
        $region26: #{tpu_custom_call.1} parent=11 // pred_check_branch
          %275 = sbr.rel (%p273) target = $region28
        $region27: #{tpu_custom_call.1} parent=11 // pred_region
          _
        $region28: #{tpu_custom_call.1} parent=11 // pred_fallthru
          _
        // Predicated region
        $region29: #{tpu_custom_call.1} parent=11 // pred_check
          %p276 = pneg %p138
        $region30: #{tpu_custom_call.1} parent=11 // pred_check_branch
          %278 = sbr.rel (%p276) target = $region32
        $region31: #{tpu_custom_call.1} parent=11 // pred_region
          %s280 = ssub.s32 1024, 1024
          %281 = vsyncadd [#allocation9], %s280
          %s282 = sshll.u32 [#allocation10], 4
          %s283 = int_to_ptr.vmem [resolvable:$true] %s282
          %288 = dma.hbm_to_vmem [thread:$0]  %s5, 1024, %s283, [#allocation9], 64, 64, 4
        $region32: #{tpu_custom_call.1} parent=11 // pred_fallthru
          _
        // Predicated region
        $region33: #{tpu_custom_call.1} parent=11 // pred_check
          %p289 = pneg %p159
        $region34: #{tpu_custom_call.1} parent=11 // pred_check_branch
          %291 = sbr.rel (%p289) target = $region36
        $region35: #{tpu_custom_call.1} parent=11 // pred_region
          _
        $region36: #{tpu_custom_call.1} parent=11 // pred_fallthru
          _
        // Predicated region
        $region37: #{tpu_custom_call.1} parent=11 // pred_check
          %p292 = pneg %p180
        $region38: #{tpu_custom_call.1} parent=11 // pred_check_branch
          %294 = sbr.rel (%p292) target = $region40
        $region39: #{tpu_custom_call.1} parent=11 // pred_region
          %s296 = ssub.s32 1024, 1024
          %297 = vsyncadd [#allocation12], %s296
          %s298 = sshll.u32 [#allocation11], 4
          %s299 = int_to_ptr.vmem [resolvable:$true] %s298
          %304 = dma.hbm_to_vmem [thread:$0]  %s7, 1024, %s299, [#allocation12], 64, 64, 4
        $region40: #{tpu_custom_call.1} parent=11 // pred_fallthru
          _
        // Predicated region
        $region41: #{tpu_custom_call.1} parent=11 // pred_check
          %p305 = pneg %p201
        $region42: #{tpu_custom_call.1} parent=11 // pred_check_branch
          %307 = sbr.rel (%p305) target = $region44
        $region43: #{tpu_custom_call.1} parent=11 // pred_region
          _
        $region44: #{tpu_custom_call.1} parent=11 // pred_fallthru
          _
      $region12: #{tpu_custom_call.1} parent=5 // pred_fallthru
        _
      %p308 = scmp.lt.s32.totalorder %s21, 4
      // Predicated region
      $region45: #{tpu_custom_call.1} parent=5 // pred_check
        %p309 = pneg %p308
      $region46: #{tpu_custom_call.1} parent=5 // pred_check_branch
        %311 = sbr.rel (%p309) target = $region48
      $region47: #{tpu_custom_call.1} parent=5 // pred_region
        _
      $region48: #{tpu_custom_call.1} parent=5 // pred_fallthru
        _
      %p312 = scmp.le.s32.totalorder 1, %s21
      %p313 = scmp.lt.s32.totalorder %s21, 5
      %p314 = pnand %p312, %p313
      %p315 = pneg %p314
      // Predicated region
      $region49: #{tpu_custom_call.1} parent=5 // pred_check
        _
      $region50: #{tpu_custom_call.1} parent=5 // pred_check_branch
        %317 = sbr.rel (%p314) target = $region52
      $region51: #{tpu_custom_call.1} parent=5 // pred_region
        %s318 = ssub.s32 %s21, 1
        // Predicated region
        $region53: #{tpu_custom_call.1} parent=51 // pred_check
          %p319 = pneg %p54
        $region54: #{tpu_custom_call.1} parent=51 // pred_check_branch
          %321 = sbr.rel (%p319) target = $region56
        $region55: #{tpu_custom_call.1} parent=51 // pred_region
          %322 = dma.done [#allocation6], 1024
        $region56: #{tpu_custom_call.1} parent=51 // pred_fallthru
          _
        // Predicated region
        $region57: #{tpu_custom_call.1} parent=51 // pred_check
          %p323 = pneg %p96
        $region58: #{tpu_custom_call.1} parent=51 // pred_check_branch
          %325 = sbr.rel (%p323) target = $region60
        $region59: #{tpu_custom_call.1} parent=51 // pred_region
          %326 = dma.done [#allocation9], 9216
        $region60: #{tpu_custom_call.1} parent=51 // pred_fallthru
          _
        // Predicated region
        $region61: #{tpu_custom_call.1} parent=51 // pred_check
          %p327 = pneg %p138
        $region62: #{tpu_custom_call.1} parent=51 // pred_check_branch
          %329 = sbr.rel (%p327) target = $region64
        $region63: #{tpu_custom_call.1} parent=51 // pred_region
          %330 = dma.done [#allocation9], 1024
        $region64: #{tpu_custom_call.1} parent=51 // pred_fallthru
          _
        // Predicated region
        $region65: #{tpu_custom_call.1} parent=51 // pred_check
          %p331 = pneg %p180
        $region66: #{tpu_custom_call.1} parent=51 // pred_check_branch
          %333 = sbr.rel (%p331) target = $region68
        $region67: #{tpu_custom_call.1} parent=51 // pred_region
          %334 = dma.done [#allocation12], 1024
        $region68: #{tpu_custom_call.1} parent=51 // pred_fallthru
          _
        %p335 = pneg %p54
        %p336 = pneg %p51
        %p337 = pneg %p75
        %p338 = pneg %p72
        %p339 = pneg %p96
        %p340 = pneg %p93
        %p341 = pneg %p117
        %p342 = pneg %p114
        %p343 = pneg %p138
        %p344 = pneg %p135
        %p345 = pneg %p159
        %p346 = pneg %p156
        %p347 = pneg %p180
        %p348 = pneg %p177
        %p349 = pneg %p201
        %p350 = pneg %p198
        %p351 = pneg %p229
        %p352 = pneg %p226
        %s353 = sand.u32 %s216, 1
        %s354 = scalar_lea.sflag [#allocation7], %s353
        %s355 = sand.u32 %s216, 1
        %s356 = smul.addr %s355, 64
        %s357 = scalar_lea.vmem [#allocation13], %s356
        %s358 = smul.u32 8, %s31
        %s360 = smul.u32 %s31, 8
        %s361 = smul.u32 %s360, 2
        %s362 = smul.u32 %s30, 40
        %s363 = sadd.s32 %s361, %s362
        %s364 = smul.addr %s363, 64
        %s365 = scalar_lea.hbm %s0, %s364
        // Predicated region
        $region69: #{tpu_custom_call.1} parent=51 // pred_check
          _
        $region70: #{tpu_custom_call.1} parent=51 // pred_check_branch
          %367 = sbr.rel target = $region72
        $region71: #{tpu_custom_call.1} parent=51 // pred_region
          %368 = sst [smem:[#allocation16]] [#allocation15]
          %369 = sst [smem:[#allocation17]] [#allocation14]
        $region72: #{tpu_custom_call.1} parent=51 // pred_fallthru
          _
        %371 = shalt.err (0)
        %s373 = sshll.u32 [#allocation2], 4
        %s374 = int_to_ptr.vmem [resolvable:$true] %s373
        %376 = dma.hbm_to_vmem [thread:$0]  %s365, 1536, %s374, [#allocation4]
        %s377 = smul.u32 4, 12
        %s378 = smul.u32 %s377, 2
        %s379 = smul.u32 %s378, 1
        %s380 = sshll.u32 %s379, 4
        %381 = dma.done [#allocation4], %s380
        %v382 = vld [vmem:[#allocation2] sm:$0xff]
        %v383 = vld [vmem:[#allocation2 + $0x8] sm:$0xff]
        %v384 = vld [vmem:[#allocation2 + $0x10] sm:$0xff]
        %v385 = vld [vmem:[#allocation2 + $0x18] sm:$0xff]
        %v386 = vld [vmem:[#allocation2 + $0x20] sm:$0xff]
        %v387 = vld [vmem:[#allocation2 + $0x28] sm:$0xff]
        %v388 = vld [vmem:[#allocation2 + $0x30] sm:$0xff]
        %v389 = vld [vmem:[#allocation2 + $0x38] sm:$0xff]
        %v390 = vld [vmem:[#allocation2 + $0x40] sm:$0xff]
        %v391 = vld [vmem:[#allocation2 + $0x48] sm:$0xff]
        %v392 = vld [vmem:[#allocation2 + $0x50] sm:$0xff]
        %v393 = vld [vmem:[#allocation2 + $0x58] sm:$0xff]
        %v394 = vld [vmem:[#allocation5] sm:$0xf]
        %v395 = vld [vmem:[#allocation5 + $0x4] sm:$0xf]
        %v396 = vld [vmem:[#allocation5 + $0x8] sm:$0xf]
        %v397 = vld [vmem:[#allocation5 + $0xc] sm:$0xf]
        %v398 = vld [vmem:[#allocation5 + $0x10] sm:$0xf]
        %v399 = vld [vmem:[#allocation5 + $0x14] sm:$0xf]
        %v400 = vld [vmem:[#allocation5 + $0x18] sm:$0xf]
        %v401 = vld [vmem:[#allocation5 + $0x1c] sm:$0xf]
        %v402 = vld [vmem:[#allocation5 + $0x20] sm:$0xf]
        %v403 = vld [vmem:[#allocation5 + $0x24] sm:$0xf]
        %v404 = vld [vmem:[#allocation5 + $0x28] sm:$0xf]
        %v405 = vld [vmem:[#allocation5 + $0x2c] sm:$0xf]
        %v406 = vld [vmem:[#allocation5 + $0x30] sm:$0xf]
        %v407 = vld [vmem:[#allocation5 + $0x34] sm:$0xf]
        %v408 = vld [vmem:[#allocation5 + $0x38] sm:$0xf]
        %v409 = vld [vmem:[#allocation5 + $0x3c] sm:$0xf]
        %v410 = vld [vmem:[%s2] sm:$0x1]
        %v412 = vlaneseq
        %v413 = vshrl.u32 %v412, 7
        %v414 = vsub.s32 0, %v413
        %v415 = vrot.slane %v410, %v414
        %v433 = vunpack.c.l.b16 %v394
        %v434 = vunpack.c.l.b16 %v395
        %v435 = vunpack.c.l.b16 %v396
        %v436 = vunpack.c.l.b16 %v397
        %v437 = vunpack.c.l.b16 %v398
        %v438 = vunpack.c.l.b16 %v399
        %v439 = vunpack.c.l.b16 %v400
        %v440 = vunpack.c.l.b16 %v401
        %v441 = vunpack.c.l.b16 %v402
        %v442 = vunpack.c.l.b16 %v403
        %v443 = vunpack.c.l.b16 %v404
        %v444 = vunpack.c.l.b16 %v405
        %v445 = vunpack.c.l.b16 %v406
        %v446 = vunpack.c.l.b16 %v407
        %v447 = vunpack.c.l.b16 %v408
        %v448 = vunpack.c.l.b16 %v409
        %v449 = vpack.c.b16 %v434, %v433
        %v450 = vpack.c.b16 %v436, %v435
        %v451 = vpack.c.b16 %v438, %v437
        %v452 = vpack.c.b16 %v440, %v439
        %v453 = vpack.c.b16 %v442, %v441
        %v454 = vpack.c.b16 %v444, %v443
        %v455 = vpack.c.b16 %v446, %v445
        %v456 = vpack.c.b16 %v448, %v447
        %465 = vmatprep.subr.bf16.mxu0 0
        %466 = vmatpush1.bf16.msra.mxu0 %v449
        %467 = vmatprep.subr.bf16.mxu0 0
        %468 = vmatpush1.bf16.msra.mxu0 %v450
        %469 = vmatprep.subr.bf16.mxu0 0
        %470 = vmatpush1.bf16.msra.mxu0 %v451
        %471 = vmatprep.subr.bf16.mxu0 0
        %472 = vmatpush1.bf16.msra.mxu0 %v452
        %473 = vmatprep.subr.bf16.mxu0 0
        %474 = vmatpush1.bf16.msra.mxu0 %v453
        %475 = vmatprep.subr.bf16.mxu0 0
        %476 = vmatpush1.bf16.msra.mxu0 %v454
        %477 = vmatprep.subr.bf16.mxu0 0
        %478 = vmatpush1.bf16.msra.mxu0 %v455
        %479 = vmatprep.subr.bf16.mxu0 0
        %480 = vmatpush1.bf16.msra.mxu0 %v456
        %481 = vmatprep.subr.bf16.mxu0 0
        %482 = vmatpush1.bf16.msra.mxu0 0
        %483 = vmatprep.subr.bf16.mxu0 0
        %484 = vmatpush1.bf16.msra.mxu0 0
        %485 = vmatprep.subr.bf16.mxu0 0
        %486 = vmatpush1.bf16.msra.mxu0 0
        %487 = vmatprep.subr.bf16.mxu0 0
        %488 = vmatpush1.bf16.msra.mxu0 0
        %489 = vmatprep.subr.bf16.mxu0 0
        %490 = vmatpush1.bf16.msra.mxu0 0
        %491 = vmatprep.subr.bf16.mxu0 0
        %492 = vmatpush1.bf16.msra.mxu0 0
        %493 = vmatprep.subr.bf16.mxu0 0
        %494 = vmatpush1.bf16.msra.mxu0 0
        %495 = vmatprep.subr.bf16.mxu0 0
        %496 = vmatpush1.bf16.msra.mxu0 0
        %497 = vmatprep.mubr.bf16.mxu0 0
        %498 = vmatmul.mubr.bf16.gmra.mrb[0].mxu0 %v382
        %v499 = vpop.f32.mrb[0].mxu0
        %v500 = vadd.f32 %v415, %v499
        %v501 = vpop.f32.mrb[0].mxu0
        %v502 = vpop.f32.mrb[0].mxu0
        %v503 = vadd.f32 %v415, %v502
        %v504 = vpop.f32.mrb[0].mxu0
        %505 = vmatprep.mubr.bf16.mxu0 0
        %506 = vmatmul.mubr.bf16.gmra.mrb[0].mxu0 %v383
        %v507 = vpop.f32.mrb[0].mxu0
        %v508 = vadd.f32 %v415, %v507
        %v509 = vpop.f32.mrb[0].mxu0
        %v510 = vpop.f32.mrb[0].mxu0
        %v511 = vadd.f32 %v415, %v510
        %v512 = vpop.f32.mrb[0].mxu0
        %513 = vmatprep.mubr.bf16.mxu0 0
        %514 = vmatmul.mubr.bf16.gmra.mrb[0].mxu0 %v384
        %v515 = vpop.f32.mrb[0].mxu0
        %v516 = vadd.f32 %v415, %v515
        %v517 = vpop.f32.mrb[0].mxu0
        %v518 = vpop.f32.mrb[0].mxu0
        %v519 = vadd.f32 %v415, %v518
        %v520 = vpop.f32.mrb[0].mxu0
        %521 = vmatprep.mubr.bf16.mxu0 0
        %522 = vmatmul.mubr.bf16.gmra.mrb[0].mxu0 %v385
        %v523 = vpop.f32.mrb[0].mxu0
        %v524 = vadd.f32 %v415, %v523
        %v525 = vpop.f32.mrb[0].mxu0
        %v526 = vpop.f32.mrb[0].mxu0
        %v527 = vadd.f32 %v415, %v526
        %v528 = vpop.f32.mrb[0].mxu0
        %529 = vmatprep.mubr.bf16.mxu0 0
        %530 = vmatmul.mubr.bf16.gmra.mrb[0].mxu0 %v386
        %v531 = vpop.f32.mrb[0].mxu0
        %v532 = vadd.f32 %v415, %v531
        %v533 = vpop.f32.mrb[0].mxu0
        %v534 = vpop.f32.mrb[0].mxu0
        %v535 = vadd.f32 %v415, %v534
        %v536 = vpop.f32.mrb[0].mxu0
        %537 = vmatprep.mubr.bf16.mxu0 0
        %538 = vmatmul.mubr.bf16.gmra.mrb[0].mxu0 %v387
        %v539 = vpop.f32.mrb[0].mxu0
        %v540 = vadd.f32 %v415, %v539
        %v541 = vpop.f32.mrb[0].mxu0
        %v542 = vpop.f32.mrb[0].mxu0
        %v543 = vadd.f32 %v415, %v542
        %v544 = vpop.f32.mrb[0].mxu0
        %545 = vmatprep.mubr.bf16.mxu0 0
        %546 = vmatmul.mubr.bf16.gmra.mrb[0].mxu0 %v388
        %v547 = vpop.f32.mrb[0].mxu0
        %v548 = vadd.f32 %v415, %v547
        %v549 = vpop.f32.mrb[0].mxu0
        %v550 = vpop.f32.mrb[0].mxu0
        %v551 = vadd.f32 %v415, %v550
        %v552 = vpop.f32.mrb[0].mxu0
        %553 = vmatprep.mubr.bf16.mxu0 0
        %554 = vmatmul.mubr.bf16.gmra.mrb[0].mxu0 %v389
        %v555 = vpop.f32.mrb[0].mxu0
        %v556 = vadd.f32 %v415, %v555
        %v557 = vpop.f32.mrb[0].mxu0
        %v558 = vpop.f32.mrb[0].mxu0
        %v559 = vadd.f32 %v415, %v558
        %v560 = vpop.f32.mrb[0].mxu0
        %561 = vmatprep.mubr.bf16.mxu0 0
        %562 = vmatmul.mubr.bf16.gmra.mrb[0].mxu0 %v390
        %v563 = vpop.f32.mrb[0].mxu0
        %v564 = vadd.f32 %v415, %v563
        %v565 = vpop.f32.mrb[0].mxu0
        %v566 = vpop.f32.mrb[0].mxu0
        %v567 = vadd.f32 %v415, %v566
        %v568 = vpop.f32.mrb[0].mxu0
        %569 = vmatprep.mubr.bf16.mxu0 0
        %570 = vmatmul.mubr.bf16.gmra.mrb[0].mxu0 %v391
        %v571 = vpop.f32.mrb[0].mxu0
        %v572 = vadd.f32 %v415, %v571
        %v573 = vpop.f32.mrb[0].mxu0
        %v574 = vpop.f32.mrb[0].mxu0
        %v575 = vadd.f32 %v415, %v574
        %v576 = vpop.f32.mrb[0].mxu0
        %577 = vmatprep.mubr.bf16.mxu0 0
        %578 = vmatmul.mubr.bf16.gmra.mrb[0].mxu0 %v392
        %v579 = vpop.f32.mrb[0].mxu0
        %v580 = vadd.f32 %v415, %v579
        %v581 = vpop.f32.mrb[0].mxu0
        %v582 = vpop.f32.mrb[0].mxu0
        %v583 = vadd.f32 %v415, %v582
        %v584 = vpop.f32.mrb[0].mxu0
        %585 = vmatprep.mubr.bf16.mxu0 0
        %586 = vmatmul.mubr.bf16.gmra.mrb[0].mxu0 %v393
        %v587 = vpop.f32.mrb[0].mxu0
        %v588 = vadd.f32 %v415, %v587
        %v589 = vpop.f32.mrb[0].mxu0
        %v590 = vpop.f32.mrb[0].mxu0
        %v591 = vadd.f32 %v415, %v590
        %v592 = vpop.f32.mrb[0].mxu0
        %593 = vdwg.mxu0
        %v594 = vmax.f32 %v500, 0.0
        %v595 = vmax.f32 %v503, 0.0
        %v596 = vmax.f32 %v508, 0.0
        %v597 = vmax.f32 %v511, 0.0
        %v598 = vmax.f32 %v516, 0.0
        %v599 = vmax.f32 %v519, 0.0
        %v600 = vmax.f32 %v524, 0.0
        %v601 = vmax.f32 %v527, 0.0
        %v602 = vmax.f32 %v532, 0.0
        %v603 = vmax.f32 %v535, 0.0
        %v604 = vmax.f32 %v540, 0.0
        %v605 = vmax.f32 %v543, 0.0
        %v606 = vmax.f32 %v548, 0.0
        %v607 = vmax.f32 %v551, 0.0
        %v608 = vmax.f32 %v556, 0.0
        %v609 = vmax.f32 %v559, 0.0
        %v610 = vmax.f32 %v564, 0.0
        %v611 = vmax.f32 %v567, 0.0
        %v612 = vmax.f32 %v572, 0.0
        %v613 = vmax.f32 %v575, 0.0
        %v614 = vmax.f32 %v580, 0.0
        %v615 = vmax.f32 %v583, 0.0
        %v616 = vmax.f32 %v588, 0.0
        %v617 = vmax.f32 %v591, 0.0
        %v618 = vpack.c.bf16 %v595, %v594
        %v619 = vpack.c.bf16 %v597, %v596
        %v620 = vpack.c.bf16 %v599, %v598
        %v621 = vpack.c.bf16 %v601, %v600
        %v622 = vpack.c.bf16 %v603, %v602
        %v623 = vpack.c.bf16 %v605, %v604
        %v624 = vpack.c.bf16 %v607, %v606
        %v625 = vpack.c.bf16 %v609, %v608
        %v626 = vpack.c.bf16 %v611, %v610
        %v627 = vpack.c.bf16 %v613, %v612
        %v628 = vpack.c.bf16 %v615, %v614
        %v629 = vpack.c.bf16 %v617, %v616
        %v642 = vrot.slane %v618, 4
        %v643 = vrot.slane %v619, 4
        %v644 = vrot.slane %v620, 4
        %v645 = vrot.slane %v621, 4
        %v646 = vrot.slane %v622, 4
        %v647 = vrot.slane %v623, 4
        %v648 = vrot.slane %v624, 4
        %v649 = vrot.slane %v625, 4
        %v650 = vrot.slane %v626, 4
        %v651 = vrot.slane %v627, 4
        %v652 = vrot.slane %v628, 4
        %v653 = vrot.slane %v629, 4
        %666 = vst [vmem:[#allocation3] sm:$0xf0] %v642
        %667 = vst [vmem:[#allocation3 + $0x8] sm:$0xf] %v642
        %668 = vst [vmem:[#allocation3 + $0x10] sm:$0xf0] %v643
        %669 = vst [vmem:[#allocation3 + $0x18] sm:$0xf] %v643
        %670 = vst [vmem:[#allocation3 + $0x20] sm:$0xf0] %v644
        %671 = vst [vmem:[#allocation3 + $0x28] sm:$0xf] %v644
        %672 = vst [vmem:[#allocation3 + $0x30] sm:$0xf0] %v645
        %673 = vst [vmem:[#allocation3 + $0x38] sm:$0xf] %v645
        %674 = vst [vmem:[#allocation3 + $0x40] sm:$0xf0] %v646
        %675 = vst [vmem:[#allocation3 + $0x48] sm:$0xf] %v646
        %676 = vst [vmem:[#allocation3 + $0x50] sm:$0xf0] %v647
        %677 = vst [vmem:[#allocation3 + $0x58] sm:$0xf] %v647
        %678 = vst [vmem:[#allocation3 + $0x60] sm:$0xf0] %v648
        %679 = vst [vmem:[#allocation3 + $0x68] sm:$0xf] %v648
        %680 = vst [vmem:[#allocation3 + $0x70] sm:$0xf0] %v649
        %681 = vst [vmem:[#allocation3 + $0x78] sm:$0xf] %v649
        %682 = vst [vmem:[#allocation3 + $0x80] sm:$0xf0] %v650
        %683 = vst [vmem:[#allocation3 + $0x88] sm:$0xf] %v650
        %684 = vst [vmem:[#allocation3 + $0x90] sm:$0xf0] %v651
        %685 = vst [vmem:[#allocation3 + $0x98] sm:$0xf] %v651
        %686 = vst [vmem:[#allocation3 + $0xa0] sm:$0xf0] %v652
        %687 = vst [vmem:[#allocation3 + $0xa8] sm:$0xf] %v652
        %688 = vst [vmem:[#allocation3 + $0xb0] sm:$0xf0] %v653
        %689 = vst [vmem:[#allocation3 + $0xb8] sm:$0xf] %v653
        %690 = vst [vmem:[#allocation3] sm:$0xf] 0
        %691 = vst [vmem:[#allocation3 + $0x10] sm:$0xf] 0
        %692 = vst [vmem:[#allocation3 + $0x20] sm:$0xf] 0
        %693 = vst [vmem:[#allocation3 + $0x30] sm:$0xf] 0
        %694 = vst [vmem:[#allocation3 + $0x40] sm:$0xf] 0
        %695 = vst [vmem:[#allocation3 + $0x50] sm:$0xf] 0
        %696 = vst [vmem:[#allocation3 + $0x60] sm:$0xf] 0
        %697 = vst [vmem:[#allocation3 + $0x70] sm:$0xf] 0
        %698 = vst [vmem:[#allocation3 + $0x80] sm:$0xf] 0
        %699 = vst [vmem:[#allocation3 + $0x90] sm:$0xf] 0
        %700 = vst [vmem:[#allocation3 + $0xa0] sm:$0xf] 0
        %701 = vst [vmem:[#allocation3 + $0xb0] sm:$0xf] 0
        %702 = vst [vmem:[#allocation3 + $0x8] sm:$0xf0] 0
        %703 = vst [vmem:[#allocation3 + $0x18] sm:$0xf0] 0
        %704 = vst [vmem:[#allocation3 + $0x28] sm:$0xf0] 0
        %705 = vst [vmem:[#allocation3 + $0x38] sm:$0xf0] 0
        %706 = vst [vmem:[#allocation3 + $0x48] sm:$0xf0] 0
        %707 = vst [vmem:[#allocation3 + $0x58] sm:$0xf0] 0
        %708 = vst [vmem:[#allocation3 + $0x68] sm:$0xf0] 0
        %709 = vst [vmem:[#allocation3 + $0x78] sm:$0xf0] 0
        %710 = vst [vmem:[#allocation3 + $0x88] sm:$0xf0] 0
        %711 = vst [vmem:[#allocation3 + $0x98] sm:$0xf0] 0
        %712 = vst [vmem:[#allocation3 + $0xa8] sm:$0xf0] 0
        %713 = vst [vmem:[#allocation3 + $0xb8] sm:$0xf0] 0
        %p714 = scmp.eq.s32.totalorder %s31, 0
        // Predicated region
        $region73: #{tpu_custom_call.1} parent=51 // pred_check
          %p715 = pneg %p714
        $region74: #{tpu_custom_call.1} parent=51 // pred_check_branch
          %717 = sbr.rel (%p715) target = $region76
        $region75: #{tpu_custom_call.1} parent=51 // pred_region
          %718 = vst [vmem:[#allocation3] sm:$0xff] 0
          %719 = vst [vmem:[#allocation3 + $0x8] sm:$0xff] 0
          %720 = vst [vmem:[#allocation3 + $0x10] sm:$0xff] 0
          %721 = vst [vmem:[#allocation3 + $0x18] sm:$0xff] 0
        $region76: #{tpu_custom_call.1} parent=51 // pred_fallthru
          _
        %p722 = scmp.eq.s32.totalorder %s31, 1
        // Predicated region
        $region77: #{tpu_custom_call.1} parent=51 // pred_check
          %p723 = pneg %p722
        $region78: #{tpu_custom_call.1} parent=51 // pred_check_branch
          %725 = sbr.rel (%p723) target = $region80
        $region79: #{tpu_custom_call.1} parent=51 // pred_region
          %s726 = scalar_lea.vmem [#allocation3], 160
          %727 = vst [vmem:[%s726] sm:$0xff] 0
          %728 = vst [vmem:[%s726 + $0x8] sm:$0xff] 0
          %729 = vst [vmem:[%s726 + $0x10] sm:$0xff] 0
          %730 = vst [vmem:[%s726 + $0x18] sm:$0xff] 0
        $region80: #{tpu_custom_call.1} parent=51 // pred_fallthru
          _
        %v731 = vld [vmem:[#allocation3] sm:$0xf8]
        %v732 = vld [vmem:[#allocation3 + $0x8] sm:$0x7]
        %v733 = vld [vmem:[#allocation3 + $0x10] sm:$0xf8]
        %v734 = vld [vmem:[#allocation3 + $0x18] sm:$0x7]
        %v735 = vld [vmem:[#allocation3 + $0x20] sm:$0xf8]
        %v736 = vld [vmem:[#allocation3 + $0x28] sm:$0x7]
        %v737 = vld [vmem:[#allocation3 + $0x30] sm:$0xf8]
        %v738 = vld [vmem:[#allocation3 + $0x38] sm:$0x7]
        %v739 = vld [vmem:[#allocation3 + $0x40] sm:$0xf8]
        %v740 = vld [vmem:[#allocation3 + $0x48] sm:$0x7]
        %v741 = vld [vmem:[#allocation3 + $0x50] sm:$0xf8]
        %v742 = vld [vmem:[#allocation3 + $0x58] sm:$0x7]
        %v743 = vld [vmem:[#allocation3 + $0x60] sm:$0xf8]
        %v744 = vld [vmem:[#allocation3 + $0x68] sm:$0x7]
        %v745 = vld [vmem:[#allocation3 + $0x70] sm:$0xf8]
        %v746 = vld [vmem:[#allocation3 + $0x78] sm:$0x7]
        %v747 = vld [vmem:[#allocation3] sm:$0xf0]
        %v748 = vld [vmem:[#allocation3 + $0x8] sm:$0xf]
        %v749 = vld [vmem:[#allocation3 + $0x10] sm:$0xf0]
        %v750 = vld [vmem:[#allocation3 + $0x18] sm:$0xf]
        %v751 = vld [vmem:[#allocation3 + $0x20] sm:$0xf0]
        %v752 = vld [vmem:[#allocation3 + $0x28] sm:$0xf]
        %v753 = vld [vmem:[#allocation3 + $0x30] sm:$0xf0]
        %v754 = vld [vmem:[#allocation3 + $0x38] sm:$0xf]
        %v755 = vld [vmem:[#allocation3 + $0x40] sm:$0xf0]
        %v756 = vld [vmem:[#allocation3 + $0x48] sm:$0xf]
        %v757 = vld [vmem:[#allocation3 + $0x50] sm:$0xf0]
        %v758 = vld [vmem:[#allocation3 + $0x58] sm:$0xf]
        %v759 = vld [vmem:[#allocation3 + $0x60] sm:$0xf0]
        %v760 = vld [vmem:[#allocation3 + $0x68] sm:$0xf]
        %v761 = vld [vmem:[#allocation3 + $0x70] sm:$0xf0]
        %v762 = vld [vmem:[#allocation3 + $0x78] sm:$0xf]
        %v763 = vld [vmem:[#allocation3] sm:$0xe0]
        %v764 = vld [vmem:[#allocation3 + $0x8] sm:$0x1f]
        %v765 = vld [vmem:[#allocation3 + $0x10] sm:$0xe0]
        %v766 = vld [vmem:[#allocation3 + $0x18] sm:$0x1f]
        %v767 = vld [vmem:[#allocation3 + $0x20] sm:$0xe0]
        %v768 = vld [vmem:[#allocation3 + $0x28] sm:$0x1f]
        %v769 = vld [vmem:[#allocation3 + $0x30] sm:$0xe0]
        %v770 = vld [vmem:[#allocation3 + $0x38] sm:$0x1f]
        %v771 = vld [vmem:[#allocation3 + $0x40] sm:$0xe0]
        %v772 = vld [vmem:[#allocation3 + $0x48] sm:$0x1f]
        %v773 = vld [vmem:[#allocation3 + $0x50] sm:$0xe0]
        %v774 = vld [vmem:[#allocation3 + $0x58] sm:$0x1f]
        %v775 = vld [vmem:[#allocation3 + $0x60] sm:$0xe0]
        %v776 = vld [vmem:[#allocation3 + $0x68] sm:$0x1f]
        %v777 = vld [vmem:[#allocation3 + $0x70] sm:$0xe0]
        %v778 = vld [vmem:[#allocation3 + $0x78] sm:$0x1f]
        %vm795 = vcmask 1046528
        %v796 = vrot.slane %v747, 1
        %v797 = vrot.slane %v748, 1
        %v798 = vsel %vm795, %v796, %v797
        %v799 = vrot.slane %v749, 1
        %v800 = vrot.slane %v750, 1
        %v801 = vsel %vm795, %v799, %v800
        %v802 = vrot.slane %v751, 1
        %v803 = vrot.slane %v752, 1
        %v804 = vsel %vm795, %v802, %v803
        %v805 = vrot.slane %v753, 1
        %v806 = vrot.slane %v754, 1
        %v807 = vsel %vm795, %v805, %v806
        %v808 = vrot.slane %v755, 1
        %v809 = vrot.slane %v756, 1
        %v810 = vsel %vm795, %v808, %v809
        %v811 = vrot.slane %v757, 1
        %v812 = vrot.slane %v758, 1
        %v813 = vsel %vm795, %v811, %v812
        %v814 = vrot.slane %v759, 1
        %v815 = vrot.slane %v760, 1
        %v816 = vsel %vm795, %v814, %v815
        %v817 = vrot.slane %v761, 1
        %v818 = vrot.slane %v762, 1
        %v819 = vsel %vm795, %v817, %v818
        %vm836 = vcmask 1045504
        %v837 = vrot.slane %v763, 2
        %v838 = vrot.slane %v764, 2
        %v839 = vsel %vm836, %v837, %v838
        %v840 = vrot.slane %v765, 2
        %v841 = vrot.slane %v766, 2
        %v842 = vsel %vm836, %v840, %v841
        %v843 = vrot.slane %v767, 2
        %v844 = vrot.slane %v768, 2
        %v845 = vsel %vm836, %v843, %v844
        %v846 = vrot.slane %v769, 2
        %v847 = vrot.slane %v770, 2
        %v848 = vsel %vm836, %v846, %v847
        %v849 = vrot.slane %v771, 2
        %v850 = vrot.slane %v772, 2
        %v851 = vsel %vm836, %v849, %v850
        %v852 = vrot.slane %v773, 2
        %v853 = vrot.slane %v774, 2
        %v854 = vsel %vm836, %v852, %v853
        %v855 = vrot.slane %v775, 2
        %v856 = vrot.slane %v776, 2
        %v857 = vsel %vm836, %v855, %v856
        %v858 = vrot.slane %v777, 2
        %v859 = vrot.slane %v778, 2
        %v860 = vsel %vm836, %v858, %v859
        %vm877 = vcmask 1044480
        %v878 = vrot.slane %v731, 3
        %v879 = vrot.slane %v732, 3
        %v880 = vsel %vm877, %v878, %v879
        %v881 = vrot.slane %v798, 3
        %v882 = vrot.slane %v797, 3
        %v883 = vsel %vm877, %v881, %v882
        %v884 = vrot.slane %v839, 3
        %v885 = vrot.slane %v838, 3
        %v886 = vsel %vm877, %v884, %v885
        %v887 = vrot.slane %v733, 3
        %v888 = vrot.slane %v734, 3
        %v889 = vsel %vm877, %v887, %v888
        %v890 = vrot.slane %v801, 3
        %v891 = vrot.slane %v800, 3
        %v892 = vsel %vm877, %v890, %v891
        %v893 = vrot.slane %v842, 3
        %v894 = vrot.slane %v841, 3
        %v895 = vsel %vm877, %v893, %v894
        %v896 = vrot.slane %v735, 3
        %v897 = vrot.slane %v736, 3
        %v898 = vsel %vm877, %v896, %v897
        %v899 = vrot.slane %v804, 3
        %v900 = vrot.slane %v803, 3
        %v901 = vsel %vm877, %v899, %v900
        %v902 = vrot.slane %v845, 3
        %v903 = vrot.slane %v844, 3
        %v904 = vsel %vm877, %v902, %v903
        %v905 = vrot.slane %v737, 3
        %v906 = vrot.slane %v738, 3
        %v907 = vsel %vm877, %v905, %v906
        %v908 = vrot.slane %v807, 3
        %v909 = vrot.slane %v806, 3
        %v910 = vsel %vm877, %v908, %v909
        %v911 = vrot.slane %v848, 3
        %v912 = vrot.slane %v847, 3
        %v913 = vsel %vm877, %v911, %v912
        %v914 = vrot.slane %v739, 3
        %v915 = vrot.slane %v740, 3
        %v916 = vsel %vm877, %v914, %v915
        %v917 = vrot.slane %v810, 3
        %v918 = vrot.slane %v809, 3
        %v919 = vsel %vm877, %v917, %v918
        %v920 = vrot.slane %v851, 3
        %v921 = vrot.slane %v850, 3
        %v922 = vsel %vm877, %v920, %v921
        %v923 = vrot.slane %v741, 3
        %v924 = vrot.slane %v742, 3
        %v925 = vsel %vm877, %v923, %v924
        %v926 = vrot.slane %v813, 3
        %v927 = vrot.slane %v812, 3
        %v928 = vsel %vm877, %v926, %v927
        %v929 = vrot.slane %v854, 3
        %v930 = vrot.slane %v853, 3
        %v931 = vsel %vm877, %v929, %v930
        %v932 = vrot.slane %v743, 3
        %v933 = vrot.slane %v744, 3
        %v934 = vsel %vm877, %v932, %v933
        %v935 = vrot.slane %v816, 3
        %v936 = vrot.slane %v815, 3
        %v937 = vsel %vm877, %v935, %v936
        %v938 = vrot.slane %v857, 3
        %v939 = vrot.slane %v856, 3
        %v940 = vsel %vm877, %v938, %v939
        %v941 = vrot.slane %v745, 3
        %v942 = vrot.slane %v746, 3
        %v943 = vsel %vm877, %v941, %v942
        %v944 = vrot.slane %v819, 3
        %v945 = vrot.slane %v818, 3
        %v946 = vsel %vm877, %v944, %v945
        %v947 = vrot.slane %v860, 3
        %v948 = vrot.slane %v859, 3
        %v949 = vsel %vm877, %v947, %v948
        %v974 = vld [vmem:[#allocation8] sm:$0xf]
        %v975 = vld [vmem:[#allocation8 + $0x4] sm:$0xf]
        %v976 = vld [vmem:[#allocation8 + $0x8] sm:$0xf]
        %v977 = vld [vmem:[#allocation8 + $0xc] sm:$0xf]
        %v978 = vld [vmem:[#allocation8 + $0x10] sm:$0xf]
        %v979 = vld [vmem:[#allocation8 + $0x14] sm:$0xf]
        %v980 = vld [vmem:[#allocation8 + $0x18] sm:$0xf]
        %v981 = vld [vmem:[#allocation8 + $0x1c] sm:$0xf]
        %v982 = vld [vmem:[#allocation8 + $0x20] sm:$0xf]
        %v983 = vld [vmem:[#allocation8 + $0x24] sm:$0xf]
        %v984 = vld [vmem:[#allocation8 + $0x28] sm:$0xf]
        %v985 = vld [vmem:[#allocation8 + $0x2c] sm:$0xf]
        %v986 = vld [vmem:[#allocation8 + $0x30] sm:$0xf]
        %v987 = vld [vmem:[#allocation8 + $0x34] sm:$0xf]
        %v988 = vld [vmem:[#allocation8 + $0x38] sm:$0xf]
        %v989 = vld [vmem:[#allocation8 + $0x3c] sm:$0xf]
        %v990 = vld [vmem:[#allocation8 + $0x40] sm:$0xf]
        %v991 = vld [vmem:[#allocation8 + $0x44] sm:$0xf]
        %v992 = vld [vmem:[#allocation8 + $0x48] sm:$0xf]
        %v993 = vld [vmem:[#allocation8 + $0x4c] sm:$0xf]
        %v994 = vld [vmem:[#allocation8 + $0x50] sm:$0xf]
        %v995 = vld [vmem:[#allocation8 + $0x54] sm:$0xf]
        %v996 = vld [vmem:[#allocation8 + $0x58] sm:$0xf]
        %v997 = vld [vmem:[#allocation8 + $0x5c] sm:$0xf]
        %v998 = vld [vmem:[#allocation8 + $0x60] sm:$0xf]
        %v999 = vld [vmem:[#allocation8 + $0x64] sm:$0xf]
        %v1000 = vld [vmem:[#allocation8 + $0x68] sm:$0xf]
        %v1001 = vld [vmem:[#allocation8 + $0x6c] sm:$0xf]
        %v1002 = vld [vmem:[#allocation8 + $0x70] sm:$0xf]
        %v1003 = vld [vmem:[#allocation8 + $0x74] sm:$0xf]
        %v1004 = vld [vmem:[#allocation8 + $0x78] sm:$0xf]
        %v1005 = vld [vmem:[#allocation8 + $0x7c] sm:$0xf]
        %v1006 = vld [vmem:[#allocation8 + $0x80] sm:$0xf]
        %v1007 = vld [vmem:[#allocation8 + $0x84] sm:$0xf]
        %v1008 = vld [vmem:[#allocation8 + $0x88] sm:$0xf]
        %v1009 = vld [vmem:[#allocation8 + $0x8c] sm:$0xf]
        %v1010 = vld [vmem:[#allocation8 + $0x90] sm:$0xf]
        %v1011 = vld [vmem:[#allocation8 + $0x94] sm:$0xf]
        %v1012 = vld [vmem:[#allocation8 + $0x98] sm:$0xf]
        %v1013 = vld [vmem:[#allocation8 + $0x9c] sm:$0xf]
        %v1014 = vld [vmem:[#allocation8 + $0xa0] sm:$0xf]
        %v1015 = vld [vmem:[#allocation8 + $0xa4] sm:$0xf]
        %v1016 = vld [vmem:[#allocation8 + $0xa8] sm:$0xf]
        %v1017 = vld [vmem:[#allocation8 + $0xac] sm:$0xf]
        %v1018 = vld [vmem:[#allocation8 + $0xb0] sm:$0xf]
        %v1019 = vld [vmem:[#allocation8 + $0xb4] sm:$0xf]
        %v1020 = vld [vmem:[#allocation8 + $0xb8] sm:$0xf]
        %v1021 = vld [vmem:[#allocation8 + $0xbc] sm:$0xf]
        %s1022 = scalar_lea.vmem [#allocation3], 32
        %v1023 = vld [vmem:[%s1022] sm:$0xf8]
        %v1024 = vld [vmem:[%s1022 + $0x8] sm:$0x7]
        %v1025 = vld [vmem:[%s1022 + $0x10] sm:$0xf8]
        %v1026 = vld [vmem:[%s1022 + $0x18] sm:$0x7]
        %v1027 = vld [vmem:[%s1022 + $0x20] sm:$0xf8]
        %v1028 = vld [vmem:[%s1022 + $0x28] sm:$0x7]
        %v1029 = vld [vmem:[%s1022 + $0x30] sm:$0xf8]
        %v1030 = vld [vmem:[%s1022 + $0x38] sm:$0x7]
        %v1031 = vld [vmem:[%s1022 + $0x40] sm:$0xf8]
        %v1032 = vld [vmem:[%s1022 + $0x48] sm:$0x7]
        %v1033 = vld [vmem:[%s1022 + $0x50] sm:$0xf8]
        %v1034 = vld [vmem:[%s1022 + $0x58] sm:$0x7]
        %v1035 = vld [vmem:[%s1022 + $0x60] sm:$0xf8]
        %v1036 = vld [vmem:[%s1022 + $0x68] sm:$0x7]
        %v1037 = vld [vmem:[%s1022 + $0x70] sm:$0xf8]
        %v1038 = vld [vmem:[%s1022 + $0x78] sm:$0x7]
        %v1039 = vld [vmem:[%s1022] sm:$0xf0]
        %v1040 = vld [vmem:[%s1022 + $0x8] sm:$0xf]
        %v1041 = vld [vmem:[%s1022 + $0x10] sm:$0xf0]
        %v1042 = vld [vmem:[%s1022 + $0x18] sm:$0xf]
        %v1043 = vld [vmem:[%s1022 + $0x20] sm:$0xf0]
        %v1044 = vld [vmem:[%s1022 + $0x28] sm:$0xf]
        %v1045 = vld [vmem:[%s1022 + $0x30] sm:$0xf0]
        %v1046 = vld [vmem:[%s1022 + $0x38] sm:$0xf]
        %v1047 = vld [vmem:[%s1022 + $0x40] sm:$0xf0]
        %v1048 = vld [vmem:[%s1022 + $0x48] sm:$0xf]
        %v1049 = vld [vmem:[%s1022 + $0x50] sm:$0xf0]
        %v1050 = vld [vmem:[%s1022 + $0x58] sm:$0xf]
        %v1051 = vld [vmem:[%s1022 + $0x60] sm:$0xf0]
        %v1052 = vld [vmem:[%s1022 + $0x68] sm:$0xf]
        %v1053 = vld [vmem:[%s1022 + $0x70] sm:$0xf0]
        %v1054 = vld [vmem:[%s1022 + $0x78] sm:$0xf]
        %v1055 = vld [vmem:[%s1022] sm:$0xe0]
        %v1056 = vld [vmem:[%s1022 + $0x8] sm:$0x1f]
        %v1057 = vld [vmem:[%s1022 + $0x10] sm:$0xe0]
        %v1058 = vld [vmem:[%s1022 + $0x18] sm:$0x1f]
        %v1059 = vld [vmem:[%s1022 + $0x20] sm:$0xe0]
        %v1060 = vld [vmem:[%s1022 + $0x28] sm:$0x1f]
        %v1061 = vld [vmem:[%s1022 + $0x30] sm:$0xe0]
        %v1062 = vld [vmem:[%s1022 + $0x38] sm:$0x1f]
        %v1063 = vld [vmem:[%s1022 + $0x40] sm:$0xe0]
        %v1064 = vld [vmem:[%s1022 + $0x48] sm:$0x1f]
        %v1065 = vld [vmem:[%s1022 + $0x50] sm:$0xe0]
        %v1066 = vld [vmem:[%s1022 + $0x58] sm:$0x1f]
        %v1067 = vld [vmem:[%s1022 + $0x60] sm:$0xe0]
        %v1068 = vld [vmem:[%s1022 + $0x68] sm:$0x1f]
        %v1069 = vld [vmem:[%s1022 + $0x70] sm:$0xe0]
        %v1070 = vld [vmem:[%s1022 + $0x78] sm:$0x1f]
        %v1087 = vrot.slane %v1039, 1
        %v1088 = vrot.slane %v1040, 1
        %v1089 = vsel %vm795, %v1087, %v1088
        %v1090 = vrot.slane %v1041, 1
        %v1091 = vrot.slane %v1042, 1
        %v1092 = vsel %vm795, %v1090, %v1091
        %v1093 = vrot.slane %v1043, 1
        %v1094 = vrot.slane %v1044, 1
        %v1095 = vsel %vm795, %v1093, %v1094
        %v1096 = vrot.slane %v1045, 1
        %v1097 = vrot.slane %v1046, 1
        %v1098 = vsel %vm795, %v1096, %v1097
        %v1099 = vrot.slane %v1047, 1
        %v1100 = vrot.slane %v1048, 1
        %v1101 = vsel %vm795, %v1099, %v1100
        %v1102 = vrot.slane %v1049, 1
        %v1103 = vrot.slane %v1050, 1
        %v1104 = vsel %vm795, %v1102, %v1103
        %v1105 = vrot.slane %v1051, 1
        %v1106 = vrot.slane %v1052, 1
        %v1107 = vsel %vm795, %v1105, %v1106
        %v1108 = vrot.slane %v1053, 1
        %v1109 = vrot.slane %v1054, 1
        %v1110 = vsel %vm795, %v1108, %v1109
        %v1127 = vrot.slane %v1055, 2
        %v1128 = vrot.slane %v1056, 2
        %v1129 = vsel %vm836, %v1127, %v1128
        %v1130 = vrot.slane %v1057, 2
        %v1131 = vrot.slane %v1058, 2
        %v1132 = vsel %vm836, %v1130, %v1131
        %v1133 = vrot.slane %v1059, 2
        %v1134 = vrot.slane %v1060, 2
        %v1135 = vsel %vm836, %v1133, %v1134
        %v1136 = vrot.slane %v1061, 2
        %v1137 = vrot.slane %v1062, 2
        %v1138 = vsel %vm836, %v1136, %v1137
        %v1139 = vrot.slane %v1063, 2
        %v1140 = vrot.slane %v1064, 2
        %v1141 = vsel %vm836, %v1139, %v1140
        %v1142 = vrot.slane %v1065, 2
        %v1143 = vrot.slane %v1066, 2
        %v1144 = vsel %vm836, %v1142, %v1143
        %v1145 = vrot.slane %v1067, 2
        %v1146 = vrot.slane %v1068, 2
        %v1147 = vsel %vm836, %v1145, %v1146
        %v1148 = vrot.slane %v1069, 2
        %v1149 = vrot.slane %v1070, 2
        %v1150 = vsel %vm836, %v1148, %v1149
        %v1167 = vrot.slane %v1023, 3
        %v1168 = vrot.slane %v1024, 3
        %v1169 = vsel %vm877, %v1167, %v1168
        %v1170 = vrot.slane %v1089, 3
        %v1171 = vrot.slane %v1088, 3
        %v1172 = vsel %vm877, %v1170, %v1171
        %v1173 = vrot.slane %v1129, 3
        %v1174 = vrot.slane %v1128, 3
        %v1175 = vsel %vm877, %v1173, %v1174
        %v1176 = vrot.slane %v1025, 3
        %v1177 = vrot.slane %v1026, 3
        %v1178 = vsel %vm877, %v1176, %v1177
        %v1179 = vrot.slane %v1092, 3
        %v1180 = vrot.slane %v1091, 3
        %v1181 = vsel %vm877, %v1179, %v1180
        %v1182 = vrot.slane %v1132, 3
        %v1183 = vrot.slane %v1131, 3
        %v1184 = vsel %vm877, %v1182, %v1183
        %v1185 = vrot.slane %v1027, 3
        %v1186 = vrot.slane %v1028, 3
        %v1187 = vsel %vm877, %v1185, %v1186
        %v1188 = vrot.slane %v1095, 3
        %v1189 = vrot.slane %v1094, 3
        %v1190 = vsel %vm877, %v1188, %v1189
        %v1191 = vrot.slane %v1135, 3
        %v1192 = vrot.slane %v1134, 3
        %v1193 = vsel %vm877, %v1191, %v1192
        %v1194 = vrot.slane %v1029, 3
        %v1195 = vrot.slane %v1030, 3
        %v1196 = vsel %vm877, %v1194, %v1195
        %v1197 = vrot.slane %v1098, 3
        %v1198 = vrot.slane %v1097, 3
        %v1199 = vsel %vm877, %v1197, %v1198
        %v1200 = vrot.slane %v1138, 3
        %v1201 = vrot.slane %v1137, 3
        %v1202 = vsel %vm877, %v1200, %v1201
        %v1203 = vrot.slane %v1031, 3
        %v1204 = vrot.slane %v1032, 3
        %v1205 = vsel %vm877, %v1203, %v1204
        %v1206 = vrot.slane %v1101, 3
        %v1207 = vrot.slane %v1100, 3
        %v1208 = vsel %vm877, %v1206, %v1207
        %v1209 = vrot.slane %v1141, 3
        %v1210 = vrot.slane %v1140, 3
        %v1211 = vsel %vm877, %v1209, %v1210
        %v1212 = vrot.slane %v1033, 3
        %v1213 = vrot.slane %v1034, 3
        %v1214 = vsel %vm877, %v1212, %v1213
        %v1215 = vrot.slane %v1104, 3
        %v1216 = vrot.slane %v1103, 3
        %v1217 = vsel %vm877, %v1215, %v1216
        %v1218 = vrot.slane %v1144, 3
        %v1219 = vrot.slane %v1143, 3
        %v1220 = vsel %vm877, %v1218, %v1219
        %v1221 = vrot.slane %v1035, 3
        %v1222 = vrot.slane %v1036, 3
        %v1223 = vsel %vm877, %v1221, %v1222
        %v1224 = vrot.slane %v1107, 3
        %v1225 = vrot.slane %v1106, 3
        %v1226 = vsel %vm877, %v1224, %v1225
        %v1227 = vrot.slane %v1147, 3
        %v1228 = vrot.slane %v1146, 3
        %v1229 = vsel %vm877, %v1227, %v1228
        %v1230 = vrot.slane %v1037, 3
        %v1231 = vrot.slane %v1038, 3
        %v1232 = vsel %vm877, %v1230, %v1231
        %v1233 = vrot.slane %v1110, 3
        %v1234 = vrot.slane %v1109, 3
        %v1235 = vsel %vm877, %v1233, %v1234
        %v1236 = vrot.slane %v1150, 3
        %v1237 = vrot.slane %v1149, 3
        %v1238 = vsel %vm877, %v1236, %v1237
        %s1263 = scalar_lea.vmem [#allocation8], 192
        %v1264 = vld [vmem:[%s1263] sm:$0xf]
        %v1265 = vld [vmem:[%s1263 + $0x4] sm:$0xf]
        %v1266 = vld [vmem:[%s1263 + $0x8] sm:$0xf]
        %v1267 = vld [vmem:[%s1263 + $0xc] sm:$0xf]
        %v1268 = vld [vmem:[%s1263 + $0x10] sm:$0xf]
        %v1269 = vld [vmem:[%s1263 + $0x14] sm:$0xf]
        %v1270 = vld [vmem:[%s1263 + $0x18] sm:$0xf]
        %v1271 = vld [vmem:[%s1263 + $0x1c] sm:$0xf]
        %v1272 = vld [vmem:[%s1263 + $0x20] sm:$0xf]
        %v1273 = vld [vmem:[%s1263 + $0x24] sm:$0xf]
        %v1274 = vld [vmem:[%s1263 + $0x28] sm:$0xf]
        %v1275 = vld [vmem:[%s1263 + $0x2c] sm:$0xf]
        %v1276 = vld [vmem:[%s1263 + $0x30] sm:$0xf]
        %v1277 = vld [vmem:[%s1263 + $0x34] sm:$0xf]
        %v1278 = vld [vmem:[%s1263 + $0x38] sm:$0xf]
        %v1279 = vld [vmem:[%s1263 + $0x3c] sm:$0xf]
        %v1280 = vld [vmem:[%s1263 + $0x40] sm:$0xf]
        %v1281 = vld [vmem:[%s1263 + $0x44] sm:$0xf]
        %v1282 = vld [vmem:[%s1263 + $0x48] sm:$0xf]
        %v1283 = vld [vmem:[%s1263 + $0x4c] sm:$0xf]
        %v1284 = vld [vmem:[%s1263 + $0x50] sm:$0xf]
        %v1285 = vld [vmem:[%s1263 + $0x54] sm:$0xf]
        %v1286 = vld [vmem:[%s1263 + $0x58] sm:$0xf]
        %v1287 = vld [vmem:[%s1263 + $0x5c] sm:$0xf]
        %v1288 = vld [vmem:[%s1263 + $0x60] sm:$0xf]
        %v1289 = vld [vmem:[%s1263 + $0x64] sm:$0xf]
        %v1290 = vld [vmem:[%s1263 + $0x68] sm:$0xf]
        %v1291 = vld [vmem:[%s1263 + $0x6c] sm:$0xf]
        %v1292 = vld [vmem:[%s1263 + $0x70] sm:$0xf]
        %v1293 = vld [vmem:[%s1263 + $0x74] sm:$0xf]
        %v1294 = vld [vmem:[%s1263 + $0x78] sm:$0xf]
        %v1295 = vld [vmem:[%s1263 + $0x7c] sm:$0xf]
        %v1296 = vld [vmem:[%s1263 + $0x80] sm:$0xf]
        %v1297 = vld [vmem:[%s1263 + $0x84] sm:$0xf]
        %v1298 = vld [vmem:[%s1263 + $0x88] sm:$0xf]
        %v1299 = vld [vmem:[%s1263 + $0x8c] sm:$0xf]
        %v1300 = vld [vmem:[%s1263 + $0x90] sm:$0xf]
        %v1301 = vld [vmem:[%s1263 + $0x94] sm:$0xf]
        %v1302 = vld [vmem:[%s1263 + $0x98] sm:$0xf]
        %v1303 = vld [vmem:[%s1263 + $0x9c] sm:$0xf]
        %v1304 = vld [vmem:[%s1263 + $0xa0] sm:$0xf]
        %v1305 = vld [vmem:[%s1263 + $0xa4] sm:$0xf]
        %v1306 = vld [vmem:[%s1263 + $0xa8] sm:$0xf]
        %v1307 = vld [vmem:[%s1263 + $0xac] sm:$0xf]
        %v1308 = vld [vmem:[%s1263 + $0xb0] sm:$0xf]
        %v1309 = vld [vmem:[%s1263 + $0xb4] sm:$0xf]
        %v1310 = vld [vmem:[%s1263 + $0xb8] sm:$0xf]
        %v1311 = vld [vmem:[%s1263 + $0xbc] sm:$0xf]
        %v1360 = vunpack.c.l.b16 %v1264
        %v1361 = vunpack.c.l.b16 %v1265
        %v1362 = vunpack.c.l.b16 %v1266
        %v1363 = vunpack.c.l.b16 %v1267
        %v1364 = vunpack.c.l.b16 %v1268
        %v1365 = vunpack.c.l.b16 %v1269
        %v1366 = vunpack.c.l.b16 %v1270
        %v1367 = vunpack.c.l.b16 %v1271
        %v1368 = vunpack.c.l.b16 %v1272
        %v1369 = vunpack.c.l.b16 %v1273
        %v1370 = vunpack.c.l.b16 %v1274
        %v1371 = vunpack.c.l.b16 %v1275
        %v1372 = vunpack.c.l.b16 %v1276
        %v1373 = vunpack.c.l.b16 %v1277
        %v1374 = vunpack.c.l.b16 %v1278
        %v1375 = vunpack.c.l.b16 %v1279
        %v1376 = vunpack.c.l.b16 %v1280
        %v1377 = vunpack.c.l.b16 %v1281
        %v1378 = vunpack.c.l.b16 %v1282
        %v1379 = vunpack.c.l.b16 %v1283
        %v1380 = vunpack.c.l.b16 %v1284
        %v1381 = vunpack.c.l.b16 %v1285
        %v1382 = vunpack.c.l.b16 %v1286
        %v1383 = vunpack.c.l.b16 %v1287
        %v1384 = vunpack.c.l.b16 %v1288
        %v1385 = vunpack.c.l.b16 %v1289
        %v1386 = vunpack.c.l.b16 %v1290
        %v1387 = vunpack.c.l.b16 %v1291
        %v1388 = vunpack.c.l.b16 %v1292
        %v1389 = vunpack.c.l.b16 %v1293
        %v1390 = vunpack.c.l.b16 %v1294
        %v1391 = vunpack.c.l.b16 %v1295
        %v1392 = vunpack.c.l.b16 %v1296
        %v1393 = vunpack.c.l.b16 %v1297
        %v1394 = vunpack.c.l.b16 %v1298
        %v1395 = vunpack.c.l.b16 %v1299
        %v1396 = vunpack.c.l.b16 %v1300
        %v1397 = vunpack.c.l.b16 %v1301
        %v1398 = vunpack.c.l.b16 %v1302
        %v1399 = vunpack.c.l.b16 %v1303
        %v1400 = vunpack.c.l.b16 %v1304
        %v1401 = vunpack.c.l.b16 %v1305
        %v1402 = vunpack.c.l.b16 %v1306
        %v1403 = vunpack.c.l.b16 %v1307
        %v1404 = vunpack.c.l.b16 %v1308
        %v1405 = vunpack.c.l.b16 %v1309
        %v1406 = vunpack.c.l.b16 %v1310
        %v1407 = vunpack.c.l.b16 %v1311
        %v1408 = vpack.c.b16 %v1361, %v1360
        %v1409 = vpack.c.b16 %v1363, %v1362
        %v1410 = vpack.c.b16 %v1365, %v1364
        %v1411 = vpack.c.b16 %v1367, %v1366
        %v1412 = vpack.c.b16 %v1369, %v1368
        %v1413 = vpack.c.b16 %v1371, %v1370
        %v1414 = vpack.c.b16 %v1373, %v1372
        %v1415 = vpack.c.b16 %v1375, %v1374
        %v1416 = vpack.c.b16 %v1377, %v1376
        %v1417 = vpack.c.b16 %v1379, %v1378
        %v1418 = vpack.c.b16 %v1381, %v1380
        %v1419 = vpack.c.b16 %v1383, %v1382
        %v1420 = vpack.c.b16 %v1385, %v1384
        %v1421 = vpack.c.b16 %v1387, %v1386
        %v1422 = vpack.c.b16 %v1389, %v1388
        %v1423 = vpack.c.b16 %v1391, %v1390
        %v1424 = vpack.c.b16 %v1393, %v1392
        %v1425 = vpack.c.b16 %v1395, %v1394
        %v1426 = vpack.c.b16 %v1397, %v1396
        %v1427 = vpack.c.b16 %v1399, %v1398
        %v1428 = vpack.c.b16 %v1401, %v1400
        %v1429 = vpack.c.b16 %v1403, %v1402
        %v1430 = vpack.c.b16 %v1405, %v1404
        %v1431 = vpack.c.b16 %v1407, %v1406
        %1456 = vmatprep.subr.bf16.mxu0 0
        %1457 = vmatpush1.bf16.msra.mxu0 %v1408
        %1458 = vmatprep.subr.bf16.mxu0 0
        %1459 = vmatpush1.bf16.msra.mxu0 %v1409
        %1460 = vmatprep.subr.bf16.mxu0 0
        %1461 = vmatpush1.bf16.msra.mxu0 %v1410
        %1462 = vmatprep.subr.bf16.mxu0 0
        %1463 = vmatpush1.bf16.msra.mxu0 %v1411
        %1464 = vmatprep.subr.bf16.mxu0 0
        %1465 = vmatpush1.bf16.msra.mxu0 %v1412
        %1466 = vmatprep.subr.bf16.mxu0 0
        %1467 = vmatpush1.bf16.msra.mxu0 %v1413
        %1468 = vmatprep.subr.bf16.mxu0 0
        %1469 = vmatpush1.bf16.msra.mxu0 %v1414
        %1470 = vmatprep.subr.bf16.mxu0 0
        %1471 = vmatpush1.bf16.msra.mxu0 %v1415
        %1472 = vmatprep.subr.bf16.mxu0 0
        %1473 = vmatpush1.bf16.msra.mxu0 %v1416
        %1474 = vmatprep.subr.bf16.mxu0 0
        %1475 = vmatpush1.bf16.msra.mxu0 %v1417
        %1476 = vmatprep.subr.bf16.mxu0 0
        %1477 = vmatpush1.bf16.msra.mxu0 %v1418
        %1478 = vmatprep.subr.bf16.mxu0 0
        %1479 = vmatpush1.bf16.msra.mxu0 %v1419
        %1480 = vmatprep.subr.bf16.mxu0 0
        %1481 = vmatpush1.bf16.msra.mxu0 %v1420
        %1482 = vmatprep.subr.bf16.mxu0 0
        %1483 = vmatpush1.bf16.msra.mxu0 %v1421
        %1484 = vmatprep.subr.bf16.mxu0 0
        %1485 = vmatpush1.bf16.msra.mxu0 %v1422
        %1486 = vmatprep.subr.bf16.mxu0 0
        %1487 = vmatpush1.bf16.msra.mxu0 %v1423
        %1488 = vmatprep.mubr.bf16.mxu0 %v1172
        %1489 = vmatmul.mubr.bf16.gmra.mrb[0].mxu0 %v1169
        %v1490 = vpop.f32.mrb[0].mxu0
        %v1491 = vadd.f32 0.0, %v1490
        %v1492 = vpop.f32.mrb[0].mxu0
        %v1493 = vpop.f32.mrb[0].mxu0
        %v1494 = vadd.f32 0.0, %v1493
        %v1495 = vpop.f32.mrb[0].mxu0
        %1496 = vmatprep.mubr.bf16.mxu0 %v1181
        %1497 = vmatmul.mubr.bf16.gmra.mrb[0].mxu0 %v1178
        %v1498 = vpop.f32.mrb[0].mxu0
        %v1499 = vadd.f32 0.0, %v1498
        %v1500 = vpop.f32.mrb[0].mxu0
        %v1501 = vpop.f32.mrb[0].mxu0
        %v1502 = vadd.f32 0.0, %v1501
        %v1503 = vpop.f32.mrb[0].mxu0
        %1504 = vmatprep.mubr.bf16.mxu0 %v1190
        %1505 = vmatmul.mubr.bf16.gmra.mrb[0].mxu0 %v1187
        %v1506 = vpop.f32.mrb[0].mxu0
        %v1507 = vadd.f32 0.0, %v1506
        %v1508 = vpop.f32.mrb[0].mxu0
        %v1509 = vpop.f32.mrb[0].mxu0
        %v1510 = vadd.f32 0.0, %v1509
        %v1511 = vpop.f32.mrb[0].mxu0
        %1512 = vmatprep.mubr.bf16.mxu0 %v1199
        %1513 = vmatmul.mubr.bf16.gmra.mrb[0].mxu0 %v1196
        %v1514 = vpop.f32.mrb[0].mxu0
        %v1515 = vadd.f32 0.0, %v1514
        %v1516 = vpop.f32.mrb[0].mxu0
        %v1517 = vpop.f32.mrb[0].mxu0
        %v1518 = vadd.f32 0.0, %v1517
        %v1519 = vpop.f32.mrb[0].mxu0
        %1520 = vmatprep.mubr.bf16.mxu0 %v1208
        %1521 = vmatmul.mubr.bf16.gmra.mrb[0].mxu0 %v1205
        %v1522 = vpop.f32.mrb[0].mxu0
        %v1523 = vadd.f32 0.0, %v1522
        %v1524 = vpop.f32.mrb[0].mxu0
        %v1525 = vpop.f32.mrb[0].mxu0
        %v1526 = vadd.f32 0.0, %v1525
        %v1527 = vpop.f32.mrb[0].mxu0
        %1528 = vmatprep.mubr.bf16.mxu0 %v1217
        %1529 = vmatmul.mubr.bf16.gmra.mrb[0].mxu0 %v1214
        %v1530 = vpop.f32.mrb[0].mxu0
        %v1531 = vadd.f32 0.0, %v1530
        %v1532 = vpop.f32.mrb[0].mxu0
        %v1533 = vpop.f32.mrb[0].mxu0
        %v1534 = vadd.f32 0.0, %v1533
        %v1535 = vpop.f32.mrb[0].mxu0
        %1536 = vmatprep.mubr.bf16.mxu0 %v1226
        %1537 = vmatmul.mubr.bf16.gmra.mrb[0].mxu0 %v1223
        %v1538 = vpop.f32.mrb[0].mxu0
        %v1539 = vadd.f32 0.0, %v1538
        %v1540 = vpop.f32.mrb[0].mxu0
        %v1541 = vpop.f32.mrb[0].mxu0
        %v1542 = vadd.f32 0.0, %v1541
        %v1543 = vpop.f32.mrb[0].mxu0
        %1544 = vmatprep.mubr.bf16.mxu0 %v1235
        %1545 = vmatmul.mubr.bf16.gmra.mrb[0].mxu0 %v1232
        %v1546 = vpop.f32.mrb[0].mxu0
        %v1547 = vadd.f32 0.0, %v1546
        %v1548 = vpop.f32.mrb[0].mxu0
        %v1549 = vpop.f32.mrb[0].mxu0
        %v1550 = vadd.f32 0.0, %v1549
        %v1551 = vpop.f32.mrb[0].mxu0
        %1552 = vdwg.mxu0
        %1553 = vmatprep.subr.bf16.mxu0 0
        %1554 = vmatpush1.bf16.msra.mxu0 %v1424
        %1555 = vmatprep.subr.bf16.mxu0 0
        %1556 = vmatpush1.bf16.msra.mxu0 %v1425
        %1557 = vmatprep.subr.bf16.mxu0 0
        %1558 = vmatpush1.bf16.msra.mxu0 %v1426
        %1559 = vmatprep.subr.bf16.mxu0 0
        %1560 = vmatpush1.bf16.msra.mxu0 %v1427
        %1561 = vmatprep.subr.bf16.mxu0 0
        %1562 = vmatpush1.bf16.msra.mxu0 %v1428
        %1563 = vmatprep.subr.bf16.mxu0 0
        %1564 = vmatpush1.bf16.msra.mxu0 %v1429
        %1565 = vmatprep.subr.bf16.mxu0 0
        %1566 = vmatpush1.bf16.msra.mxu0 %v1430
        %1567 = vmatprep.subr.bf16.mxu0 0
        %1568 = vmatpush1.bf16.msra.mxu0 %v1431
        %1569 = vmatprep.subr.bf16.mxu0 0
        %1570 = vmatpush1.bf16.msra.mxu0 0
        %1571 = vmatprep.subr.bf16.mxu0 0
        %1572 = vmatpush1.bf16.msra.mxu0 0
        %1573 = vmatprep.subr.bf16.mxu0 0
        %1574 = vmatpush1.bf16.msra.mxu0 0
        %1575 = vmatprep.subr.bf16.mxu0 0
        %1576 = vmatpush1.bf16.msra.mxu0 0
        %1577 = vmatprep.subr.bf16.mxu0 0
        %1578 = vmatpush1.bf16.msra.mxu0 0
        %1579 = vmatprep.subr.bf16.mxu0 0
        %1580 = vmatpush1.bf16.msra.mxu0 0
        %1581 = vmatprep.subr.bf16.mxu0 0
        %1582 = vmatpush1.bf16.msra.mxu0 0
        %1583 = vmatprep.subr.bf16.mxu0 0
        %1584 = vmatpush1.bf16.msra.mxu0 0
        %1585 = vmatprep.mubr.bf16.mxu0 0
        %1586 = vmatmul.mubr.bf16.gmra.mrb[0].mxu0 %v1175
        %v1587 = vpop.f32.mrb[0].mxu0
        %v1588 = vadd.f32 %v1491, %v1587
        %v1589 = vpop.f32.mrb[0].mxu0
        %v1590 = vpop.f32.mrb[0].mxu0
        %v1591 = vadd.f32 %v1494, %v1590
        %v1592 = vpop.f32.mrb[0].mxu0
        %1593 = vmatprep.mubr.bf16.mxu0 0
        %1594 = vmatmul.mubr.bf16.gmra.mrb[0].mxu0 %v1184
        %v1595 = vpop.f32.mrb[0].mxu0
        %v1596 = vadd.f32 %v1499, %v1595
        %v1597 = vpop.f32.mrb[0].mxu0
        %v1598 = vpop.f32.mrb[0].mxu0
        %v1599 = vadd.f32 %v1502, %v1598
        %v1600 = vpop.f32.mrb[0].mxu0
        %1601 = vmatprep.mubr.bf16.mxu0 0
        %1602 = vmatmul.mubr.bf16.gmra.mrb[0].mxu0 %v1193
        %v1603 = vpop.f32.mrb[0].mxu0
        %v1604 = vadd.f32 %v1507, %v1603
        %v1605 = vpop.f32.mrb[0].mxu0
        %v1606 = vpop.f32.mrb[0].mxu0
        %v1607 = vadd.f32 %v1510, %v1606
        %v1608 = vpop.f32.mrb[0].mxu0
        %1609 = vmatprep.mubr.bf16.mxu0 0
        %1610 = vmatmul.mubr.bf16.gmra.mrb[0].mxu0 %v1202
        %v1611 = vpop.f32.mrb[0].mxu0
        %v1612 = vadd.f32 %v1515, %v1611
        %v1613 = vpop.f32.mrb[0].mxu0
        %v1614 = vpop.f32.mrb[0].mxu0
        %v1615 = vadd.f32 %v1518, %v1614
        %v1616 = vpop.f32.mrb[0].mxu0
        %1617 = vmatprep.mubr.bf16.mxu0 0
        %1618 = vmatmul.mubr.bf16.gmra.mrb[0].mxu0 %v1211
        %v1619 = vpop.f32.mrb[0].mxu0
        %v1620 = vadd.f32 %v1523, %v1619
        %v1621 = vpop.f32.mrb[0].mxu0
        %v1622 = vpop.f32.mrb[0].mxu0
        %v1623 = vadd.f32 %v1526, %v1622
        %v1624 = vpop.f32.mrb[0].mxu0
        %1625 = vmatprep.mubr.bf16.mxu0 0
        %1626 = vmatmul.mubr.bf16.gmra.mrb[0].mxu0 %v1220
        %v1627 = vpop.f32.mrb[0].mxu0
        %v1628 = vadd.f32 %v1531, %v1627
        %v1629 = vpop.f32.mrb[0].mxu0
        %v1630 = vpop.f32.mrb[0].mxu0
        %v1631 = vadd.f32 %v1534, %v1630
        %v1632 = vpop.f32.mrb[0].mxu0
        %1633 = vmatprep.mubr.bf16.mxu0 0
        %1634 = vmatmul.mubr.bf16.gmra.mrb[0].mxu0 %v1229
        %v1635 = vpop.f32.mrb[0].mxu0
        %v1636 = vadd.f32 %v1539, %v1635
        %v1637 = vpop.f32.mrb[0].mxu0
        %v1638 = vpop.f32.mrb[0].mxu0
        %v1639 = vadd.f32 %v1542, %v1638
        %v1640 = vpop.f32.mrb[0].mxu0
        %1641 = vmatprep.mubr.bf16.mxu0 0
        %1642 = vmatmul.mubr.bf16.gmra.mrb[0].mxu0 %v1238
        %v1643 = vpop.f32.mrb[0].mxu0
        %v1644 = vadd.f32 %v1547, %v1643
        %v1645 = vpop.f32.mrb[0].mxu0
        %v1646 = vpop.f32.mrb[0].mxu0
        %v1647 = vadd.f32 %v1550, %v1646
        %v1648 = vpop.f32.mrb[0].mxu0
        %1649 = vdwg.mxu0
        %v1698 = vunpack.c.l.b16 %v974
        %v1699 = vunpack.c.l.b16 %v975
        %v1700 = vunpack.c.l.b16 %v976
        %v1701 = vunpack.c.l.b16 %v977
        %v1702 = vunpack.c.l.b16 %v978
        %v1703 = vunpack.c.l.b16 %v979
        %v1704 = vunpack.c.l.b16 %v980
        %v1705 = vunpack.c.l.b16 %v981
        %v1706 = vunpack.c.l.b16 %v982
        %v1707 = vunpack.c.l.b16 %v983
        %v1708 = vunpack.c.l.b16 %v984
        %v1709 = vunpack.c.l.b16 %v985
        %v1710 = vunpack.c.l.b16 %v986
        %v1711 = vunpack.c.l.b16 %v987
        %v1712 = vunpack.c.l.b16 %v988
        %v1713 = vunpack.c.l.b16 %v989
        %v1714 = vunpack.c.l.b16 %v990
        %v1715 = vunpack.c.l.b16 %v991
        %v1716 = vunpack.c.l.b16 %v992
        %v1717 = vunpack.c.l.b16 %v993
        %v1718 = vunpack.c.l.b16 %v994
        %v1719 = vunpack.c.l.b16 %v995
        %v1720 = vunpack.c.l.b16 %v996
        %v1721 = vunpack.c.l.b16 %v997
        %v1722 = vunpack.c.l.b16 %v998
        %v1723 = vunpack.c.l.b16 %v999
        %v1724 = vunpack.c.l.b16 %v1000
        %v1725 = vunpack.c.l.b16 %v1001
        %v1726 = vunpack.c.l.b16 %v1002
        %v1727 = vunpack.c.l.b16 %v1003
        %v1728 = vunpack.c.l.b16 %v1004
        %v1729 = vunpack.c.l.b16 %v1005
        %v1730 = vunpack.c.l.b16 %v1006
        %v1731 = vunpack.c.l.b16 %v1007
        %v1732 = vunpack.c.l.b16 %v1008
        %v1733 = vunpack.c.l.b16 %v1009
        %v1734 = vunpack.c.l.b16 %v1010
        %v1735 = vunpack.c.l.b16 %v1011
        %v1736 = vunpack.c.l.b16 %v1012
        %v1737 = vunpack.c.l.b16 %v1013
        %v1738 = vunpack.c.l.b16 %v1014
        %v1739 = vunpack.c.l.b16 %v1015
        %v1740 = vunpack.c.l.b16 %v1016
        %v1741 = vunpack.c.l.b16 %v1017
        %v1742 = vunpack.c.l.b16 %v1018
        %v1743 = vunpack.c.l.b16 %v1019
        %v1744 = vunpack.c.l.b16 %v1020
        %v1745 = vunpack.c.l.b16 %v1021
        %v1746 = vpack.c.b16 %v1699, %v1698
        %v1747 = vpack.c.b16 %v1701, %v1700
        %v1748 = vpack.c.b16 %v1703, %v1702
        %v1749 = vpack.c.b16 %v1705, %v1704
        %v1750 = vpack.c.b16 %v1707, %v1706
        %v1751 = vpack.c.b16 %v1709, %v1708
        %v1752 = vpack.c.b16 %v1711, %v1710
        %v1753 = vpack.c.b16 %v1713, %v1712
        %v1754 = vpack.c.b16 %v1715, %v1714
        %v1755 = vpack.c.b16 %v1717, %v1716
        %v1756 = vpack.c.b16 %v1719, %v1718
        %v1757 = vpack.c.b16 %v1721, %v1720
        %v1758 = vpack.c.b16 %v1723, %v1722
        %v1759 = vpack.c.b16 %v1725, %v1724
        %v1760 = vpack.c.b16 %v1727, %v1726
        %v1761 = vpack.c.b16 %v1729, %v1728
        %v1762 = vpack.c.b16 %v1731, %v1730
        %v1763 = vpack.c.b16 %v1733, %v1732
        %v1764 = vpack.c.b16 %v1735, %v1734
        %v1765 = vpack.c.b16 %v1737, %v1736
        %v1766 = vpack.c.b16 %v1739, %v1738
        %v1767 = vpack.c.b16 %v1741, %v1740
        %v1768 = vpack.c.b16 %v1743, %v1742
        %v1769 = vpack.c.b16 %v1745, %v1744
        %1794 = vmatprep.subr.bf16.mxu0 0
        %1795 = vmatpush1.bf16.msra.mxu0 %v1746
        %1796 = vmatprep.subr.bf16.mxu0 0
        %1797 = vmatpush1.bf16.msra.mxu0 %v1747
        %1798 = vmatprep.subr.bf16.mxu0 0
        %1799 = vmatpush1.bf16.msra.mxu0 %v1748
        %1800 = vmatprep.subr.bf16.mxu0 0
        %1801 = vmatpush1.bf16.msra.mxu0 %v1749
        %1802 = vmatprep.subr.bf16.mxu0 0
        %1803 = vmatpush1.bf16.msra.mxu0 %v1750
        %1804 = vmatprep.subr.bf16.mxu0 0
        %1805 = vmatpush1.bf16.msra.mxu0 %v1751
        %1806 = vmatprep.subr.bf16.mxu0 0
        %1807 = vmatpush1.bf16.msra.mxu0 %v1752
        %1808 = vmatprep.subr.bf16.mxu0 0
        %1809 = vmatpush1.bf16.msra.mxu0 %v1753
        %1810 = vmatprep.subr.bf16.mxu0 0
        %1811 = vmatpush1.bf16.msra.mxu0 %v1754
        %1812 = vmatprep.subr.bf16.mxu0 0
        %1813 = vmatpush1.bf16.msra.mxu0 %v1755
        %1814 = vmatprep.subr.bf16.mxu0 0
        %1815 = vmatpush1.bf16.msra.mxu0 %v1756
        %1816 = vmatprep.subr.bf16.mxu0 0
        %1817 = vmatpush1.bf16.msra.mxu0 %v1757
        %1818 = vmatprep.subr.bf16.mxu0 0
        %1819 = vmatpush1.bf16.msra.mxu0 %v1758
        %1820 = vmatprep.subr.bf16.mxu0 0
        %1821 = vmatpush1.bf16.msra.mxu0 %v1759
        %1822 = vmatprep.subr.bf16.mxu0 0
        %1823 = vmatpush1.bf16.msra.mxu0 %v1760
        %1824 = vmatprep.subr.bf16.mxu0 0
        %1825 = vmatpush1.bf16.msra.mxu0 %v1761
        %1826 = vmatprep.mubr.bf16.mxu0 %v883
        %1827 = vmatmul.mubr.bf16.gmra.mrb[0].mxu0 %v880
        %v1828 = vpop.f32.mrb[0].mxu0
        %v1829 = vadd.f32 %v1588, %v1828
        %v1830 = vpop.f32.mrb[0].mxu0
        %v1831 = vpop.f32.mrb[0].mxu0
        %v1832 = vadd.f32 %v1591, %v1831
        %v1833 = vpop.f32.mrb[0].mxu0
        %1834 = vmatprep.mubr.bf16.mxu0 %v892
        %1835 = vmatmul.mubr.bf16.gmra.mrb[0].mxu0 %v889
        %v1836 = vpop.f32.mrb[0].mxu0
        %v1837 = vadd.f32 %v1596, %v1836
        %v1838 = vpop.f32.mrb[0].mxu0
        %v1839 = vpop.f32.mrb[0].mxu0
        %v1840 = vadd.f32 %v1599, %v1839
        %v1841 = vpop.f32.mrb[0].mxu0
        %1842 = vmatprep.mubr.bf16.mxu0 %v901
        %1843 = vmatmul.mubr.bf16.gmra.mrb[0].mxu0 %v898
        %v1844 = vpop.f32.mrb[0].mxu0
        %v1845 = vadd.f32 %v1604, %v1844
        %v1846 = vpop.f32.mrb[0].mxu0
        %v1847 = vpop.f32.mrb[0].mxu0
        %v1848 = vadd.f32 %v1607, %v1847
        %v1849 = vpop.f32.mrb[0].mxu0
        %1850 = vmatprep.mubr.bf16.mxu0 %v910
        %1851 = vmatmul.mubr.bf16.gmra.mrb[0].mxu0 %v907
        %v1852 = vpop.f32.mrb[0].mxu0
        %v1853 = vadd.f32 %v1612, %v1852
        %v1854 = vpop.f32.mrb[0].mxu0
        %v1855 = vpop.f32.mrb[0].mxu0
        %v1856 = vadd.f32 %v1615, %v1855
        %v1857 = vpop.f32.mrb[0].mxu0
        %1858 = vmatprep.mubr.bf16.mxu0 %v919
        %1859 = vmatmul.mubr.bf16.gmra.mrb[0].mxu0 %v916
        %v1860 = vpop.f32.mrb[0].mxu0
        %v1861 = vadd.f32 %v1620, %v1860
        %v1862 = vpop.f32.mrb[0].mxu0
        %v1863 = vpop.f32.mrb[0].mxu0
        %v1864 = vadd.f32 %v1623, %v1863
        %v1865 = vpop.f32.mrb[0].mxu0
        %1866 = vmatprep.mubr.bf16.mxu0 %v928
        %1867 = vmatmul.mubr.bf16.gmra.mrb[0].mxu0 %v925
        %v1868 = vpop.f32.mrb[0].mxu0
        %v1869 = vadd.f32 %v1628, %v1868
        %v1870 = vpop.f32.mrb[0].mxu0
        %v1871 = vpop.f32.mrb[0].mxu0
        %v1872 = vadd.f32 %v1631, %v1871
        %v1873 = vpop.f32.mrb[0].mxu0
        %1874 = vmatprep.mubr.bf16.mxu0 %v937
        %1875 = vmatmul.mubr.bf16.gmra.mrb[0].mxu0 %v934
        %v1876 = vpop.f32.mrb[0].mxu0
        %v1877 = vadd.f32 %v1636, %v1876
        %v1878 = vpop.f32.mrb[0].mxu0
        %v1879 = vpop.f32.mrb[0].mxu0
        %v1880 = vadd.f32 %v1639, %v1879
        %v1881 = vpop.f32.mrb[0].mxu0
        %1882 = vmatprep.mubr.bf16.mxu0 %v946
        %1883 = vmatmul.mubr.bf16.gmra.mrb[0].mxu0 %v943
        %v1884 = vpop.f32.mrb[0].mxu0
        %v1885 = vadd.f32 %v1644, %v1884
        %v1886 = vpop.f32.mrb[0].mxu0
        %v1887 = vpop.f32.mrb[0].mxu0
        %v1888 = vadd.f32 %v1647, %v1887
        %v1889 = vpop.f32.mrb[0].mxu0
        %1890 = vdwg.mxu0
        %1891 = vmatprep.subr.bf16.mxu0 0
        %1892 = vmatpush1.bf16.msra.mxu0 %v1762
        %1893 = vmatprep.subr.bf16.mxu0 0
        %1894 = vmatpush1.bf16.msra.mxu0 %v1763
        %1895 = vmatprep.subr.bf16.mxu0 0
        %1896 = vmatpush1.bf16.msra.mxu0 %v1764
        %1897 = vmatprep.subr.bf16.mxu0 0
        %1898 = vmatpush1.bf16.msra.mxu0 %v1765
        %1899 = vmatprep.subr.bf16.mxu0 0
        %1900 = vmatpush1.bf16.msra.mxu0 %v1766
        %1901 = vmatprep.subr.bf16.mxu0 0
        %1902 = vmatpush1.bf16.msra.mxu0 %v1767
        %1903 = vmatprep.subr.bf16.mxu0 0
        %1904 = vmatpush1.bf16.msra.mxu0 %v1768
        %1905 = vmatprep.subr.bf16.mxu0 0
        %1906 = vmatpush1.bf16.msra.mxu0 %v1769
        %1907 = vmatprep.subr.bf16.mxu0 0
        %1908 = vmatpush1.bf16.msra.mxu0 0
        %1909 = vmatprep.subr.bf16.mxu0 0
        %1910 = vmatpush1.bf16.msra.mxu0 0
        %1911 = vmatprep.subr.bf16.mxu0 0
        %1912 = vmatpush1.bf16.msra.mxu0 0
        %1913 = vmatprep.subr.bf16.mxu0 0
        %1914 = vmatpush1.bf16.msra.mxu0 0
        %1915 = vmatprep.subr.bf16.mxu0 0
        %1916 = vmatpush1.bf16.msra.mxu0 0
        %1917 = vmatprep.subr.bf16.mxu0 0
        %1918 = vmatpush1.bf16.msra.mxu0 0
        %1919 = vmatprep.subr.bf16.mxu0 0
        %1920 = vmatpush1.bf16.msra.mxu0 0
        %1921 = vmatprep.subr.bf16.mxu0 0
        %1922 = vmatpush1.bf16.msra.mxu0 0
        %1923 = vmatprep.mubr.bf16.mxu0 0
        %1924 = vmatmul.mubr.bf16.gmra.mrb[0].mxu0 %v886
        %v1925 = vpop.f32.mrb[0].mxu0
        %v1926 = vadd.f32 %v1829, %v1925
        %v1927 = vpop.f32.mrb[0].mxu0
        %v1928 = vpop.f32.mrb[0].mxu0
        %v1929 = vadd.f32 %v1832, %v1928
        %v1930 = vpop.f32.mrb[0].mxu0
        %1931 = vmatprep.mubr.bf16.mxu0 0
        %1932 = vmatmul.mubr.bf16.gmra.mrb[0].mxu0 %v895
        %v1933 = vpop.f32.mrb[0].mxu0
        %v1934 = vadd.f32 %v1837, %v1933
        %v1935 = vpop.f32.mrb[0].mxu0
        %v1936 = vpop.f32.mrb[0].mxu0
        %v1937 = vadd.f32 %v1840, %v1936
        %v1938 = vpop.f32.mrb[0].mxu0
        %1939 = vmatprep.mubr.bf16.mxu0 0
        %1940 = vmatmul.mubr.bf16.gmra.mrb[0].mxu0 %v904
        %v1941 = vpop.f32.mrb[0].mxu0
        %v1942 = vadd.f32 %v1845, %v1941
        %v1943 = vpop.f32.mrb[0].mxu0
        %v1944 = vpop.f32.mrb[0].mxu0
        %v1945 = vadd.f32 %v1848, %v1944
        %v1946 = vpop.f32.mrb[0].mxu0
        %1947 = vmatprep.mubr.bf16.mxu0 0
        %1948 = vmatmul.mubr.bf16.gmra.mrb[0].mxu0 %v913
        %v1949 = vpop.f32.mrb[0].mxu0
        %v1950 = vadd.f32 %v1853, %v1949
        %v1951 = vpop.f32.mrb[0].mxu0
        %v1952 = vpop.f32.mrb[0].mxu0
        %v1953 = vadd.f32 %v1856, %v1952
        %v1954 = vpop.f32.mrb[0].mxu0
        %1955 = vmatprep.mubr.bf16.mxu0 0
        %1956 = vmatmul.mubr.bf16.gmra.mrb[0].mxu0 %v922
        %v1957 = vpop.f32.mrb[0].mxu0
        %v1958 = vadd.f32 %v1861, %v1957
        %v1959 = vpop.f32.mrb[0].mxu0
        %v1960 = vpop.f32.mrb[0].mxu0
        %v1961 = vadd.f32 %v1864, %v1960
        %v1962 = vpop.f32.mrb[0].mxu0
        %1963 = vmatprep.mubr.bf16.mxu0 0
        %1964 = vmatmul.mubr.bf16.gmra.mrb[0].mxu0 %v931
        %v1965 = vpop.f32.mrb[0].mxu0
        %v1966 = vadd.f32 %v1869, %v1965
        %v1967 = vpop.f32.mrb[0].mxu0
        %v1968 = vpop.f32.mrb[0].mxu0
        %v1969 = vadd.f32 %v1872, %v1968
        %v1970 = vpop.f32.mrb[0].mxu0
        %1971 = vmatprep.mubr.bf16.mxu0 0
        %1972 = vmatmul.mubr.bf16.gmra.mrb[0].mxu0 %v940
        %v1973 = vpop.f32.mrb[0].mxu0
        %v1974 = vadd.f32 %v1877, %v1973
        %v1975 = vpop.f32.mrb[0].mxu0
        %v1976 = vpop.f32.mrb[0].mxu0
        %v1977 = vadd.f32 %v1880, %v1976
        %v1978 = vpop.f32.mrb[0].mxu0
        %1979 = vmatprep.mubr.bf16.mxu0 0
        %1980 = vmatmul.mubr.bf16.gmra.mrb[0].mxu0 %v949
        %v1981 = vpop.f32.mrb[0].mxu0
        %v1982 = vadd.f32 %v1885, %v1981
        %v1983 = vpop.f32.mrb[0].mxu0
        %v1984 = vpop.f32.mrb[0].mxu0
        %v1985 = vadd.f32 %v1888, %v1984
        %v1986 = vpop.f32.mrb[0].mxu0
        %1987 = vdwg.mxu0
        %s1988 = scalar_lea.vmem [#allocation3], 64
        %v1989 = vld [vmem:[%s1988] sm:$0xf8]
        %v1990 = vld [vmem:[%s1988 + $0x8] sm:$0x7]
        %v1991 = vld [vmem:[%s1988 + $0x10] sm:$0xf8]
        %v1992 = vld [vmem:[%s1988 + $0x18] sm:$0x7]
        %v1993 = vld [vmem:[%s1988 + $0x20] sm:$0xf8]
        %v1994 = vld [vmem:[%s1988 + $0x28] sm:$0x7]
        %v1995 = vld [vmem:[%s1988 + $0x30] sm:$0xf8]
        %v1996 = vld [vmem:[%s1988 + $0x38] sm:$0x7]
        %v1997 = vld [vmem:[%s1988 + $0x40] sm:$0xf8]
        %v1998 = vld [vmem:[%s1988 + $0x48] sm:$0x7]
        %v1999 = vld [vmem:[%s1988 + $0x50] sm:$0xf8]
        %v2000 = vld [vmem:[%s1988 + $0x58] sm:$0x7]
        %v2001 = vld [vmem:[%s1988 + $0x60] sm:$0xf8]
        %v2002 = vld [vmem:[%s1988 + $0x68] sm:$0x7]
        %v2003 = vld [vmem:[%s1988 + $0x70] sm:$0xf8]
        %v2004 = vld [vmem:[%s1988 + $0x78] sm:$0x7]
        %v2005 = vld [vmem:[%s1988] sm:$0xf0]
        %v2006 = vld [vmem:[%s1988 + $0x8] sm:$0xf]
        %v2007 = vld [vmem:[%s1988 + $0x10] sm:$0xf0]
        %v2008 = vld [vmem:[%s1988 + $0x18] sm:$0xf]
        %v2009 = vld [vmem:[%s1988 + $0x20] sm:$0xf0]
        %v2010 = vld [vmem:[%s1988 + $0x28] sm:$0xf]
        %v2011 = vld [vmem:[%s1988 + $0x30] sm:$0xf0]
        %v2012 = vld [vmem:[%s1988 + $0x38] sm:$0xf]
        %v2013 = vld [vmem:[%s1988 + $0x40] sm:$0xf0]
        %v2014 = vld [vmem:[%s1988 + $0x48] sm:$0xf]
        %v2015 = vld [vmem:[%s1988 + $0x50] sm:$0xf0]
        %v2016 = vld [vmem:[%s1988 + $0x58] sm:$0xf]
        %v2017 = vld [vmem:[%s1988 + $0x60] sm:$0xf0]
        %v2018 = vld [vmem:[%s1988 + $0x68] sm:$0xf]
        %v2019 = vld [vmem:[%s1988 + $0x70] sm:$0xf0]
        %v2020 = vld [vmem:[%s1988 + $0x78] sm:$0xf]
        %v2021 = vld [vmem:[%s1988] sm:$0xe0]
        %v2022 = vld [vmem:[%s1988 + $0x8] sm:$0x1f]
        %v2023 = vld [vmem:[%s1988 + $0x10] sm:$0xe0]
        %v2024 = vld [vmem:[%s1988 + $0x18] sm:$0x1f]
        %v2025 = vld [vmem:[%s1988 + $0x20] sm:$0xe0]
        %v2026 = vld [vmem:[%s1988 + $0x28] sm:$0x1f]
        %v2027 = vld [vmem:[%s1988 + $0x30] sm:$0xe0]
        %v2028 = vld [vmem:[%s1988 + $0x38] sm:$0x1f]
        %v2029 = vld [vmem:[%s1988 + $0x40] sm:$0xe0]
        %v2030 = vld [vmem:[%s1988 + $0x48] sm:$0x1f]
        %v2031 = vld [vmem:[%s1988 + $0x50] sm:$0xe0]
        %v2032 = vld [vmem:[%s1988 + $0x58] sm:$0x1f]
        %v2033 = vld [vmem:[%s1988 + $0x60] sm:$0xe0]
        %v2034 = vld [vmem:[%s1988 + $0x68] sm:$0x1f]
        %v2035 = vld [vmem:[%s1988 + $0x70] sm:$0xe0]
        %v2036 = vld [vmem:[%s1988 + $0x78] sm:$0x1f]
        %v2053 = vrot.slane %v2005, 1
        %v2054 = vrot.slane %v2006, 1
        %v2055 = vsel %vm795, %v2053, %v2054
        %v2056 = vrot.slane %v2007, 1
        %v2057 = vrot.slane %v2008, 1
        %v2058 = vsel %vm795, %v2056, %v2057
        %v2059 = vrot.slane %v2009, 1
        %v2060 = vrot.slane %v2010, 1
        %v2061 = vsel %vm795, %v2059, %v2060
        %v2062 = vrot.slane %v2011, 1
        %v2063 = vrot.slane %v2012, 1
        %v2064 = vsel %vm795, %v2062, %v2063
        %v2065 = vrot.slane %v2013, 1
        %v2066 = vrot.slane %v2014, 1
        %v2067 = vsel %vm795, %v2065, %v2066
        %v2068 = vrot.slane %v2015, 1
        %v2069 = vrot.slane %v2016, 1
        %v2070 = vsel %vm795, %v2068, %v2069
        %v2071 = vrot.slane %v2017, 1
        %v2072 = vrot.slane %v2018, 1
        %v2073 = vsel %vm795, %v2071, %v2072
        %v2074 = vrot.slane %v2019, 1
        %v2075 = vrot.slane %v2020, 1
        %v2076 = vsel %vm795, %v2074, %v2075
        %v2093 = vrot.slane %v2021, 2
        %v2094 = vrot.slane %v2022, 2
        %v2095 = vsel %vm836, %v2093, %v2094
        %v2096 = vrot.slane %v2023, 2
        %v2097 = vrot.slane %v2024, 2
        %v2098 = vsel %vm836, %v2096, %v2097
        %v2099 = vrot.slane %v2025, 2
        %v2100 = vrot.slane %v2026, 2
        %v2101 = vsel %vm836, %v2099, %v2100
        %v2102 = vrot.slane %v2027, 2
        %v2103 = vrot.slane %v2028, 2
        %v2104 = vsel %vm836, %v2102, %v2103
        %v2105 = vrot.slane %v2029, 2
        %v2106 = vrot.slane %v2030, 2
        %v2107 = vsel %vm836, %v2105, %v2106
        %v2108 = vrot.slane %v2031, 2
        %v2109 = vrot.slane %v2032, 2
        %v2110 = vsel %vm836, %v2108, %v2109
        %v2111 = vrot.slane %v2033, 2
        %v2112 = vrot.slane %v2034, 2
        %v2113 = vsel %vm836, %v2111, %v2112
        %v2114 = vrot.slane %v2035, 2
        %v2115 = vrot.slane %v2036, 2
        %v2116 = vsel %vm836, %v2114, %v2115
        %v2133 = vrot.slane %v1989, 3
        %v2134 = vrot.slane %v1990, 3
        %v2135 = vsel %vm877, %v2133, %v2134
        %v2136 = vrot.slane %v2055, 3
        %v2137 = vrot.slane %v2054, 3
        %v2138 = vsel %vm877, %v2136, %v2137
        %v2139 = vrot.slane %v2095, 3
        %v2140 = vrot.slane %v2094, 3
        %v2141 = vsel %vm877, %v2139, %v2140
        %v2142 = vrot.slane %v1991, 3
        %v2143 = vrot.slane %v1992, 3
        %v2144 = vsel %vm877, %v2142, %v2143
        %v2145 = vrot.slane %v2058, 3
        %v2146 = vrot.slane %v2057, 3
        %v2147 = vsel %vm877, %v2145, %v2146
        %v2148 = vrot.slane %v2098, 3
        %v2149 = vrot.slane %v2097, 3
        %v2150 = vsel %vm877, %v2148, %v2149
        %v2151 = vrot.slane %v1993, 3
        %v2152 = vrot.slane %v1994, 3
        %v2153 = vsel %vm877, %v2151, %v2152
        %v2154 = vrot.slane %v2061, 3
        %v2155 = vrot.slane %v2060, 3
        %v2156 = vsel %vm877, %v2154, %v2155
        %v2157 = vrot.slane %v2101, 3
        %v2158 = vrot.slane %v2100, 3
        %v2159 = vsel %vm877, %v2157, %v2158
        %v2160 = vrot.slane %v1995, 3
        %v2161 = vrot.slane %v1996, 3
        %v2162 = vsel %vm877, %v2160, %v2161
        %v2163 = vrot.slane %v2064, 3
        %v2164 = vrot.slane %v2063, 3
        %v2165 = vsel %vm877, %v2163, %v2164
        %v2166 = vrot.slane %v2104, 3
        %v2167 = vrot.slane %v2103, 3
        %v2168 = vsel %vm877, %v2166, %v2167
        %v2169 = vrot.slane %v1997, 3
        %v2170 = vrot.slane %v1998, 3
        %v2171 = vsel %vm877, %v2169, %v2170
        %v2172 = vrot.slane %v2067, 3
        %v2173 = vrot.slane %v2066, 3
        %v2174 = vsel %vm877, %v2172, %v2173
        %v2175 = vrot.slane %v2107, 3
        %v2176 = vrot.slane %v2106, 3
        %v2177 = vsel %vm877, %v2175, %v2176
        %v2178 = vrot.slane %v1999, 3
        %v2179 = vrot.slane %v2000, 3
        %v2180 = vsel %vm877, %v2178, %v2179
        %v2181 = vrot.slane %v2070, 3
        %v2182 = vrot.slane %v2069, 3
        %v2183 = vsel %vm877, %v2181, %v2182
        %v2184 = vrot.slane %v2110, 3
        %v2185 = vrot.slane %v2109, 3
        %v2186 = vsel %vm877, %v2184, %v2185
        %v2187 = vrot.slane %v2001, 3
        %v2188 = vrot.slane %v2002, 3
        %v2189 = vsel %vm877, %v2187, %v2188
        %v2190 = vrot.slane %v2073, 3
        %v2191 = vrot.slane %v2072, 3
        %v2192 = vsel %vm877, %v2190, %v2191
        %v2193 = vrot.slane %v2113, 3
        %v2194 = vrot.slane %v2112, 3
        %v2195 = vsel %vm877, %v2193, %v2194
        %v2196 = vrot.slane %v2003, 3
        %v2197 = vrot.slane %v2004, 3
        %v2198 = vsel %vm877, %v2196, %v2197
        %v2199 = vrot.slane %v2076, 3
        %v2200 = vrot.slane %v2075, 3
        %v2201 = vsel %vm877, %v2199, %v2200
        %v2202 = vrot.slane %v2116, 3
        %v2203 = vrot.slane %v2115, 3
        %v2204 = vsel %vm877, %v2202, %v2203
        %s2229 = scalar_lea.vmem [#allocation8], 384
        %v2230 = vld [vmem:[%s2229] sm:$0xf]
        %v2231 = vld [vmem:[%s2229 + $0x4] sm:$0xf]
        %v2232 = vld [vmem:[%s2229 + $0x8] sm:$0xf]
        %v2233 = vld [vmem:[%s2229 + $0xc] sm:$0xf]
        %v2234 = vld [vmem:[%s2229 + $0x10] sm:$0xf]
        %v2235 = vld [vmem:[%s2229 + $0x14] sm:$0xf]
        %v2236 = vld [vmem:[%s2229 + $0x18] sm:$0xf]
        %v2237 = vld [vmem:[%s2229 + $0x1c] sm:$0xf]
        %v2238 = vld [vmem:[%s2229 + $0x20] sm:$0xf]
        %v2239 = vld [vmem:[%s2229 + $0x24] sm:$0xf]
        %v2240 = vld [vmem:[%s2229 + $0x28] sm:$0xf]
        %v2241 = vld [vmem:[%s2229 + $0x2c] sm:$0xf]
        %v2242 = vld [vmem:[%s2229 + $0x30] sm:$0xf]
        %v2243 = vld [vmem:[%s2229 + $0x34] sm:$0xf]
        %v2244 = vld [vmem:[%s2229 + $0x38] sm:$0xf]
        %v2245 = vld [vmem:[%s2229 + $0x3c] sm:$0xf]
        %v2246 = vld [vmem:[%s2229 + $0x40] sm:$0xf]
        %v2247 = vld [vmem:[%s2229 + $0x44] sm:$0xf]
        %v2248 = vld [vmem:[%s2229 + $0x48] sm:$0xf]
        %v2249 = vld [vmem:[%s2229 + $0x4c] sm:$0xf]
        %v2250 = vld [vmem:[%s2229 + $0x50] sm:$0xf]
        %v2251 = vld [vmem:[%s2229 + $0x54] sm:$0xf]
        %v2252 = vld [vmem:[%s2229 + $0x58] sm:$0xf]
        %v2253 = vld [vmem:[%s2229 + $0x5c] sm:$0xf]
        %v2254 = vld [vmem:[%s2229 + $0x60] sm:$0xf]
        %v2255 = vld [vmem:[%s2229 + $0x64] sm:$0xf]
        %v2256 = vld [vmem:[%s2229 + $0x68] sm:$0xf]
        %v2257 = vld [vmem:[%s2229 + $0x6c] sm:$0xf]
        %v2258 = vld [vmem:[%s2229 + $0x70] sm:$0xf]
        %v2259 = vld [vmem:[%s2229 + $0x74] sm:$0xf]
        %v2260 = vld [vmem:[%s2229 + $0x78] sm:$0xf]
        %v2261 = vld [vmem:[%s2229 + $0x7c] sm:$0xf]
        %v2262 = vld [vmem:[%s2229 + $0x80] sm:$0xf]
        %v2263 = vld [vmem:[%s2229 + $0x84] sm:$0xf]
        %v2264 = vld [vmem:[%s2229 + $0x88] sm:$0xf]
        %v2265 = vld [vmem:[%s2229 + $0x8c] sm:$0xf]
        %v2266 = vld [vmem:[%s2229 + $0x90] sm:$0xf]
        %v2267 = vld [vmem:[%s2229 + $0x94] sm:$0xf]
        %v2268 = vld [vmem:[%s2229 + $0x98] sm:$0xf]
        %v2269 = vld [vmem:[%s2229 + $0x9c] sm:$0xf]
        %v2270 = vld [vmem:[%s2229 + $0xa0] sm:$0xf]
        %v2271 = vld [vmem:[%s2229 + $0xa4] sm:$0xf]
        %v2272 = vld [vmem:[%s2229 + $0xa8] sm:$0xf]
        %v2273 = vld [vmem:[%s2229 + $0xac] sm:$0xf]
        %v2274 = vld [vmem:[%s2229 + $0xb0] sm:$0xf]
        %v2275 = vld [vmem:[%s2229 + $0xb4] sm:$0xf]
        %v2276 = vld [vmem:[%s2229 + $0xb8] sm:$0xf]
        %v2277 = vld [vmem:[%s2229 + $0xbc] sm:$0xf]
        %v2326 = vunpack.c.l.b16 %v2230
        %v2327 = vunpack.c.l.b16 %v2231
        %v2328 = vunpack.c.l.b16 %v2232
        %v2329 = vunpack.c.l.b16 %v2233
        %v2330 = vunpack.c.l.b16 %v2234
        %v2331 = vunpack.c.l.b16 %v2235
        %v2332 = vunpack.c.l.b16 %v2236
        %v2333 = vunpack.c.l.b16 %v2237
        %v2334 = vunpack.c.l.b16 %v2238
        %v2335 = vunpack.c.l.b16 %v2239
        %v2336 = vunpack.c.l.b16 %v2240
        %v2337 = vunpack.c.l.b16 %v2241
        %v2338 = vunpack.c.l.b16 %v2242
        %v2339 = vunpack.c.l.b16 %v2243
        %v2340 = vunpack.c.l.b16 %v2244
        %v2341 = vunpack.c.l.b16 %v2245
        %v2342 = vunpack.c.l.b16 %v2246
        %v2343 = vunpack.c.l.b16 %v2247
        %v2344 = vunpack.c.l.b16 %v2248
        %v2345 = vunpack.c.l.b16 %v2249
        %v2346 = vunpack.c.l.b16 %v2250
        %v2347 = vunpack.c.l.b16 %v2251
        %v2348 = vunpack.c.l.b16 %v2252
        %v2349 = vunpack.c.l.b16 %v2253
        %v2350 = vunpack.c.l.b16 %v2254
        %v2351 = vunpack.c.l.b16 %v2255
        %v2352 = vunpack.c.l.b16 %v2256
        %v2353 = vunpack.c.l.b16 %v2257
        %v2354 = vunpack.c.l.b16 %v2258
        %v2355 = vunpack.c.l.b16 %v2259
        %v2356 = vunpack.c.l.b16 %v2260
        %v2357 = vunpack.c.l.b16 %v2261
        %v2358 = vunpack.c.l.b16 %v2262
        %v2359 = vunpack.c.l.b16 %v2263
        %v2360 = vunpack.c.l.b16 %v2264
        %v2361 = vunpack.c.l.b16 %v2265
        %v2362 = vunpack.c.l.b16 %v2266
        %v2363 = vunpack.c.l.b16 %v2267
        %v2364 = vunpack.c.l.b16 %v2268
        %v2365 = vunpack.c.l.b16 %v2269
        %v2366 = vunpack.c.l.b16 %v2270
        %v2367 = vunpack.c.l.b16 %v2271
        %v2368 = vunpack.c.l.b16 %v2272
        %v2369 = vunpack.c.l.b16 %v2273
        %v2370 = vunpack.c.l.b16 %v2274
        %v2371 = vunpack.c.l.b16 %v2275
        %v2372 = vunpack.c.l.b16 %v2276
        %v2373 = vunpack.c.l.b16 %v2277
        %v2374 = vpack.c.b16 %v2327, %v2326
        %v2375 = vpack.c.b16 %v2329, %v2328
        %v2376 = vpack.c.b16 %v2331, %v2330
        %v2377 = vpack.c.b16 %v2333, %v2332
        %v2378 = vpack.c.b16 %v2335, %v2334
        %v2379 = vpack.c.b16 %v2337, %v2336
        %v2380 = vpack.c.b16 %v2339, %v2338
        %v2381 = vpack.c.b16 %v2341, %v2340
        %v2382 = vpack.c.b16 %v2343, %v2342
        %v2383 = vpack.c.b16 %v2345, %v2344
        %v2384 = vpack.c.b16 %v2347, %v2346
        %v2385 = vpack.c.b16 %v2349, %v2348
        %v2386 = vpack.c.b16 %v2351, %v2350
        %v2387 = vpack.c.b16 %v2353, %v2352
        %v2388 = vpack.c.b16 %v2355, %v2354
        %v2389 = vpack.c.b16 %v2357, %v2356
        %v2390 = vpack.c.b16 %v2359, %v2358
        %v2391 = vpack.c.b16 %v2361, %v2360
        %v2392 = vpack.c.b16 %v2363, %v2362
        %v2393 = vpack.c.b16 %v2365, %v2364
        %v2394 = vpack.c.b16 %v2367, %v2366
        %v2395 = vpack.c.b16 %v2369, %v2368
        %v2396 = vpack.c.b16 %v2371, %v2370
        %v2397 = vpack.c.b16 %v2373, %v2372
        %2422 = vmatprep.subr.bf16.mxu0 0
        %2423 = vmatpush1.bf16.msra.mxu0 %v2374
        %2424 = vmatprep.subr.bf16.mxu0 0
        %2425 = vmatpush1.bf16.msra.mxu0 %v2375
        %2426 = vmatprep.subr.bf16.mxu0 0
        %2427 = vmatpush1.bf16.msra.mxu0 %v2376
        %2428 = vmatprep.subr.bf16.mxu0 0
        %2429 = vmatpush1.bf16.msra.mxu0 %v2377
        %2430 = vmatprep.subr.bf16.mxu0 0
        %2431 = vmatpush1.bf16.msra.mxu0 %v2378
        %2432 = vmatprep.subr.bf16.mxu0 0
        %2433 = vmatpush1.bf16.msra.mxu0 %v2379
        %2434 = vmatprep.subr.bf16.mxu0 0
        %2435 = vmatpush1.bf16.msra.mxu0 %v2380
        %2436 = vmatprep.subr.bf16.mxu0 0
        %2437 = vmatpush1.bf16.msra.mxu0 %v2381
        %2438 = vmatprep.subr.bf16.mxu0 0
        %2439 = vmatpush1.bf16.msra.mxu0 %v2382
        %2440 = vmatprep.subr.bf16.mxu0 0
        %2441 = vmatpush1.bf16.msra.mxu0 %v2383
        %2442 = vmatprep.subr.bf16.mxu0 0
        %2443 = vmatpush1.bf16.msra.mxu0 %v2384
        %2444 = vmatprep.subr.bf16.mxu0 0
        %2445 = vmatpush1.bf16.msra.mxu0 %v2385
        %2446 = vmatprep.subr.bf16.mxu0 0
        %2447 = vmatpush1.bf16.msra.mxu0 %v2386
        %2448 = vmatprep.subr.bf16.mxu0 0
        %2449 = vmatpush1.bf16.msra.mxu0 %v2387
        %2450 = vmatprep.subr.bf16.mxu0 0
        %2451 = vmatpush1.bf16.msra.mxu0 %v2388
        %2452 = vmatprep.subr.bf16.mxu0 0
        %2453 = vmatpush1.bf16.msra.mxu0 %v2389
        %2454 = vmatprep.mubr.bf16.mxu0 %v2138
        %2455 = vmatmul.mubr.bf16.gmra.mrb[0].mxu0 %v2135
        %v2456 = vpop.f32.mrb[0].mxu0
        %v2457 = vadd.f32 0.0, %v2456
        %v2458 = vpop.f32.mrb[0].mxu0
        %v2459 = vpop.f32.mrb[0].mxu0
        %v2460 = vadd.f32 0.0, %v2459
        %v2461 = vpop.f32.mrb[0].mxu0
        %2462 = vmatprep.mubr.bf16.mxu0 %v2147
        %2463 = vmatmul.mubr.bf16.gmra.mrb[0].mxu0 %v2144
        %v2464 = vpop.f32.mrb[0].mxu0
        %v2465 = vadd.f32 0.0, %v2464
        %v2466 = vpop.f32.mrb[0].mxu0
        %v2467 = vpop.f32.mrb[0].mxu0
        %v2468 = vadd.f32 0.0, %v2467
        %v2469 = vpop.f32.mrb[0].mxu0
        %2470 = vmatprep.mubr.bf16.mxu0 %v2156
        %2471 = vmatmul.mubr.bf16.gmra.mrb[0].mxu0 %v2153
        %v2472 = vpop.f32.mrb[0].mxu0
        %v2473 = vadd.f32 0.0, %v2472
        %v2474 = vpop.f32.mrb[0].mxu0
        %v2475 = vpop.f32.mrb[0].mxu0
        %v2476 = vadd.f32 0.0, %v2475
        %v2477 = vpop.f32.mrb[0].mxu0
        %2478 = vmatprep.mubr.bf16.mxu0 %v2165
        %2479 = vmatmul.mubr.bf16.gmra.mrb[0].mxu0 %v2162
        %v2480 = vpop.f32.mrb[0].mxu0
        %v2481 = vadd.f32 0.0, %v2480
        %v2482 = vpop.f32.mrb[0].mxu0
        %v2483 = vpop.f32.mrb[0].mxu0
        %v2484 = vadd.f32 0.0, %v2483
        %v2485 = vpop.f32.mrb[0].mxu0
        %2486 = vmatprep.mubr.bf16.mxu0 %v2174
        %2487 = vmatmul.mubr.bf16.gmra.mrb[0].mxu0 %v2171
        %v2488 = vpop.f32.mrb[0].mxu0
        %v2489 = vadd.f32 0.0, %v2488
        %v2490 = vpop.f32.mrb[0].mxu0
        %v2491 = vpop.f32.mrb[0].mxu0
        %v2492 = vadd.f32 0.0, %v2491
        %v2493 = vpop.f32.mrb[0].mxu0
        %2494 = vmatprep.mubr.bf16.mxu0 %v2183
        %2495 = vmatmul.mubr.bf16.gmra.mrb[0].mxu0 %v2180
        %v2496 = vpop.f32.mrb[0].mxu0
        %v2497 = vadd.f32 0.0, %v2496
        %v2498 = vpop.f32.mrb[0].mxu0
        %v2499 = vpop.f32.mrb[0].mxu0
        %v2500 = vadd.f32 0.0, %v2499
        %v2501 = vpop.f32.mrb[0].mxu0
        %2502 = vmatprep.mubr.bf16.mxu0 %v2192
        %2503 = vmatmul.mubr.bf16.gmra.mrb[0].mxu0 %v2189
        %v2504 = vpop.f32.mrb[0].mxu0
        %v2505 = vadd.f32 0.0, %v2504
        %v2506 = vpop.f32.mrb[0].mxu0
        %v2507 = vpop.f32.mrb[0].mxu0
        %v2508 = vadd.f32 0.0, %v2507
        %v2509 = vpop.f32.mrb[0].mxu0
        %2510 = vmatprep.mubr.bf16.mxu0 %v2201
        %2511 = vmatmul.mubr.bf16.gmra.mrb[0].mxu0 %v2198
        %v2512 = vpop.f32.mrb[0].mxu0
        %v2513 = vadd.f32 0.0, %v2512
        %v2514 = vpop.f32.mrb[0].mxu0
        %v2515 = vpop.f32.mrb[0].mxu0
        %v2516 = vadd.f32 0.0, %v2515
        %v2517 = vpop.f32.mrb[0].mxu0
        %2518 = vdwg.mxu0
        %2519 = vmatprep.subr.bf16.mxu0 0
        %2520 = vmatpush1.bf16.msra.mxu0 %v2390
        %2521 = vmatprep.subr.bf16.mxu0 0
        %2522 = vmatpush1.bf16.msra.mxu0 %v2391
        %2523 = vmatprep.subr.bf16.mxu0 0
        %2524 = vmatpush1.bf16.msra.mxu0 %v2392
        %2525 = vmatprep.subr.bf16.mxu0 0
        %2526 = vmatpush1.bf16.msra.mxu0 %v2393
        %2527 = vmatprep.subr.bf16.mxu0 0
        %2528 = vmatpush1.bf16.msra.mxu0 %v2394
        %2529 = vmatprep.subr.bf16.mxu0 0
        %2530 = vmatpush1.bf16.msra.mxu0 %v2395
        %2531 = vmatprep.subr.bf16.mxu0 0
        %2532 = vmatpush1.bf16.msra.mxu0 %v2396
        %2533 = vmatprep.subr.bf16.mxu0 0
        %2534 = vmatpush1.bf16.msra.mxu0 %v2397
        %2535 = vmatprep.subr.bf16.mxu0 0
        %2536 = vmatpush1.bf16.msra.mxu0 0
        %2537 = vmatprep.subr.bf16.mxu0 0
        %2538 = vmatpush1.bf16.msra.mxu0 0
        %2539 = vmatprep.subr.bf16.mxu0 0
        %2540 = vmatpush1.bf16.msra.mxu0 0
        %2541 = vmatprep.subr.bf16.mxu0 0
        %2542 = vmatpush1.bf16.msra.mxu0 0
        %2543 = vmatprep.subr.bf16.mxu0 0
        %2544 = vmatpush1.bf16.msra.mxu0 0
        %2545 = vmatprep.subr.bf16.mxu0 0
        %2546 = vmatpush1.bf16.msra.mxu0 0
        %2547 = vmatprep.subr.bf16.mxu0 0
        %2548 = vmatpush1.bf16.msra.mxu0 0
        %2549 = vmatprep.subr.bf16.mxu0 0
        %2550 = vmatpush1.bf16.msra.mxu0 0
        %2551 = vmatprep.mubr.bf16.mxu0 0
        %2552 = vmatmul.mubr.bf16.gmra.mrb[0].mxu0 %v2141
        %v2553 = vpop.f32.mrb[0].mxu0
        %v2554 = vadd.f32 %v2457, %v2553
        %v2555 = vpop.f32.mrb[0].mxu0
        %v2556 = vpop.f32.mrb[0].mxu0
        %v2557 = vadd.f32 %v2460, %v2556
        %v2558 = vpop.f32.mrb[0].mxu0
        %2559 = vmatprep.mubr.bf16.mxu0 0
        %2560 = vmatmul.mubr.bf16.gmra.mrb[0].mxu0 %v2150
        %v2561 = vpop.f32.mrb[0].mxu0
        %v2562 = vadd.f32 %v2465, %v2561
        %v2563 = vpop.f32.mrb[0].mxu0
        %v2564 = vpop.f32.mrb[0].mxu0
        %v2565 = vadd.f32 %v2468, %v2564
        %v2566 = vpop.f32.mrb[0].mxu0
        %2567 = vmatprep.mubr.bf16.mxu0 0
        %2568 = vmatmul.mubr.bf16.gmra.mrb[0].mxu0 %v2159
        %v2569 = vpop.f32.mrb[0].mxu0
        %v2570 = vadd.f32 %v2473, %v2569
        %v2571 = vpop.f32.mrb[0].mxu0
        %v2572 = vpop.f32.mrb[0].mxu0
        %v2573 = vadd.f32 %v2476, %v2572
        %v2574 = vpop.f32.mrb[0].mxu0
        %2575 = vmatprep.mubr.bf16.mxu0 0
        %2576 = vmatmul.mubr.bf16.gmra.mrb[0].mxu0 %v2168
        %v2577 = vpop.f32.mrb[0].mxu0
        %v2578 = vadd.f32 %v2481, %v2577
        %v2579 = vpop.f32.mrb[0].mxu0
        %v2580 = vpop.f32.mrb[0].mxu0
        %v2581 = vadd.f32 %v2484, %v2580
        %v2582 = vpop.f32.mrb[0].mxu0
        %2583 = vmatprep.mubr.bf16.mxu0 0
        %2584 = vmatmul.mubr.bf16.gmra.mrb[0].mxu0 %v2177
        %v2585 = vpop.f32.mrb[0].mxu0
        %v2586 = vadd.f32 %v2489, %v2585
        %v2587 = vpop.f32.mrb[0].mxu0
        %v2588 = vpop.f32.mrb[0].mxu0
        %v2589 = vadd.f32 %v2492, %v2588
        %v2590 = vpop.f32.mrb[0].mxu0
        %2591 = vmatprep.mubr.bf16.mxu0 0
        %2592 = vmatmul.mubr.bf16.gmra.mrb[0].mxu0 %v2186
        %v2593 = vpop.f32.mrb[0].mxu0
        %v2594 = vadd.f32 %v2497, %v2593
        %v2595 = vpop.f32.mrb[0].mxu0
        %v2596 = vpop.f32.mrb[0].mxu0
        %v2597 = vadd.f32 %v2500, %v2596
        %v2598 = vpop.f32.mrb[0].mxu0
        %2599 = vmatprep.mubr.bf16.mxu0 0
        %2600 = vmatmul.mubr.bf16.gmra.mrb[0].mxu0 %v2195
        %v2601 = vpop.f32.mrb[0].mxu0
        %v2602 = vadd.f32 %v2505, %v2601
        %v2603 = vpop.f32.mrb[0].mxu0
        %v2604 = vpop.f32.mrb[0].mxu0
        %v2605 = vadd.f32 %v2508, %v2604
        %v2606 = vpop.f32.mrb[0].mxu0
        %2607 = vmatprep.mubr.bf16.mxu0 0
        %2608 = vmatmul.mubr.bf16.gmra.mrb[0].mxu0 %v2204
        %v2609 = vpop.f32.mrb[0].mxu0
        %v2610 = vadd.f32 %v2513, %v2609
        %v2611 = vpop.f32.mrb[0].mxu0
        %v2612 = vpop.f32.mrb[0].mxu0
        %v2613 = vadd.f32 %v2516, %v2612
        %v2614 = vpop.f32.mrb[0].mxu0
        %2615 = vdwg.mxu0
        %v2616 = vadd.f32 %v1926, %v2554
        %v2617 = vadd.f32 %v1929, %v2557
        %v2618 = vadd.f32 %v1934, %v2562
        %v2619 = vadd.f32 %v1937, %v2565
        %v2620 = vadd.f32 %v1942, %v2570
        %v2621 = vadd.f32 %v1945, %v2573
        %v2622 = vadd.f32 %v1950, %v2578
        %v2623 = vadd.f32 %v1953, %v2581
        %v2624 = vadd.f32 %v1958, %v2586
        %v2625 = vadd.f32 %v1961, %v2589
        %v2626 = vadd.f32 %v1966, %v2594
        %v2627 = vadd.f32 %v1969, %v2597
        %v2628 = vadd.f32 %v1974, %v2602
        %v2629 = vadd.f32 %v1977, %v2605
        %v2630 = vadd.f32 %v1982, %v2610
        %v2631 = vadd.f32 %v1985, %v2613
        %v2632 = vld [vmem:[%s4] sm:$0x1]
        %v2634 = vlaneseq
        %v2635 = vshrl.u32 %v2634, 7
        %v2636 = vsub.s32 0, %v2635
        %v2637 = vrot.slane %v2632, %v2636
        %v2639 = vadd.f32 %v2616, %v2637
        %v2640 = vadd.f32 %v2617, %v2637
        %v2641 = vadd.f32 %v2618, %v2637
        %v2642 = vadd.f32 %v2619, %v2637
        %v2643 = vadd.f32 %v2620, %v2637
        %v2644 = vadd.f32 %v2621, %v2637
        %v2645 = vadd.f32 %v2622, %v2637
        %v2646 = vadd.f32 %v2623, %v2637
        %v2647 = vadd.f32 %v2624, %v2637
        %v2648 = vadd.f32 %v2625, %v2637
        %v2649 = vadd.f32 %v2626, %v2637
        %v2650 = vadd.f32 %v2627, %v2637
        %v2651 = vadd.f32 %v2628, %v2637
        %v2652 = vadd.f32 %v2629, %v2637
        %v2653 = vadd.f32 %v2630, %v2637
        %v2654 = vadd.f32 %v2631, %v2637
        %v2655 = vmax.f32 %v2639, 0.0
        %v2656 = vmax.f32 %v2640, 0.0
        %v2657 = vmax.f32 %v2641, 0.0
        %v2658 = vmax.f32 %v2642, 0.0
        %v2659 = vmax.f32 %v2643, 0.0
        %v2660 = vmax.f32 %v2644, 0.0
        %v2661 = vmax.f32 %v2645, 0.0
        %v2662 = vmax.f32 %v2646, 0.0
        %v2663 = vmax.f32 %v2647, 0.0
        %v2664 = vmax.f32 %v2648, 0.0
        %v2665 = vmax.f32 %v2649, 0.0
        %v2666 = vmax.f32 %v2650, 0.0
        %v2667 = vmax.f32 %v2651, 0.0
        %v2668 = vmax.f32 %v2652, 0.0
        %v2669 = vmax.f32 %v2653, 0.0
        %v2670 = vmax.f32 %v2654, 0.0
        %v2671 = vpack.c.bf16 %v2656, %v2655
        %v2672 = vpack.c.bf16 %v2658, %v2657
        %v2673 = vpack.c.bf16 %v2660, %v2659
        %v2674 = vpack.c.bf16 %v2662, %v2661
        %v2675 = vpack.c.bf16 %v2664, %v2663
        %v2676 = vpack.c.bf16 %v2666, %v2665
        %v2677 = vpack.c.bf16 %v2668, %v2667
        %v2678 = vpack.c.bf16 %v2670, %v2669
        %v2679 = vld [vmem:[#allocation10] sm:$0xf]
        %v2680 = vld [vmem:[#allocation10 + $0x4] sm:$0xf]
        %v2681 = vld [vmem:[#allocation10 + $0x8] sm:$0xf]
        %v2682 = vld [vmem:[#allocation10 + $0xc] sm:$0xf]
        %v2683 = vld [vmem:[#allocation10 + $0x10] sm:$0xf]
        %v2684 = vld [vmem:[#allocation10 + $0x14] sm:$0xf]
        %v2685 = vld [vmem:[#allocation10 + $0x18] sm:$0xf]
        %v2686 = vld [vmem:[#allocation10 + $0x1c] sm:$0xf]
        %v2687 = vld [vmem:[#allocation10 + $0x20] sm:$0xf]
        %v2688 = vld [vmem:[#allocation10 + $0x24] sm:$0xf]
        %v2689 = vld [vmem:[#allocation10 + $0x28] sm:$0xf]
        %v2690 = vld [vmem:[#allocation10 + $0x2c] sm:$0xf]
        %v2691 = vld [vmem:[#allocation10 + $0x30] sm:$0xf]
        %v2692 = vld [vmem:[#allocation10 + $0x34] sm:$0xf]
        %v2693 = vld [vmem:[#allocation10 + $0x38] sm:$0xf]
        %v2694 = vld [vmem:[#allocation10 + $0x3c] sm:$0xf]
        %v2695 = vld [vmem:[%s6] sm:$0x1]
        %v2697 = vlaneseq
        %v2698 = vshrl.u32 %v2697, 7
        %v2699 = vsub.s32 0, %v2698
        %v2700 = vrot.slane %v2695, %v2699
        %v2718 = vunpack.c.l.b16 %v2679
        %v2719 = vunpack.c.l.b16 %v2680
        %v2720 = vunpack.c.l.b16 %v2681
        %v2721 = vunpack.c.l.b16 %v2682
        %v2722 = vunpack.c.l.b16 %v2683
        %v2723 = vunpack.c.l.b16 %v2684
        %v2724 = vunpack.c.l.b16 %v2685
        %v2725 = vunpack.c.l.b16 %v2686
        %v2726 = vunpack.c.l.b16 %v2687
        %v2727 = vunpack.c.l.b16 %v2688
        %v2728 = vunpack.c.l.b16 %v2689
        %v2729 = vunpack.c.l.b16 %v2690
        %v2730 = vunpack.c.l.b16 %v2691
        %v2731 = vunpack.c.l.b16 %v2692
        %v2732 = vunpack.c.l.b16 %v2693
        %v2733 = vunpack.c.l.b16 %v2694
        %v2734 = vpack.c.b16 %v2719, %v2718
        %v2735 = vpack.c.b16 %v2721, %v2720
        %v2736 = vpack.c.b16 %v2723, %v2722
        %v2737 = vpack.c.b16 %v2725, %v2724
        %v2738 = vpack.c.b16 %v2727, %v2726
        %v2739 = vpack.c.b16 %v2729, %v2728
        %v2740 = vpack.c.b16 %v2731, %v2730
        %v2741 = vpack.c.b16 %v2733, %v2732
        %2750 = vmatprep.subr.bf16.mxu0 0
        %2751 = vmatpush1.bf16.msra.mxu0 %v2734
        %2752 = vmatprep.subr.bf16.mxu0 0
        %2753 = vmatpush1.bf16.msra.mxu0 %v2735
        %2754 = vmatprep.subr.bf16.mxu0 0
        %2755 = vmatpush1.bf16.msra.mxu0 %v2736
        %2756 = vmatprep.subr.bf16.mxu0 0
        %2757 = vmatpush1.bf16.msra.mxu0 %v2737
        %2758 = vmatprep.subr.bf16.mxu0 0
        %2759 = vmatpush1.bf16.msra.mxu0 %v2738
        %2760 = vmatprep.subr.bf16.mxu0 0
        %2761 = vmatpush1.bf16.msra.mxu0 %v2739
        %2762 = vmatprep.subr.bf16.mxu0 0
        %2763 = vmatpush1.bf16.msra.mxu0 %v2740
        %2764 = vmatprep.subr.bf16.mxu0 0
        %2765 = vmatpush1.bf16.msra.mxu0 %v2741
        %2766 = vmatprep.subr.bf16.mxu0 0
        %2767 = vmatpush1.bf16.msra.mxu0 0
        %2768 = vmatprep.subr.bf16.mxu0 0
        %2769 = vmatpush1.bf16.msra.mxu0 0
        %2770 = vmatprep.subr.bf16.mxu0 0
        %2771 = vmatpush1.bf16.msra.mxu0 0
        %2772 = vmatprep.subr.bf16.mxu0 0
        %2773 = vmatpush1.bf16.msra.mxu0 0
        %2774 = vmatprep.subr.bf16.mxu0 0
        %2775 = vmatpush1.bf16.msra.mxu0 0
        %2776 = vmatprep.subr.bf16.mxu0 0
        %2777 = vmatpush1.bf16.msra.mxu0 0
        %2778 = vmatprep.subr.bf16.mxu0 0
        %2779 = vmatpush1.bf16.msra.mxu0 0
        %2780 = vmatprep.subr.bf16.mxu0 0
        %2781 = vmatpush1.bf16.msra.mxu0 0
        %2782 = vmatprep.mubr.bf16.mxu0 0
        %2783 = vmatmul.mubr.bf16.gmra.mrb[0].mxu0 %v2671
        %v2784 = vpop.f32.mrb[0].mxu0
        %v2785 = vadd.f32 %v2700, %v2784
        %v2786 = vpop.f32.mrb[0].mxu0
        %v2787 = vpop.f32.mrb[0].mxu0
        %v2788 = vadd.f32 %v2700, %v2787
        %v2789 = vpop.f32.mrb[0].mxu0
        %2790 = vmatprep.mubr.bf16.mxu0 0
        %2791 = vmatmul.mubr.bf16.gmra.mrb[0].mxu0 %v2672
        %v2792 = vpop.f32.mrb[0].mxu0
        %v2793 = vadd.f32 %v2700, %v2792
        %v2794 = vpop.f32.mrb[0].mxu0
        %v2795 = vpop.f32.mrb[0].mxu0
        %v2796 = vadd.f32 %v2700, %v2795
        %v2797 = vpop.f32.mrb[0].mxu0
        %2798 = vmatprep.mubr.bf16.mxu0 0
        %2799 = vmatmul.mubr.bf16.gmra.mrb[0].mxu0 %v2673
        %v2800 = vpop.f32.mrb[0].mxu0
        %v2801 = vadd.f32 %v2700, %v2800
        %v2802 = vpop.f32.mrb[0].mxu0
        %v2803 = vpop.f32.mrb[0].mxu0
        %v2804 = vadd.f32 %v2700, %v2803
        %v2805 = vpop.f32.mrb[0].mxu0
        %2806 = vmatprep.mubr.bf16.mxu0 0
        %2807 = vmatmul.mubr.bf16.gmra.mrb[0].mxu0 %v2674
        %v2808 = vpop.f32.mrb[0].mxu0
        %v2809 = vadd.f32 %v2700, %v2808
        %v2810 = vpop.f32.mrb[0].mxu0
        %v2811 = vpop.f32.mrb[0].mxu0
        %v2812 = vadd.f32 %v2700, %v2811
        %v2813 = vpop.f32.mrb[0].mxu0
        %2814 = vmatprep.mubr.bf16.mxu0 0
        %2815 = vmatmul.mubr.bf16.gmra.mrb[0].mxu0 %v2675
        %v2816 = vpop.f32.mrb[0].mxu0
        %v2817 = vadd.f32 %v2700, %v2816
        %v2818 = vpop.f32.mrb[0].mxu0
        %v2819 = vpop.f32.mrb[0].mxu0
        %v2820 = vadd.f32 %v2700, %v2819
        %v2821 = vpop.f32.mrb[0].mxu0
        %2822 = vmatprep.mubr.bf16.mxu0 0
        %2823 = vmatmul.mubr.bf16.gmra.mrb[0].mxu0 %v2676
        %v2824 = vpop.f32.mrb[0].mxu0
        %v2825 = vadd.f32 %v2700, %v2824
        %v2826 = vpop.f32.mrb[0].mxu0
        %v2827 = vpop.f32.mrb[0].mxu0
        %v2828 = vadd.f32 %v2700, %v2827
        %v2829 = vpop.f32.mrb[0].mxu0
        %2830 = vmatprep.mubr.bf16.mxu0 0
        %2831 = vmatmul.mubr.bf16.gmra.mrb[0].mxu0 %v2677
        %v2832 = vpop.f32.mrb[0].mxu0
        %v2833 = vadd.f32 %v2700, %v2832
        %v2834 = vpop.f32.mrb[0].mxu0
        %v2835 = vpop.f32.mrb[0].mxu0
        %v2836 = vadd.f32 %v2700, %v2835
        %v2837 = vpop.f32.mrb[0].mxu0
        %2838 = vmatprep.mubr.bf16.mxu0 0
        %2839 = vmatmul.mubr.bf16.gmra.mrb[0].mxu0 %v2678
        %v2840 = vpop.f32.mrb[0].mxu0
        %v2841 = vadd.f32 %v2700, %v2840
        %v2842 = vpop.f32.mrb[0].mxu0
        %v2843 = vpop.f32.mrb[0].mxu0
        %v2844 = vadd.f32 %v2700, %v2843
        %v2845 = vpop.f32.mrb[0].mxu0
        %2846 = vdwg.mxu0
        %s2847 = scalar_lea.vmem [#allocation2], 16
        %v2848 = vld [vmem:[%s2847] sm:$0xff]
        %v2849 = vld [vmem:[%s2847 + $0x8] sm:$0xff]
        %v2850 = vld [vmem:[%s2847 + $0x10] sm:$0xff]
        %v2851 = vld [vmem:[%s2847 + $0x18] sm:$0xff]
        %v2852 = vld [vmem:[%s2847 + $0x20] sm:$0xff]
        %v2853 = vld [vmem:[%s2847 + $0x28] sm:$0xff]
        %v2854 = vld [vmem:[%s2847 + $0x30] sm:$0xff]
        %v2855 = vld [vmem:[%s2847 + $0x38] sm:$0xff]
        %v2856 = vld [vmem:[#allocation11] sm:$0xf]
        %v2857 = vld [vmem:[#allocation11 + $0x4] sm:$0xf]
        %v2858 = vld [vmem:[#allocation11 + $0x8] sm:$0xf]
        %v2859 = vld [vmem:[#allocation11 + $0xc] sm:$0xf]
        %v2860 = vld [vmem:[#allocation11 + $0x10] sm:$0xf]
        %v2861 = vld [vmem:[#allocation11 + $0x14] sm:$0xf]
        %v2862 = vld [vmem:[#allocation11 + $0x18] sm:$0xf]
        %v2863 = vld [vmem:[#allocation11 + $0x1c] sm:$0xf]
        %v2864 = vld [vmem:[#allocation11 + $0x20] sm:$0xf]
        %v2865 = vld [vmem:[#allocation11 + $0x24] sm:$0xf]
        %v2866 = vld [vmem:[#allocation11 + $0x28] sm:$0xf]
        %v2867 = vld [vmem:[#allocation11 + $0x2c] sm:$0xf]
        %v2868 = vld [vmem:[#allocation11 + $0x30] sm:$0xf]
        %v2869 = vld [vmem:[#allocation11 + $0x34] sm:$0xf]
        %v2870 = vld [vmem:[#allocation11 + $0x38] sm:$0xf]
        %v2871 = vld [vmem:[#allocation11 + $0x3c] sm:$0xf]
        %v2872 = vld [vmem:[%s8] sm:$0x1]
        %v2874 = vlaneseq
        %v2875 = vshrl.u32 %v2874, 7
        %v2876 = vsub.s32 0, %v2875
        %v2877 = vrot.slane %v2872, %v2876
        %v2895 = vunpack.c.l.b16 %v2856
        %v2896 = vunpack.c.l.b16 %v2857
        %v2897 = vunpack.c.l.b16 %v2858
        %v2898 = vunpack.c.l.b16 %v2859
        %v2899 = vunpack.c.l.b16 %v2860
        %v2900 = vunpack.c.l.b16 %v2861
        %v2901 = vunpack.c.l.b16 %v2862
        %v2902 = vunpack.c.l.b16 %v2863
        %v2903 = vunpack.c.l.b16 %v2864
        %v2904 = vunpack.c.l.b16 %v2865
        %v2905 = vunpack.c.l.b16 %v2866
        %v2906 = vunpack.c.l.b16 %v2867
        %v2907 = vunpack.c.l.b16 %v2868
        %v2908 = vunpack.c.l.b16 %v2869
        %v2909 = vunpack.c.l.b16 %v2870
        %v2910 = vunpack.c.l.b16 %v2871
        %v2911 = vpack.c.b16 %v2896, %v2895
        %v2912 = vpack.c.b16 %v2898, %v2897
        %v2913 = vpack.c.b16 %v2900, %v2899
        %v2914 = vpack.c.b16 %v2902, %v2901
        %v2915 = vpack.c.b16 %v2904, %v2903
        %v2916 = vpack.c.b16 %v2906, %v2905
        %v2917 = vpack.c.b16 %v2908, %v2907
        %v2918 = vpack.c.b16 %v2910, %v2909
        %2927 = vmatprep.subr.bf16.mxu0 0
        %2928 = vmatpush1.bf16.msra.mxu0 %v2911
        %2929 = vmatprep.subr.bf16.mxu0 0
        %2930 = vmatpush1.bf16.msra.mxu0 %v2912
        %2931 = vmatprep.subr.bf16.mxu0 0
        %2932 = vmatpush1.bf16.msra.mxu0 %v2913
        %2933 = vmatprep.subr.bf16.mxu0 0
        %2934 = vmatpush1.bf16.msra.mxu0 %v2914
        %2935 = vmatprep.subr.bf16.mxu0 0
        %2936 = vmatpush1.bf16.msra.mxu0 %v2915
        %2937 = vmatprep.subr.bf16.mxu0 0
        %2938 = vmatpush1.bf16.msra.mxu0 %v2916
        %2939 = vmatprep.subr.bf16.mxu0 0
        %2940 = vmatpush1.bf16.msra.mxu0 %v2917
        %2941 = vmatprep.subr.bf16.mxu0 0
        %2942 = vmatpush1.bf16.msra.mxu0 %v2918
        %2943 = vmatprep.subr.bf16.mxu0 0
        %2944 = vmatpush1.bf16.msra.mxu0 0
        %2945 = vmatprep.subr.bf16.mxu0 0
        %2946 = vmatpush1.bf16.msra.mxu0 0
        %2947 = vmatprep.subr.bf16.mxu0 0
        %2948 = vmatpush1.bf16.msra.mxu0 0
        %2949 = vmatprep.subr.bf16.mxu0 0
        %2950 = vmatpush1.bf16.msra.mxu0 0
        %2951 = vmatprep.subr.bf16.mxu0 0
        %2952 = vmatpush1.bf16.msra.mxu0 0
        %2953 = vmatprep.subr.bf16.mxu0 0
        %2954 = vmatpush1.bf16.msra.mxu0 0
        %2955 = vmatprep.subr.bf16.mxu0 0
        %2956 = vmatpush1.bf16.msra.mxu0 0
        %2957 = vmatprep.subr.bf16.mxu0 0
        %2958 = vmatpush1.bf16.msra.mxu0 0
        %2959 = vmatprep.mubr.bf16.mxu0 0
        %2960 = vmatmul.mubr.bf16.gmra.mrb[0].mxu0 %v2848
        %v2961 = vpop.f32.mrb[0].mxu0
        %v2962 = vadd.f32 %v2877, %v2961
        %v2963 = vpop.f32.mrb[0].mxu0
        %v2964 = vpop.f32.mrb[0].mxu0
        %v2965 = vadd.f32 %v2877, %v2964
        %v2966 = vpop.f32.mrb[0].mxu0
        %2967 = vmatprep.mubr.bf16.mxu0 0
        %2968 = vmatmul.mubr.bf16.gmra.mrb[0].mxu0 %v2849
        %v2969 = vpop.f32.mrb[0].mxu0
        %v2970 = vadd.f32 %v2877, %v2969
        %v2971 = vpop.f32.mrb[0].mxu0
        %v2972 = vpop.f32.mrb[0].mxu0
        %v2973 = vadd.f32 %v2877, %v2972
        %v2974 = vpop.f32.mrb[0].mxu0
        %2975 = vmatprep.mubr.bf16.mxu0 0
        %2976 = vmatmul.mubr.bf16.gmra.mrb[0].mxu0 %v2850
        %v2977 = vpop.f32.mrb[0].mxu0
        %v2978 = vadd.f32 %v2877, %v2977
        %v2979 = vpop.f32.mrb[0].mxu0
        %v2980 = vpop.f32.mrb[0].mxu0
        %v2981 = vadd.f32 %v2877, %v2980
        %v2982 = vpop.f32.mrb[0].mxu0
        %2983 = vmatprep.mubr.bf16.mxu0 0
        %2984 = vmatmul.mubr.bf16.gmra.mrb[0].mxu0 %v2851
        %v2985 = vpop.f32.mrb[0].mxu0
        %v2986 = vadd.f32 %v2877, %v2985
        %v2987 = vpop.f32.mrb[0].mxu0
        %v2988 = vpop.f32.mrb[0].mxu0
        %v2989 = vadd.f32 %v2877, %v2988
        %v2990 = vpop.f32.mrb[0].mxu0
        %2991 = vmatprep.mubr.bf16.mxu0 0
        %2992 = vmatmul.mubr.bf16.gmra.mrb[0].mxu0 %v2852
        %v2993 = vpop.f32.mrb[0].mxu0
        %v2994 = vadd.f32 %v2877, %v2993
        %v2995 = vpop.f32.mrb[0].mxu0
        %v2996 = vpop.f32.mrb[0].mxu0
        %v2997 = vadd.f32 %v2877, %v2996
        %v2998 = vpop.f32.mrb[0].mxu0
        %2999 = vmatprep.mubr.bf16.mxu0 0
        %3000 = vmatmul.mubr.bf16.gmra.mrb[0].mxu0 %v2853
        %v3001 = vpop.f32.mrb[0].mxu0
        %v3002 = vadd.f32 %v2877, %v3001
        %v3003 = vpop.f32.mrb[0].mxu0
        %v3004 = vpop.f32.mrb[0].mxu0
        %v3005 = vadd.f32 %v2877, %v3004
        %v3006 = vpop.f32.mrb[0].mxu0
        %3007 = vmatprep.mubr.bf16.mxu0 0
        %3008 = vmatmul.mubr.bf16.gmra.mrb[0].mxu0 %v2854
        %v3009 = vpop.f32.mrb[0].mxu0
        %v3010 = vadd.f32 %v2877, %v3009
        %v3011 = vpop.f32.mrb[0].mxu0
        %v3012 = vpop.f32.mrb[0].mxu0
        %v3013 = vadd.f32 %v2877, %v3012
        %v3014 = vpop.f32.mrb[0].mxu0
        %3015 = vmatprep.mubr.bf16.mxu0 0
        %3016 = vmatmul.mubr.bf16.gmra.mrb[0].mxu0 %v2855
        %v3017 = vpop.f32.mrb[0].mxu0
        %v3018 = vadd.f32 %v2877, %v3017
        %v3019 = vpop.f32.mrb[0].mxu0
        %v3020 = vpop.f32.mrb[0].mxu0
        %v3021 = vadd.f32 %v2877, %v3020
        %v3022 = vpop.f32.mrb[0].mxu0
        %3023 = vdwg.mxu0
        %v3024 = vadd.f32 %v2785, %v2962
        %v3025 = vadd.f32 %v2788, %v2965
        %v3026 = vadd.f32 %v2793, %v2970
        %v3027 = vadd.f32 %v2796, %v2973
        %v3028 = vadd.f32 %v2801, %v2978
        %v3029 = vadd.f32 %v2804, %v2981
        %v3030 = vadd.f32 %v2809, %v2986
        %v3031 = vadd.f32 %v2812, %v2989
        %v3032 = vadd.f32 %v2817, %v2994
        %v3033 = vadd.f32 %v2820, %v2997
        %v3034 = vadd.f32 %v2825, %v3002
        %v3035 = vadd.f32 %v2828, %v3005
        %v3036 = vadd.f32 %v2833, %v3010
        %v3037 = vadd.f32 %v2836, %v3013
        %v3038 = vadd.f32 %v2841, %v3018
        %v3039 = vadd.f32 %v2844, %v3021
        %v3040 = vmax.f32 %v3024, 0.0
        %v3041 = vmax.f32 %v3025, 0.0
        %v3042 = vmax.f32 %v3026, 0.0
        %v3043 = vmax.f32 %v3027, 0.0
        %v3044 = vmax.f32 %v3028, 0.0
        %v3045 = vmax.f32 %v3029, 0.0
        %v3046 = vmax.f32 %v3030, 0.0
        %v3047 = vmax.f32 %v3031, 0.0
        %v3048 = vmax.f32 %v3032, 0.0
        %v3049 = vmax.f32 %v3033, 0.0
        %v3050 = vmax.f32 %v3034, 0.0
        %v3051 = vmax.f32 %v3035, 0.0
        %v3052 = vmax.f32 %v3036, 0.0
        %v3053 = vmax.f32 %v3037, 0.0
        %v3054 = vmax.f32 %v3038, 0.0
        %v3055 = vmax.f32 %v3039, 0.0
        %v3056 = vpack.c.bf16 %v3041, %v3040
        %v3057 = vpack.c.bf16 %v3043, %v3042
        %v3058 = vpack.c.bf16 %v3045, %v3044
        %v3059 = vpack.c.bf16 %v3047, %v3046
        %v3060 = vpack.c.bf16 %v3049, %v3048
        %v3061 = vpack.c.bf16 %v3051, %v3050
        %v3062 = vpack.c.bf16 %v3053, %v3052
        %v3063 = vpack.c.bf16 %v3055, %v3054
        %v3072 = vunpack.c.l.b16 %v3056
        %v3073 = vunpack.c.h.b16 %v3056
        %v3074 = vunpack.c.l.b16 %v3057
        %v3075 = vunpack.c.h.b16 %v3057
        %v3076 = vunpack.c.l.b16 %v3058
        %v3077 = vunpack.c.h.b16 %v3058
        %v3078 = vunpack.c.l.b16 %v3059
        %v3079 = vunpack.c.h.b16 %v3059
        %v3080 = vunpack.c.l.b16 %v3060
        %v3081 = vunpack.c.h.b16 %v3060
        %v3082 = vunpack.c.l.b16 %v3061
        %v3083 = vunpack.c.h.b16 %v3061
        %v3084 = vunpack.c.l.b16 %v3062
        %v3085 = vunpack.c.h.b16 %v3062
        %v3086 = vunpack.c.l.b16 %v3063
        %v3087 = vunpack.c.h.b16 %v3063
        %v3088 = vpack.c.b16 %v3072, %v3072
        %v3089 = vpack.c.b16 %v3073, %v3073
        %v3090 = vpack.c.b16 %v3074, %v3074
        %v3091 = vpack.c.b16 %v3075, %v3075
        %v3092 = vpack.c.b16 %v3076, %v3076
        %v3093 = vpack.c.b16 %v3077, %v3077
        %v3094 = vpack.c.b16 %v3078, %v3078
        %v3095 = vpack.c.b16 %v3079, %v3079
        %v3096 = vpack.c.b16 %v3080, %v3080
        %v3097 = vpack.c.b16 %v3081, %v3081
        %v3098 = vpack.c.b16 %v3082, %v3082
        %v3099 = vpack.c.b16 %v3083, %v3083
        %v3100 = vpack.c.b16 %v3084, %v3084
        %v3101 = vpack.c.b16 %v3085, %v3085
        %v3102 = vpack.c.b16 %v3086, %v3086
        %v3103 = vpack.c.b16 %v3087, %v3087
        %3120 = vst [vmem:[%s357] sm:$0xf] %v3088
        %3121 = vst [vmem:[%s357 + $0x4] sm:$0xf] %v3089
        %3122 = vst [vmem:[%s357 + $0x8] sm:$0xf] %v3090
        %3123 = vst [vmem:[%s357 + $0xc] sm:$0xf] %v3091
        %3124 = vst [vmem:[%s357 + $0x10] sm:$0xf] %v3092
        %3125 = vst [vmem:[%s357 + $0x14] sm:$0xf] %v3093
        %3126 = vst [vmem:[%s357 + $0x18] sm:$0xf] %v3094
        %3127 = vst [vmem:[%s357 + $0x1c] sm:$0xf] %v3095
        %3128 = vst [vmem:[%s357 + $0x20] sm:$0xf] %v3096
        %3129 = vst [vmem:[%s357 + $0x24] sm:$0xf] %v3097
        %3130 = vst [vmem:[%s357 + $0x28] sm:$0xf] %v3098
        %3131 = vst [vmem:[%s357 + $0x2c] sm:$0xf] %v3099
        %3132 = vst [vmem:[%s357 + $0x30] sm:$0xf] %v3100
        %3133 = vst [vmem:[%s357 + $0x34] sm:$0xf] %v3101
        %3134 = vst [vmem:[%s357 + $0x38] sm:$0xf] %v3102
        %3135 = vst [vmem:[%s357 + $0x3c] sm:$0xf] %v3103
        %s3136 = sand.u32 %s216, 1
        %s3137 = scalar_lea.sflag [#allocation7], %s3136
        %s3138 = sand.u32 %s216, 1
        %s3139 = smul.addr %s3138, 64
        %s3140 = scalar_lea.vmem [#allocation13], %s3139
        // Predicated region
        $region81: #{tpu_custom_call.1} parent=51 // pred_check
          %p3141 = pneg %p226
        $region82: #{tpu_custom_call.1} parent=51 // pred_check_branch
          %3143 = sbr.rel (%p3141) target = $region84
        $region83: #{tpu_custom_call.1} parent=51 // pred_region
          %s3144 = smul.u32 8, %s31
          %s3146 = ssub.s32 1024, 1024
          %3147 = vsyncadd %s3137, %s3146
          %s3148 = smul.addr %s3144, 2
          %s3149 = smul.addr %s30, 32
          %s3150 = sadd.s32 %s3148, %s3149
          %s3151 = smul.addr %s3150, 64
          %s3152 = scalar_lea.hbm %s9, %s3151
          %s3153 = sshll.u32 %s3140, 4
          %s3154 = int_to_ptr.vmem [resolvable:$true] %s3153
          %3159 = dma.vmem_to_hbm [thread:$0]  %s3154, 1024, %s3152, %s3137, 64, 64, 4
        $region84: #{tpu_custom_call.1} parent=51 // pred_fallthru
          _
      $region52: #{tpu_custom_call.1} parent=5 // pred_fallthru
        _
      %p3160 = scmp.le.s32.totalorder 2, %s21
      // Predicated region
      $region85: #{tpu_custom_call.1} parent=5 // pred_check
        %p3161 = pneg %p3160
      $region86: #{tpu_custom_call.1} parent=5 // pred_check_branch
        %3163 = sbr.rel (%p3161) target = $region88
      $region87: #{tpu_custom_call.1} parent=5 // pred_region
        %s3164 = ssub.s32 %s21, 2
        // Predicated region
        $region89: #{tpu_custom_call.1} parent=87 // pred_check
          %p3165 = pneg %p232
        $region90: #{tpu_custom_call.1} parent=87 // pred_check_branch
          %3167 = sbr.rel (%p3165) target = $region92
        $region91: #{tpu_custom_call.1} parent=87 // pred_region
          %s3168 = sand.u32 %s217, 1
          %s3169 = scalar_lea.sflag [#allocation7], %s3168
          %s3170 = sand.u32 %s217, 1
          %s3171 = smul.addr %s3170, 64
          %s3172 = scalar_lea.vmem [#allocation13], %s3171
          %3173 = dma.done %s3169, 1024
        $region92: #{tpu_custom_call.1} parent=87 // pred_fallthru
          _
      $region88: #{tpu_custom_call.1} parent=5 // pred_fallthru
        _
    $region6: #{tpu_custom_call.1} parent=1 // loop_footer
      %s25 = sadd.s32 1, %s21
    $region7: #{tpu_custom_call.1} parent=1 // loop_footer_branch
      %20 = sbr.rel target = $region3
    $region8: #{tpu_custom_call.1} parent=1 // loop_exit
      _
    %3174 = vsyncpa [#allocation6], 1
    %s3175 = scalar_lea.sflag [#allocation6], 1
    %3176 = vsyncpa %s3175, 1
    %3177 = vsyncpa [#allocation9], 1
    %3178 = vsyncpa [#allocation12], 1
    %3179 = vsyncpa [#allocation7], 1
    %s3180 = scalar_lea.sflag [#allocation7], 1
    %3181 = vsyncpa %s3180, 1
  %3182 = vsyncmov [#allocation4]
  %s3183 = vpop.sfrf %3182
  %p3184 = scmp.eq.s32.totalorder %s3183, 0
  %p3185 = pneg %p3184
  %3187 = shalt.err (%p3185)

</llo_original>
